<compile_context>
chip_gen: v7x
topology: tpu7x:2x2x1
jax: 0.10.0
libtpu: 0.0.40
codegen_flags: <defaults>
</compile_context>

<pallas_src>
import functools
import math

import jax
import jax.numpy as jnp
from jax.experimental import pallas as pl
from jax.experimental.pallas import tpu as pltpu


# ----------------------------------------------------------------------------
# in-kernel math helpers (all f32)
# ----------------------------------------------------------------------------

def _gelu(y):
    c = math.sqrt(2.0 / math.pi)
    return 0.5 * y * (1.0 + jnp.tanh(c * (y + 0.044715 * y * y * y)))


def _ln_rows(x, g, b, eps):
    mean = jnp.mean(x, axis=-1, keepdims=True)
    var = jnp.mean((x - mean) ** 2, axis=-1, keepdims=True)
    return (x - mean) * jax.lax.rsqrt(var + eps) * g + b


def _softmax_rows(s):
    s = s - jnp.max(s, axis=-1, keepdims=True)
    p = jnp.exp(s)
    return p * pl.reciprocal(jnp.sum(p, axis=-1, keepdims=True), approx=True)


# ----------------------------------------------------------------------------
# Standalone row LayerNorm (embedding LN, decoder final LN): grid=(B,)
# ----------------------------------------------------------------------------

def _ln_kernel(x_ref, g_ref, b_ref, o_ref, *, eps):
    x = x_ref[0].astype(jnp.float32)
    o_ref[0] = _ln_rows(x, g_ref[...], b_ref[...], eps).astype(o_ref.dtype)


def layernorm(x, gamma, beta, eps, out_dtype=jnp.float32):
    B, S, H = x.shape
    return pl.pallas_call(
        functools.partial(_ln_kernel, eps=eps),
        out_shape=jax.ShapeDtypeStruct((B, S, H), out_dtype),
        grid=(B,),
        in_specs=[
            pl.BlockSpec((1, S, H), lambda b: (b, 0, 0)),
            pl.BlockSpec((1, H), lambda b: (0, 0)),
            pl.BlockSpec((1, H), lambda b: (0, 0)),
        ],
        out_specs=pl.BlockSpec((1, S, H), lambda b: (b, 0, 0)),
        compiler_params=pltpu.CompilerParams(dimension_semantics=("parallel",)),
    )(x, gamma.reshape(1, H), beta.reshape(1, H))


# ----------------------------------------------------------------------------
# Fused self-attention block:
#   pre_ln=False (encoder, post-LN):  out = LN( Wo·Attn(QKV(x)) + x )
#   pre_ln=True  (decoder, pre-LN):   out = Wo·Attn(QKV(LN(x))) + x
# Per-batch grid; QKV projection + attention + output projection + residual
# (+ LN) all inside one kernel. 1/sqrt(dh) is pre-folded into wqkv.
# ----------------------------------------------------------------------------

def _attn_block_kernel(x_ref, wqkv_ref, bqkv_ref, wo_ref, bo_ref, g_ref, b_ref,
                       m_ref, o_ref, *, heads, causal, pre_ln, eps):
    x = x_ref[0].astype(jnp.float32)                 # [S, H]
    S, H = x.shape
    dh = H // heads

    xin = _ln_rows(x, g_ref[...], b_ref[...], eps) if pre_ln else x

    qkv = jnp.dot(xin.astype(jnp.bfloat16), wqkv_ref[...],
                  preferred_element_type=jnp.float32) + bqkv_ref[...]   # [S, 3H]

    mask = m_ref[0].astype(jnp.float32)              # [1, Sk] additive pad mask
    Sk = mask.shape[-1]
    if causal:
        ri = jax.lax.broadcasted_iota(jnp.int32, (S, Sk), 0)
        ci = jax.lax.broadcasted_iota(jnp.int32, (S, Sk), 1)
        mask = jnp.where(ci > ri, -1e9, mask)        # single where; broadcasts [1,Sk]

    outs = []
    for h in range(heads):
        q = qkv[:, h * dh:(h + 1) * dh].astype(jnp.bfloat16)          # scale folded in
        k = qkv[:, H + h * dh:H + (h + 1) * dh].astype(jnp.bfloat16)
        v = qkv[:, 2 * H + h * dh:2 * H + (h + 1) * dh].astype(jnp.bfloat16)
        s = jax.lax.dot_general(q, k, (((1,), (1,)), ((), ())),
                                preferred_element_type=jnp.float32) + mask
        p = _softmax_rows(s)
        outs.append(jnp.dot(p.astype(jnp.bfloat16), v,
                            preferred_element_type=jnp.float32))
    ctx = jnp.concatenate(outs, axis=-1)             # [S, H] lane-dense

    proj = jnp.dot(ctx.astype(jnp.bfloat16), wo_ref[...],
                   preferred_element_type=jnp.float32) + bo_ref[...]
    y = proj + x                                     # residual
    if not pre_ln:
        y = _ln_rows(y, g_ref[...], b_ref[...], eps)
    o_ref[0] = y.astype(o_ref.dtype)


def attn_block(x, p, ln_g, ln_b, mask, heads, *, causal, pre_ln, eps):
    B, S, H = x.shape
    Sk = mask.shape[-1]
    return pl.pallas_call(
        functools.partial(_attn_block_kernel, heads=heads, causal=causal,
                          pre_ln=pre_ln, eps=eps),
        out_shape=jax.ShapeDtypeStruct((B, S, H), jnp.bfloat16),
        grid=(B,),
        in_specs=[
            pl.BlockSpec((1, S, H), lambda b: (b, 0, 0)),
            pl.BlockSpec((H, 3 * H), lambda b: (0, 0)),
            pl.BlockSpec((1, 3 * H), lambda b: (0, 0)),
            pl.BlockSpec((H, H), lambda b: (0, 0)),
            pl.BlockSpec((1, H), lambda b: (0, 0)),
            pl.BlockSpec((1, H), lambda b: (0, 0)),
            pl.BlockSpec((1, H), lambda b: (0, 0)),
            pl.BlockSpec((1, 1, Sk), lambda b: (b, 0, 0)),
        ],
        out_specs=pl.BlockSpec((1, S, H), lambda b: (b, 0, 0)),
        compiler_params=pltpu.CompilerParams(dimension_semantics=("parallel",)),
    )(x, p["wqkv"], p["bqkv"].reshape(1, -1), p["wo"], p["bo"].reshape(1, -1),
      ln_g.reshape(1, H), ln_b.reshape(1, H), mask)


# ----------------------------------------------------------------------------
# Fused cross-attention block (decoder, pre-LN):
#   out = Wo·Attn( Q(LN(query)), KV(memory) ) + query
# Q projection, fused KV projection of the memory, attention, output projection
# and the residual add all inside one kernel. 1/sqrt(dh) pre-folded into wq.
# ----------------------------------------------------------------------------

def _cross_block_kernel(q_ref, mem_ref, wq_ref, bq_ref, wkv_ref, bkv_ref,
                        wo_ref, bo_ref, g_ref, b_ref, m_ref, o_ref,
                        *, heads, eps):
    x = q_ref[0].astype(jnp.float32)                 # [T, H]
    mem = mem_ref[0].astype(jnp.bfloat16)            # [Sk, H]
    T, H = x.shape
    dh = H // heads

    xn = _ln_rows(x, g_ref[...], b_ref[...], eps)
    q_all = jnp.dot(xn.astype(jnp.bfloat16), wq_ref[...],
                    preferred_element_type=jnp.float32) + bq_ref[...]    # [T, H]
    kv = jnp.dot(mem, wkv_ref[...],
                 preferred_element_type=jnp.float32) + bkv_ref[...]      # [Sk, 2H]

    mask = m_ref[0].astype(jnp.float32)              # [1, Sk] additive pad mask

    outs = []
    for h in range(heads):
        q = q_all[:, h * dh:(h + 1) * dh].astype(jnp.bfloat16)
        k = kv[:, h * dh:(h + 1) * dh].astype(jnp.bfloat16)
        v = kv[:, H + h * dh:H + (h + 1) * dh].astype(jnp.bfloat16)
        s = jax.lax.dot_general(q, k, (((1,), (1,)), ((), ())),
                                preferred_element_type=jnp.float32) + mask
        p = _softmax_rows(s)
        outs.append(jnp.dot(p.astype(jnp.bfloat16), v,
                            preferred_element_type=jnp.float32))
    ctx = jnp.concatenate(outs, axis=-1)             # [T, H]

    proj = jnp.dot(ctx.astype(jnp.bfloat16), wo_ref[...],
                   preferred_element_type=jnp.float32) + bo_ref[...]
    o_ref[0] = (proj + x).astype(o_ref.dtype)


def cross_block(query, memory, p, ln_g, ln_b, mask, heads, *, eps):
    B, T, H = query.shape
    Sk = memory.shape[1]
    return pl.pallas_call(
        functools.partial(_cross_block_kernel, heads=heads, eps=eps),
        out_shape=jax.ShapeDtypeStruct((B, T, H), jnp.bfloat16),
        grid=(B,),
        in_specs=[
            pl.BlockSpec((1, T, H), lambda b: (b, 0, 0)),
            pl.BlockSpec((1, Sk, H), lambda b: (b, 0, 0)),
            pl.BlockSpec((H, H), lambda b: (0, 0)),
            pl.BlockSpec((1, H), lambda b: (0, 0)),
            pl.BlockSpec((H, 2 * H), lambda b: (0, 0)),
            pl.BlockSpec((1, 2 * H), lambda b: (0, 0)),
            pl.BlockSpec((H, H), lambda b: (0, 0)),
            pl.BlockSpec((1, H), lambda b: (0, 0)),
            pl.BlockSpec((1, H), lambda b: (0, 0)),
            pl.BlockSpec((1, H), lambda b: (0, 0)),
            pl.BlockSpec((1, 1, Sk), lambda b: (b, 0, 0)),
        ],
        out_specs=pl.BlockSpec((1, T, H), lambda b: (b, 0, 0)),
        compiler_params=pltpu.CompilerParams(dimension_semantics=("parallel",)),
    )(query, memory, p["wq"], p["bq"].reshape(1, -1), p["wkv"],
      p["bkv"].reshape(1, -1), p["wo"], p["bo"].reshape(1, -1),
      ln_g.reshape(1, H), ln_b.reshape(1, H), mask)


# ----------------------------------------------------------------------------
# Fused feed-forward block:
#   pre_ln=False (encoder): out = LN( W2·GELU(W1·x) + x )
#   pre_ln=True  (decoder): out = W2·GELU(W1·LN(x)) + x
# ----------------------------------------------------------------------------

def _ffn_block_kernel(x_ref, w1_ref, b1_ref, w2_ref, b2_ref, g_ref, b_ref,
                      o_ref, *, pre_ln, eps):
    x = x_ref[0].astype(jnp.float32)                 # [S, H]
    xin = _ln_rows(x, g_ref[...], b_ref[...], eps) if pre_ln else x
    h1 = jnp.dot(xin.astype(jnp.bfloat16), w1_ref[...],
                 preferred_element_type=jnp.float32) + b1_ref[...]       # [S, F]
    h1 = _gelu(h1)
    h2 = jnp.dot(h1.astype(jnp.bfloat16), w2_ref[...],
                 preferred_element_type=jnp.float32) + b2_ref[...]       # [S, H]
    y = h2 + x                                       # residual
    if not pre_ln:
        y = _ln_rows(y, g_ref[...], b_ref[...], eps)
    o_ref[0] = y.astype(o_ref.dtype)


def ffn_block(x, w1, b1, w2, b2, ln_g, ln_b, *, pre_ln, eps):
    B, S, H = x.shape
    F = w1.shape[1]
    return pl.pallas_call(
        functools.partial(_ffn_block_kernel, pre_ln=pre_ln, eps=eps),
        out_shape=jax.ShapeDtypeStruct((B, S, H), jnp.bfloat16),
        grid=(B,),
        in_specs=[
            pl.BlockSpec((1, S, H), lambda b: (b, 0, 0)),
            pl.BlockSpec((H, F), lambda b: (0, 0)),
            pl.BlockSpec((1, F), lambda b: (0, 0)),
            pl.BlockSpec((F, H), lambda b: (0, 0)),
            pl.BlockSpec((1, H), lambda b: (0, 0)),
            pl.BlockSpec((1, H), lambda b: (0, 0)),
            pl.BlockSpec((1, H), lambda b: (0, 0)),
        ],
        out_specs=pl.BlockSpec((1, S, H), lambda b: (b, 0, 0)),
        compiler_params=pltpu.CompilerParams(dimension_semantics=("parallel",)),
    )(x, w1, b1.reshape(1, F), w2, b2.reshape(1, H),
      ln_g.reshape(1, H), ln_b.reshape(1, H))


# ----------------------------------------------------------------------------
# BERT encoder (post-LN) — produces top_vec (bf16)
# ----------------------------------------------------------------------------

def bert_forward(src, segs, mask_src, p, cfg):
    B, S = src.shape
    pos = jnp.arange(S)
    e = (jnp.take(p["word_emb"], src, axis=0)
         + jnp.take(p["pos_emb"], pos, axis=0)[None, :, :]
         + jnp.take(p["type_emb"], segs, axis=0))
    x = layernorm(e, p["emb_ln"][0], p["emb_ln"][1], eps=1e-12,
                  out_dtype=jnp.bfloat16)

    # extended attention mask: (1 - mask) * -10000, broadcast over queries in-kernel
    mask_add = ((1.0 - mask_src.astype(jnp.float32)) * -10000.0)[:, None, :]  # [B,1,S]

    for lp in p["enc_layers"]:
        x = attn_block(x, lp["attn"], lp["ln1"][0], lp["ln1"][1], mask_add,
                       cfg["heads"], causal=False, pre_ln=False, eps=1e-12)
        x = ffn_block(x, lp["w1"], lp["b1"], lp["w2"], lp["b2"],
                      lp["ln2"][0], lp["ln2"][1], pre_ln=False, eps=1e-12)
    return x  # top_vec (bf16)


# ----------------------------------------------------------------------------
# PreSumm-style TransformerDecoder (pre-LN) — produces decoder_outputs
# ----------------------------------------------------------------------------

def sinusoidal_pe(max_len, dim):
    position = jnp.arange(max_len, dtype=jnp.float32)[:, None]
    div_term = jnp.exp(jnp.arange(0, dim, 2, dtype=jnp.float32)
                       * -(math.log(10000.0) / dim))
    pe = jnp.zeros((max_len, dim), jnp.float32)
    pe = pe.at[:, 0::2].set(jnp.sin(position * div_term))
    pe = pe.at[:, 1::2].set(jnp.cos(position * div_term))
    return pe


def decoder_forward(tgt, memory, src, p, cfg):
    B, T = tgt.shape
    H = cfg["d_model"]
    heads = cfg["heads"]

    emb = jnp.take(p["tgt_emb"], tgt, axis=0) * math.sqrt(H)
    x = (emb + p["dec_pe"][None, :T, :]).astype(jnp.bfloat16)

    # pad masks as [B,1,L] additive; the causal (future) part is built in-kernel via iota
    tgt_pad_add = jnp.where(tgt == 0, -1e9, 0.0).astype(jnp.float32)[:, None, :]
    src_pad_add = jnp.where(src == 0, -1e9, 0.0).astype(jnp.float32)[:, None, :]

    for lp in p["dec_layers"]:
        # query = SelfAttn(LN(x)) + x     (fused kernel)
        query = attn_block(x, lp["self_attn"], lp["ln1"][0], lp["ln1"][1],
                           tgt_pad_add, heads, causal=True, pre_ln=True, eps=1e-6)
        # ff_in = CrossAttn(LN(query), memory) + query   (fused kernel)
        ff_in = cross_block(query, memory, lp["ctx_attn"], lp["ln2"][0],
                            lp["ln2"][1], src_pad_add, heads, eps=1e-6)
        # x = W2·GELU(W1·LN(ff_in)) + ff_in              (fused kernel)
        x = ffn_block(ff_in, lp["w1"], lp["b1"], lp["w2"], lp["b2"],
                      lp["ff_ln"][0], lp["ff_ln"][1], pre_ln=True, eps=1e-6)

    return layernorm(x, p["dec_final_ln"][0], p["dec_final_ln"][1], eps=1e-6,
                     out_dtype=jnp.float32)


# ----------------------------------------------------------------------------
# Full module forward
# ----------------------------------------------------------------------------

def model_forward(src, tgt, segs, mask_src, p, cfg):
    top_vec = bert_forward(src, segs, mask_src, p, cfg)
    decoder_outputs = decoder_forward(tgt[:, :-1], top_vec, src, p, cfg)
    return decoder_outputs, None


# ----------------------------------------------------------------------------
# Deterministic synthetic parameters
#   * matmul weights stored bf16 for the MXU
#   * 1/sqrt(dh) query scale folded into wqkv / wq (+ biases) at prep time
# ----------------------------------------------------------------------------

def init_params(key, cfg):
    H, V, F = cfg["d_model"], cfg["vocab"], cfg["d_ff"]
    dh = H // cfg["heads"]
    scale = 1.0 / math.sqrt(dh)
    keys = iter(jax.random.split(key, 256))

    def nrm(shape):
        return jax.random.normal(next(keys), shape, jnp.float32) * 0.02

    def ln():
        return (jnp.ones((H,), jnp.float32), jnp.zeros((H,), jnp.float32))

    def self_attn_p():
        wqkv = nrm((H, 3 * H))
        bqkv = jnp.zeros((3 * H,), jnp.float32)
        wqkv = wqkv.at[:, :H].multiply(scale)     # fold q scale into fused QKV weight
        bqkv = bqkv.at[:H].multiply(scale)
        return {"wqkv": wqkv.astype(jnp.bfloat16), "bqkv": bqkv,
                "wo": nrm((H, H)).astype(jnp.bfloat16),
                "bo": jnp.zeros((H,), jnp.float32)}

    def cross_attn_p():
        return {"wq": (nrm((H, H)) * scale).astype(jnp.bfloat16),
                "bq": jnp.zeros((H,), jnp.float32) * scale,
                "wkv": nrm((H, 2 * H)).astype(jnp.bfloat16),
                "bkv": jnp.zeros((2 * H,), jnp.float32),
                "wo": nrm((H, H)).astype(jnp.bfloat16),
                "bo": jnp.zeros((H,), jnp.float32)}

    p = {
        "word_emb": nrm((V, H)),
        "pos_emb": nrm((cfg["max_pos"], H)),
        "type_emb": nrm((2, H)),
        "emb_ln": ln(),
        "enc_layers": [],
        "dec_layers": [],
    }
    for _ in range(cfg["enc_layers"]):
        p["enc_layers"].append({
            "attn": self_attn_p(), "ln1": ln(), "ln2": ln(),
            "w1": nrm((H, F)).astype(jnp.bfloat16), "b1": jnp.zeros((F,), jnp.float32),
            "w2": nrm((F, H)).astype(jnp.bfloat16), "b2": jnp.zeros((H,), jnp.float32),
        })
    for _ in range(cfg["dec_layers"]):
        p["dec_layers"].append({
            "self_attn": self_attn_p(), "ctx_attn": cross_attn_p(),
            "ln1": ln(), "ln2": ln(), "ff_ln": ln(),
            "w1": nrm((H, F)).astype(jnp.bfloat16), "b1": jnp.zeros((F,), jnp.float32),
            "w2": nrm((F, H)).astype(jnp.bfloat16), "b2": jnp.zeros((H,), jnp.float32),
        })
    p["dec_final_ln"] = ln()
    # tgt embedding is a deepcopy of the BERT word embedding in the module
    p["tgt_emb"] = p["word_emb"]
    p["dec_pe"] = sinusoidal_pe(cfg["max_pos"], H)
    return p


# ----------------------------------------------------------------------------
# Main
# ----------------------------------------------------------------------------

if __name__ == "__main__":
    cfg = dict(vocab=128, d_model=128, d_ff=256, heads=2,
               enc_layers=2, dec_layers=2, max_pos=64)

    B, S_SRC, S_TGT = 2, 16, 8
    key = jax.random.PRNGKey(0)
    k_param, k_src, k_tgt = jax.random.split(key, 3)

    params = init_params(k_param, cfg)

    # tokens in [1, vocab) so no pad (id 0) rows fully mask themselves out
    src = jax.random.randint(k_src, (B, S_SRC), 1, cfg["vocab"], dtype=jnp.int32)
    tgt = jax.random.randint(k_tgt, (B, S_TGT), 1, cfg["vocab"], dtype=jnp.int32)
    segs = jnp.zeros((B, S_SRC), jnp.int32)
    mask_src = jnp.ones((B, S_SRC), jnp.int32)

    fwd = jax.jit(functools.partial(model_forward, cfg=cfg))
    dec_out, none_out = fwd(src, tgt, segs, mask_src, p=params)
    dec_out = jax.block_until_ready(dec_out)

    assert dec_out.shape == (B, S_TGT - 1, cfg["d_model"])
    assert none_out is None
    assert bool(jnp.all(jnp.isfinite(dec_out)))
    print("KERNEL_OK")
</pallas_src>

<mosaic_0001>
module attributes {stable_mosaic.version = 11 : i64} {
  func.func @_ln_kernel(%arg0: i32, %arg1: memref<1x16x128xf32, #tpu.memory_space<vmem>>, %arg2: memref<1x128xf32, #tpu.memory_space<vmem>>, %arg3: memref<1x128xf32, #tpu.memory_space<vmem>>, %arg4: memref<1x16x128xbf16, #tpu.memory_space<vmem>>) attributes {dimension_semantics = [#tpu.dimension_semantics<parallel>], iteration_bounds = array<i64: 2>, scalar_prefetch = 0 : i64, scratch_operands = 0 : i64, tpu.core_type = #tpu.core_type<tc>, window_params = [{transform_indices = @transform_0, window_bounds = array<i64: 1, 16, 128>}, {pipeline_mode = #tpu.pipeline_mode<synchronous>, transform_indices = @transform_1, window_bounds = array<i64: 1, 128>}, {pipeline_mode = #tpu.pipeline_mode<synchronous>, transform_indices = @transform_2, window_bounds = array<i64: 1, 128>}, {transform_indices = @transform_3, window_bounds = array<i64: 1, 16, 128>}]} {
    %c0 = arith.constant 0 : index
    %c0_0 = arith.constant 0 : index
    %c0_1 = arith.constant 0 : index
    %0 = vector.load %arg1[%c0, %c0_0, %c0_1] : memref<1x16x128xf32, #tpu.memory_space<vmem>>, vector<1x16x128xf32>
    %1 = vector.shape_cast %0 : vector<1x16x128xf32> to vector<16x128xf32>
    %c0_2 = arith.constant 0 : index
    %c0_3 = arith.constant 0 : index
    %2 = vector.load %arg2[%c0_2, %c0_3] : memref<1x128xf32, #tpu.memory_space<vmem>>, vector<1x128xf32>
    %c0_4 = arith.constant 0 : index
    %c0_5 = arith.constant 0 : index
    %3 = vector.load %arg3[%c0_4, %c0_5] : memref<1x128xf32, #tpu.memory_space<vmem>>, vector<1x128xf32>
    %cst = arith.constant dense<0.000000e+00> : vector<16xf32>
    %4 = vector.multi_reduction <add>, %1, %cst [1] : vector<16x128xf32> to vector<16xf32>
    %5 = vector.shape_cast %4 : vector<16xf32> to vector<16x1xf32>
    %cst_6 = arith.constant 1.280000e+02 : f32
    %6 = vector.broadcast %cst_6 : f32 to vector<16x1xf32>
    %7 = arith.divf %5, %6 : vector<16x1xf32>
    %8 = vector.broadcast %7 : vector<16x1xf32> to vector<16x128xf32>
    %9 = arith.subf %1, %8 : vector<16x128xf32>
    %10 = arith.mulf %9, %9 : vector<16x128xf32>
    %cst_7 = arith.constant dense<0.000000e+00> : vector<16xf32>
    %11 = vector.multi_reduction <add>, %10, %cst_7 [1] : vector<16x128xf32> to vector<16xf32>
    %12 = vector.shape_cast %11 : vector<16xf32> to vector<16x1xf32>
    %cst_8 = arith.constant 1.280000e+02 : f32
    %13 = vector.broadcast %cst_8 : f32 to vector<16x1xf32>
    %14 = arith.divf %12, %13 : vector<16x1xf32>
    %15 = vector.broadcast %7 : vector<16x1xf32> to vector<16x128xf32>
    %16 = arith.subf %1, %15 : vector<16x128xf32>
    %cst_9 = arith.constant 9.99999996E-13 : f32
    %17 = vector.broadcast %cst_9 : f32 to vector<16x1xf32>
    %18 = arith.addf %14, %17 : vector<16x1xf32>
    %19 = math.rsqrt %18 : vector<16x1xf32>
    %20 = vector.broadcast %19 : vector<16x1xf32> to vector<16x128xf32>
    %21 = arith.mulf %16, %20 : vector<16x128xf32>
    %22 = vector.broadcast %2 : vector<1x128xf32> to vector<16x128xf32>
    %23 = arith.mulf %21, %22 : vector<16x128xf32>
    %24 = vector.broadcast %3 : vector<1x128xf32> to vector<16x128xf32>
    %25 = arith.addf %23, %24 : vector<16x128xf32>
    %26 = arith.truncf %25 : vector<16x128xf32> to vector<16x128xbf16>
    %c0_10 = arith.constant 0 : index
    %c0_11 = arith.constant 0 : index
    %c0_12 = arith.constant 0 : index
    %27 = vector.load %arg4[%c0_10, %c0_11, %c0_12] : memref<1x16x128xbf16, #tpu.memory_space<vmem>>, vector<1x16x128xbf16>
    %28 = vector.shape_cast %27 : vector<1x16x128xbf16> to vector<16x128xbf16>
    %29 = vector.shape_cast %26 : vector<16x128xbf16> to vector<1x16x128xbf16>
    tpu.vector_store %arg4[%c0_10, %c0_11, %c0_12], %29 {strides = array<i32>} : memref<1x16x128xbf16, #tpu.memory_space<vmem>>, vector<1x16x128xbf16>,
    return
  }
  func.func @transform_0(%arg0: i32) -> (i32, i32, i32) {
    %c0_i32 = arith.constant 0 : i32
    %c0_i32_0 = arith.constant 0 : i32
    %c0_i32_1 = arith.constant 0 : i32
    return %arg0, %c0_i32, %c0_i32_0 : i32, i32, i32
  }
  func.func @transform_1(%arg0: i32) -> (i32, i32) {
    %c0_i32 = arith.constant 0 : i32
    %c0_i32_0 = arith.constant 0 : i32
    %c0_i32_1 = arith.constant 0 : i32
    return %c0_i32, %c0_i32_0 : i32, i32
  }
  func.func @transform_2(%arg0: i32) -> (i32, i32) {
    %c0_i32 = arith.constant 0 : i32
    %c0_i32_0 = arith.constant 0 : i32
    %c0_i32_1 = arith.constant 0 : i32
    return %c0_i32, %c0_i32_0 : i32, i32
  }
  func.func @transform_3(%arg0: i32) -> (i32, i32, i32) {
    %c0_i32 = arith.constant 0 : i32
    %c0_i32_0 = arith.constant 0 : i32
    %c0_i32_1 = arith.constant 0 : i32
    return %arg0, %c0_i32, %c0_i32_0 : i32, i32, i32
  }
}

module attributes {stable_mosaic.version = 11 : i64} {
  func.func @_ffn_block_kernel(%arg0: i32, %arg1: memref<1x16x128xbf16, #tpu.memory_space<vmem>>, %arg2: memref<128x256xbf16, #tpu.memory_space<vmem>>, %arg3: memref<1x256xf32, #tpu.memory_space<vmem>>, %arg4: memref<256x128xbf16, #tpu.memory_space<vmem>>, %arg5: memref<1x128xf32, #tpu.memory_space<vmem>>, %arg6: memref<1x128xf32, #tpu.memory_space<vmem>>, %arg7: memref<1x128xf32, #tpu.memory_space<vmem>>, %arg8: memref<1x16x128xbf16, #tpu.memory_space<vmem>>) attributes {dimension_semantics = [#tpu.dimension_semantics<parallel>], iteration_bounds = array<i64: 2>, scalar_prefetch = 0 : i64, scratch_operands = 0 : i64, tpu.core_type = #tpu.core_type<tc>, window_params = [{transform_indices = @transform_0, window_bounds = array<i64: 1, 16, 128>}, {pipeline_mode = #tpu.pipeline_mode<synchronous>, transform_indices = @transform_1, window_bounds = array<i64: 128, 256>}, {pipeline_mode = #tpu.pipeline_mode<synchronous>, transform_indices = @transform_2, window_bounds = array<i64: 1, 256>}, {pipeline_mode = #tpu.pipeline_mode<synchronous>, transform_indices = @transform_3, window_bounds = array<i64: 256, 128>}, {pipeline_mode = #tpu.pipeline_mode<synchronous>, transform_indices = @transform_4, window_bounds = array<i64: 1, 128>}, {pipeline_mode = #tpu.pipeline_mode<synchronous>, transform_indices = @transform_5, window_bounds = array<i64: 1, 128>}, {pipeline_mode = #tpu.pipeline_mode<synchronous>, transform_indices = @transform_6, window_bounds = array<i64: 1, 128>}, {transform_indices = @transform_7, window_bounds = array<i64: 1, 16, 128>}]} {
    %c0 = arith.constant 0 : index
    %c0_0 = arith.constant 0 : index
    %c0_1 = arith.constant 0 : index
    %0 = vector.load %arg1[%c0, %c0_0, %c0_1] : memref<1x16x128xbf16, #tpu.memory_space<vmem>>, vector<1x16x128xbf16>
    %1 = vector.shape_cast %0 : vector<1x16x128xbf16> to vector<16x128xbf16>
    %2 = arith.extf %1 : vector<16x128xbf16> to vector<16x128xf32>
    %3 = arith.truncf %2 : vector<16x128xf32> to vector<16x128xbf16>
    %c0_2 = arith.constant 0 : index
    %c0_3 = arith.constant 0 : index
    %4 = vector.load %arg2[%c0_2, %c0_3] : memref<128x256xbf16, #tpu.memory_space<vmem>>, vector<128x256xbf16>
    %cst = arith.constant dense<0.000000e+00> : vector<16x256xf32>
    %5 = tpu.matmul %3, %4, %cst {dimension_numbers = #tpu.dot_dimension_numbers<[1], [0], [0], [1], [0, 0, 1, 1], [], []>} : vector<16x128xbf16>, vector<128x256xbf16>, vector<16x256xf32> -> vector<16x256xf32>
    %c0_4 = arith.constant 0 : index
    %c0_5 = arith.constant 0 : index
    %6 = vector.load %arg3[%c0_4, %c0_5] : memref<1x256xf32, #tpu.memory_space<vmem>>, vector<1x256xf32>
    %7 = vector.broadcast %6 : vector<1x256xf32> to vector<16x256xf32>
    %8 = arith.addf %5, %7 : vector<16x256xf32>
    %cst_6 = arith.constant 5.000000e-01 : f32
    %9 = vector.broadcast %cst_6 : f32 to vector<16x256xf32>
    %10 = arith.mulf %9, %8 : vector<16x256xf32>
    %cst_7 = arith.constant 4.471500e-02 : f32
    %11 = vector.broadcast %cst_7 : f32 to vector<16x256xf32>
    %12 = arith.mulf %11, %8 : vector<16x256xf32>
    %13 = arith.mulf %12, %8 : vector<16x256xf32>
    %14 = arith.mulf %13, %8 : vector<16x256xf32>
    %15 = arith.addf %8, %14 : vector<16x256xf32>
    %cst_8 = arith.constant 0.797884583 : f32
    %16 = vector.broadcast %cst_8 : f32 to vector<16x256xf32>
    %17 = arith.mulf %16, %15 : vector<16x256xf32>
    %18 = math.tanh %17 : vector<16x256xf32>
    %cst_9 = arith.constant 1.000000e+00 : f32
    %19 = vector.broadcast %cst_9 : f32 to vector<16x256xf32>
    %20 = arith.addf %19, %18 : vector<16x256xf32>
    %21 = arith.mulf %10, %20 : vector<16x256xf32>
    %22 = arith.truncf %21 : vector<16x256xf32> to vector<16x256xbf16>
    %c0_10 = arith.constant 0 : index
    %c0_11 = arith.constant 0 : index
    %23 = vector.load %arg4[%c0_10, %c0_11] : memref<256x128xbf16, #tpu.memory_space<vmem>>, vector<256x128xbf16>
    %cst_12 = arith.constant dense<0.000000e+00> : vector<16x128xf32>
    %24 = tpu.matmul %22, %23, %cst_12 {dimension_numbers = #tpu.dot_dimension_numbers<[1], [0], [0], [1], [0, 0, 1, 1], [], []>} : vector<16x256xbf16>, vector<256x128xbf16>, vector<16x128xf32> -> vector<16x128xf32>
    %c0_13 = arith.constant 0 : index
    %c0_14 = arith.constant 0 : index
    %25 = vector.load %arg5[%c0_13, %c0_14] : memref<1x128xf32, #tpu.memory_space<vmem>>, vector<1x128xf32>
    %26 = vector.broadcast %25 : vector<1x128xf32> to vector<16x128xf32>
    %27 = arith.addf %24, %26 : vector<16x128xf32>
    %28 = arith.addf %27, %2 : vector<16x128xf32>
    %c0_15 = arith.constant 0 : index
    %c0_16 = arith.constant 0 : index
    %29 = vector.load %arg6[%c0_15, %c0_16] : memref<1x128xf32, #tpu.memory_space<vmem>>, vector<1x128xf32>
    %c0_17 = arith.constant 0 : index
    %c0_18 = arith.constant 0 : index
    %30 = vector.load %arg7[%c0_17, %c0_18] : memref<1x128xf32, #tpu.memory_space<vmem>>, vector<1x128xf32>
    %cst_19 = arith.constant dense<0.000000e+00> : vector<16xf32>
    %31 = vector.multi_reduction <add>, %28, %cst_19 [1] : vector<16x128xf32> to vector<16xf32>
    %32 = vector.shape_cast %31 : vector<16xf32> to vector<16x1xf32>
    %cst_20 = arith.constant 1.280000e+02 : f32
    %33 = vector.broadcast %cst_20 : f32 to vector<16x1xf32>
    %34 = arith.divf %32, %33 : vector<16x1xf32>
    %35 = vector.broadcast %34 : vector<16x1xf32> to vector<16x128xf32>
    %36 = arith.subf %28, %35 : vector<16x128xf32>
    %37 = arith.mulf %36, %36 : vector<16x128xf32>
    %cst_21 = arith.constant dense<0.000000e+00> : vector<16xf32>
    %38 = vector.multi_reduction <add>, %37, %cst_21 [1] : vector<16x128xf32> to vector<16xf32>
    %39 = vector.shape_cast %38 : vector<16xf32> to vector<16x1xf32>
    %cst_22 = arith.constant 1.280000e+02 : f32
    %40 = vector.broadcast %cst_22 : f32 to vector<16x1xf32>
    %41 = arith.divf %39, %40 : vector<16x1xf32>
    %42 = vector.broadcast %34 : vector<16x1xf32> to vector<16x128xf32>
    %43 = arith.subf %28, %42 : vector<16x128xf32>
    %cst_23 = arith.constant 9.99999996E-13 : f32
    %44 = vector.broadcast %cst_23 : f32 to vector<16x1xf32>
    %45 = arith.addf %41, %44 : vector<16x1xf32>
    %46 = math.rsqrt %45 : vector<16x1xf32>
    %47 = vector.broadcast %46 : vector<16x1xf32> to vector<16x128xf32>
    %48 = arith.mulf %43, %47 : vector<16x128xf32>
    %49 = vector.broadcast %29 : vector<1x128xf32> to vector<16x128xf32>
    %50 = arith.mulf %48, %49 : vector<16x128xf32>
    %51 = vector.broadcast %30 : vector<1x128xf32> to vector<16x128xf32>
    %52 = arith.addf %50, %51 : vector<16x128xf32>
    %53 = arith.truncf %52 : vector<16x128xf32> to vector<16x128xbf16>
    %c0_24 = arith.constant 0 : index
    %c0_25 = arith.constant 0 : index
    %c0_26 = arith.constant 0 : index
    %54 = vector.load %arg8[%c0_24, %c0_25, %c0_26] : memref<1x16x128xbf16, #tpu.memory_space<vmem>>, vector<1x16x128xbf16>
    %55 = vector.shape_cast %54 : vector<1x16x128xbf16> to vector<16x128xbf16>
    %56 = vector.shape_cast %53 : vector<16x128xbf16> to vector<1x16x128xbf16>
    tpu.vector_store %arg8[%c0_24, %c0_25, %c0_26], %56 {strides = array<i32>} : memref<1x16x128xbf16, #tpu.memory_space<vmem>>, vector<1x16x128xbf16>,
    return
  }
  func.func @transform_0(%arg0: i32) -> (i32, i32, i32) {
    %c0_i32 = arith.constant 0 : i32
    %c0_i32_0 = arith.constant 0 : i32
    %c0_i32_1 = arith.constant 0 : i32
    return %arg0, %c0_i32, %c0_i32_0 : i32, i32, i32
  }
  func.func @transform_1(%arg0: i32) -> (i32, i32) {
    %c0_i32 = arith.constant 0 : i32
    %c0_i32_0 = arith.constant 0 : i32
    %c0_i32_1 = arith.constant 0 : i32
    return %c0_i32, %c0_i32_0 : i32, i32
  }
  func.func @transform_2(%arg0: i32) -> (i32, i32) {
    %c0_i32 = arith.constant 0 : i32
    %c0_i32_0 = arith.constant 0 : i32
    %c0_i32_1 = arith.constant 0 : i32
    return %c0_i32, %c0_i32_0 : i32, i32
  }
  func.func @transform_3(%arg0: i32) -> (i32, i32) {
    %c0_i32 = arith.constant 0 : i32
    %c0_i32_0 = arith.constant 0 : i32
    %c0_i32_1 = arith.constant 0 : i32
    return %c0_i32, %c0_i32_0 : i32, i32
  }
  func.func @transform_4(%arg0: i32) -> (i32, i32) {
    %c0_i32 = arith.constant 0 : i32
    %c0_i32_0 = arith.constant 0 : i32
    %c0_i32_1 = arith.constant 0 : i32
    return %c0_i32, %c0_i32_0 : i32, i32
  }
  func.func @transform_5(%arg0: i32) -> (i32, i32) {
    %c0_i32 = arith.constant 0 : i32
    %c0_i32_0 = arith.constant 0 : i32
    %c0_i32_1 = arith.constant 0 : i32
    return %c0_i32, %c0_i32_0 : i32, i32
  }
  func.func @transform_6(%arg0: i32) -> (i32, i32) {
    %c0_i32 = arith.constant 0 : i32
    %c0_i32_0 = arith.constant 0 : i32
    %c0_i32_1 = arith.constant 0 : i32
    return %c0_i32, %c0_i32_0 : i32, i32
  }
  func.func @transform_7(%arg0: i32) -> (i32, i32, i32) {
    %c0_i32 = arith.constant 0 : i32
    %c0_i32_0 = arith.constant 0 : i32
    %c0_i32_1 = arith.constant 0 : i32
    return %arg0, %c0_i32, %c0_i32_0 : i32, i32, i32
  }
}

module attributes {stable_mosaic.version = 11 : i64} {
  func.func @_attn_block_kernel(%arg0: i32, %arg1: memref<1x16x128xbf16, #tpu.memory_space<vmem>>, %arg2: memref<128x384xbf16, #tpu.memory_space<vmem>>, %arg3: memref<1x384xf32, #tpu.memory_space<vmem>>, %arg4: memref<128x128xbf16, #tpu.memory_space<vmem>>, %arg5: memref<1x128xf32, #tpu.memory_space<vmem>>, %arg6: memref<1x128xf32, #tpu.memory_space<vmem>>, %arg7: memref<1x128xf32, #tpu.memory_space<vmem>>, %arg8: memref<1x1x16xf32, #tpu.memory_space<vmem>>, %arg9: memref<1x16x128xbf16, #tpu.memory_space<vmem>>) attributes {dimension_semantics = [#tpu.dimension_semantics<parallel>], iteration_bounds = array<i64: 2>, scalar_prefetch = 0 : i64, scratch_operands = 0 : i64, tpu.core_type = #tpu.core_type<tc>, window_params = [{transform_indices = @transform_0, window_bounds = array<i64: 1, 16, 128>}, {pipeline_mode = #tpu.pipeline_mode<synchronous>, transform_indices = @transform_1, window_bounds = array<i64: 128, 384>}, {pipeline_mode = #tpu.pipeline_mode<synchronous>, transform_indices = @transform_2, window_bounds = array<i64: 1, 384>}, {pipeline_mode = #tpu.pipeline_mode<synchronous>, transform_indices = @transform_3, window_bounds = array<i64: 128, 128>}, {pipeline_mode = #tpu.pipeline_mode<synchronous>, transform_indices = @transform_4, window_bounds = array<i64: 1, 128>}, {pipeline_mode = #tpu.pipeline_mode<synchronous>, transform_indices = @transform_5, window_bounds = array<i64: 1, 128>}, {pipeline_mode = #tpu.pipeline_mode<synchronous>, transform_indices = @transform_6, window_bounds = array<i64: 1, 128>}, {transform_indices = @transform_7, window_bounds = array<i64: 1, 1, 16>}, {transform_indices = @transform_8, window_bounds = array<i64: 1, 16, 128>}]} {
    %c0 = arith.constant 0 : index
    %c0_0 = arith.constant 0 : index
    %c0_1 = arith.constant 0 : index
    %0 = vector.load %arg1[%c0, %c0_0, %c0_1] : memref<1x16x128xbf16, #tpu.memory_space<vmem>>, vector<1x16x128xbf16>
    %1 = vector.shape_cast %0 : vector<1x16x128xbf16> to vector<16x128xbf16>
    %2 = arith.extf %1 : vector<16x128xbf16> to vector<16x128xf32>
    %3 = arith.truncf %2 : vector<16x128xf32> to vector<16x128xbf16>
    %c0_2 = arith.constant 0 : index
    %c0_3 = arith.constant 0 : index
    %4 = vector.load %arg2[%c0_2, %c0_3] : memref<128x384xbf16, #tpu.memory_space<vmem>>, vector<128x384xbf16>
    %cst = arith.constant dense<0.000000e+00> : vector<16x384xf32>
    %5 = tpu.matmul %3, %4, %cst {dimension_numbers = #tpu.dot_dimension_numbers<[1], [0], [0], [1], [0, 0, 1, 1], [], []>} : vector<16x128xbf16>, vector<128x384xbf16>, vector<16x384xf32> -> vector<16x384xf32>
    %c0_4 = arith.constant 0 : index
    %c0_5 = arith.constant 0 : index
    %6 = vector.load %arg3[%c0_4, %c0_5] : memref<1x384xf32, #tpu.memory_space<vmem>>, vector<1x384xf32>
    %7 = vector.broadcast %6 : vector<1x384xf32> to vector<16x384xf32>
    %8 = arith.addf %5, %7 : vector<16x384xf32>
    %c0_6 = arith.constant 0 : index
    %c0_7 = arith.constant 0 : index
    %c0_8 = arith.constant 0 : index
    %9 = vector.load %arg8[%c0_6, %c0_7, %c0_8] : memref<1x1x16xf32, #tpu.memory_space<vmem>>, vector<1x1x16xf32>
    %10 = vector.shape_cast %9 : vector<1x1x16xf32> to vector<1x16xf32>
    %11 = vector.extract_strided_slice %8 {offsets = [0, 0], sizes = [16, 64], strides = [1, 1]} : vector<16x384xf32> to vector<16x64xf32>
    %12 = arith.truncf %11 : vector<16x64xf32> to vector<16x64xbf16>
    %13 = vector.extract_strided_slice %8 {offsets = [0, 128], sizes = [16, 64], strides = [1, 1]} : vector<16x384xf32> to vector<16x64xf32>
    %14 = arith.truncf %13 : vector<16x64xf32> to vector<16x64xbf16>
    %15 = vector.extract_strided_slice %8 {offsets = [0, 256], sizes = [16, 64], strides = [1, 1]} : vector<16x384xf32> to vector<16x64xf32>
    %16 = arith.truncf %15 : vector<16x64xf32> to vector<16x64xbf16>
    %cst_9 = arith.constant dense<0.000000e+00> : vector<16x16xf32>
    %17 = tpu.matmul %12, %14, %cst_9 {dimension_numbers = #tpu.dot_dimension_numbers<[1], [1], [0], [0], [0, 0, 1, 0], [], []>} : vector<16x64xbf16>, vector<16x64xbf16>, vector<16x16xf32> -> vector<16x16xf32>
    %18 = vector.broadcast %10 : vector<1x16xf32> to vector<16x16xf32>
    %19 = arith.addf %17, %18 : vector<16x16xf32>
    %cst_10 = arith.constant dense<0xFF800000> : vector<16xf32>
    %20 = vector.multi_reduction <maximumf>, %19, %cst_10 [1] : vector<16x16xf32> to vector<16xf32>
    %21 = vector.shape_cast %20 : vector<16xf32> to vector<16x1xf32>
    %22 = vector.broadcast %21 : vector<16x1xf32> to vector<16x16xf32>
    %23 = arith.subf %19, %22 : vector<16x16xf32>
    %24 = math.exp %23 : vector<16x16xf32>
    %cst_11 = arith.constant dense<0.000000e+00> : vector<16xf32>
    %25 = vector.multi_reduction <add>, %24, %cst_11 [1] : vector<16x16xf32> to vector<16xf32>
    %26 = vector.shape_cast %25 : vector<16xf32> to vector<16x1xf32>
    %27 = tpu.reciprocal %26 {approx = true} : vector<16x1xf32> -> vector<16x1xf32>
    %28 = vector.broadcast %27 : vector<16x1xf32> to vector<16x16xf32>
    %29 = arith.mulf %24, %28 : vector<16x16xf32>
    %30 = arith.truncf %29 : vector<16x16xf32> to vector<16x16xbf16>
    %cst_12 = arith.constant dense<0.000000e+00> : vector<16x64xf32>
    %31 = tpu.matmul %30, %16, %cst_12 {dimension_numbers = #tpu.dot_dimension_numbers<[1], [0], [0], [1], [0, 0, 1, 1], [], []>} : vector<16x16xbf16>, vector<16x64xbf16>, vector<16x64xf32> -> vector<16x64xf32>
    %32 = vector.extract_strided_slice %8 {offsets = [0, 64], sizes = [16, 64], strides = [1, 1]} : vector<16x384xf32> to vector<16x64xf32>
    %33 = arith.truncf %32 : vector<16x64xf32> to vector<16x64xbf16>
    %34 = vector.extract_strided_slice %8 {offsets = [0, 192], sizes = [16, 64], strides = [1, 1]} : vector<16x384xf32> to vector<16x64xf32>
    %35 = arith.truncf %34 : vector<16x64xf32> to vector<16x64xbf16>
    %36 = vector.extract_strided_slice %8 {offsets = [0, 320], sizes = [16, 64], strides = [1, 1]} : vector<16x384xf32> to vector<16x64xf32>
    %37 = arith.truncf %36 : vector<16x64xf32> to vector<16x64xbf16>
    %cst_13 = arith.constant dense<0.000000e+00> : vector<16x16xf32>
    %38 = tpu.matmul %33, %35, %cst_13 {dimension_numbers = #tpu.dot_dimension_numbers<[1], [1], [0], [0], [0, 0, 1, 0], [], []>} : vector<16x64xbf16>, vector<16x64xbf16>, vector<16x16xf32> -> vector<16x16xf32>
    %39 = vector.broadcast %10 : vector<1x16xf32> to vector<16x16xf32>
    %40 = arith.addf %38, %39 : vector<16x16xf32>
    %cst_14 = arith.constant dense<0xFF800000> : vector<16xf32>
    %41 = vector.multi_reduction <maximumf>, %40, %cst_14 [1] : vector<16x16xf32> to vector<16xf32>
    %42 = vector.shape_cast %41 : vector<16xf32> to vector<16x1xf32>
    %43 = vector.broadcast %42 : vector<16x1xf32> to vector<16x16xf32>
    %44 = arith.subf %40, %43 : vector<16x16xf32>
    %45 = math.exp %44 : vector<16x16xf32>
    %cst_15 = arith.constant dense<0.000000e+00> : vector<16xf32>
    %46 = vector.multi_reduction <add>, %45, %cst_15 [1] : vector<16x16xf32> to vector<16xf32>
    %47 = vector.shape_cast %46 : vector<16xf32> to vector<16x1xf32>
    %48 = tpu.reciprocal %47 {approx = true} : vector<16x1xf32> -> vector<16x1xf32>
    %49 = vector.broadcast %48 : vector<16x1xf32> to vector<16x16xf32>
    %50 = arith.mulf %45, %49 : vector<16x16xf32>
    %51 = arith.truncf %50 : vector<16x16xf32> to vector<16x16xbf16>
    %cst_16 = arith.constant dense<0.000000e+00> : vector<16x64xf32>
    %52 = tpu.matmul %51, %37, %cst_16 {dimension_numbers = #tpu.dot_dimension_numbers<[1], [0], [0], [1], [0, 0, 1, 1], [], []>} : vector<16x16xbf16>, vector<16x64xbf16>, vector<16x64xf32> -> vector<16x64xf32>
    %53 = tpu.concatenate %31, %52 in 1 : vector<16x64xf32>, vector<16x64xf32> -> vector<16x128xf32>
    %54 = arith.truncf %53 : vector<16x128xf32> to vector<16x128xbf16>
    %c0_17 = arith.constant 0 : index
    %c0_18 = arith.constant 0 : index
    %55 = vector.load %arg4[%c0_17, %c0_18] : memref<128x128xbf16, #tpu.memory_space<vmem>>, vector<128x128xbf16>
    %cst_19 = arith.constant dense<0.000000e+00> : vector<16x128xf32>
    %56 = tpu.matmul %54, %55, %cst_19 {dimension_numbers = #tpu.dot_dimension_numbers<[1], [0], [0], [1], [0, 0, 1, 1], [], []>} : vector<16x128xbf16>, vector<128x128xbf16>, vector<16x128xf32> -> vector<16x128xf32>
    %c0_20 = arith.constant 0 : index
    %c0_21 = arith.constant 0 : index
    %57 = vector.load %arg5[%c0_20, %c0_21] : memref<1x128xf32, #tpu.memory_space<vmem>>, vector<1x128xf32>
    %58 = vector.broadcast %57 : vector<1x128xf32> to vector<16x128xf32>
    %59 = arith.addf %56, %58 : vector<16x128xf32>
    %60 = arith.addf %59, %2 : vector<16x128xf32>
    %c0_22 = arith.constant 0 : index
    %c0_23 = arith.constant 0 : index
    %61 = vector.load %arg6[%c0_22, %c0_23] : memref<1x128xf32, #tpu.memory_space<vmem>>, vector<1x128xf32>
    %c0_24 = arith.constant 0 : index
    %c0_25 = arith.constant 0 : index
    %62 = vector.load %arg7[%c0_24, %c0_25] : memref<1x128xf32, #tpu.memory_space<vmem>>, vector<1x128xf32>
    %cst_26 = arith.constant dense<0.000000e+00> : vector<16xf32>
    %63 = vector.multi_reduction <add>, %60, %cst_26 [1] : vector<16x128xf32> to vector<16xf32>
    %64 = vector.shape_cast %63 : vector<16xf32> to vector<16x1xf32>
    %cst_27 = arith.constant 1.280000e+02 : f32
    %65 = vector.broadcast %cst_27 : f32 to vector<16x1xf32>
    %66 = arith.divf %64, %65 : vector<16x1xf32>
    %67 = vector.broadcast %66 : vector<16x1xf32> to vector<16x128xf32>
    %68 = arith.subf %60, %67 : vector<16x128xf32>
    %69 = arith.mulf %68, %68 : vector<16x128xf32>
    %cst_28 = arith.constant dense<0.000000e+00> : vector<16xf32>
    %70 = vector.multi_reduction <add>, %69, %cst_28 [1] : vector<16x128xf32> to vector<16xf32>
    %71 = vector.shape_cast %70 : vector<16xf32> to vector<16x1xf32>
    %cst_29 = arith.constant 1.280000e+02 : f32
    %72 = vector.broadcast %cst_29 : f32 to vector<16x1xf32>
    %73 = arith.divf %71, %72 : vector<16x1xf32>
    %74 = vector.broadcast %66 : vector<16x1xf32> to vector<16x128xf32>
    %75 = arith.subf %60, %74 : vector<16x128xf32>
    %cst_30 = arith.constant 9.99999996E-13 : f32
    %76 = vector.broadcast %cst_30 : f32 to vector<16x1xf32>
    %77 = arith.addf %73, %76 : vector<16x1xf32>
    %78 = math.rsqrt %77 : vector<16x1xf32>
    %79 = vector.broadcast %78 : vector<16x1xf32> to vector<16x128xf32>
    %80 = arith.mulf %75, %79 : vector<16x128xf32>
    %81 = vector.broadcast %61 : vector<1x128xf32> to vector<16x128xf32>
    %82 = arith.mulf %80, %81 : vector<16x128xf32>
    %83 = vector.broadcast %62 : vector<1x128xf32> to vector<16x128xf32>
    %84 = arith.addf %82, %83 : vector<16x128xf32>
    %85 = arith.truncf %84 : vector<16x128xf32> to vector<16x128xbf16>
    %c0_31 = arith.constant 0 : index
    %c0_32 = arith.constant 0 : index
    %c0_33 = arith.constant 0 : index
    %86 = vector.load %arg9[%c0_31, %c0_32, %c0_33] : memref<1x16x128xbf16, #tpu.memory_space<vmem>>, vector<1x16x128xbf16>
    %87 = vector.shape_cast %86 : vector<1x16x128xbf16> to vector<16x128xbf16>
    %88 = vector.shape_cast %85 : vector<16x128xbf16> to vector<1x16x128xbf16>
    tpu.vector_store %arg9[%c0_31, %c0_32, %c0_33], %88 {strides = array<i32>} : memref<1x16x128xbf16, #tpu.memory_space<vmem>>, vector<1x16x128xbf16>,
    return
  }
  func.func @transform_0(%arg0: i32) -> (i32, i32, i32) {
    %c0_i32 = arith.constant 0 : i32
    %c0_i32_0 = arith.constant 0 : i32
    %c0_i32_1 = arith.constant 0 : i32
    return %arg0, %c0_i32, %c0_i32_0 : i32, i32, i32
  }
  func.func @transform_1(%arg0: i32) -> (i32, i32) {
    %c0_i32 = arith.constant 0 : i32
    %c0_i32_0 = arith.constant 0 : i32
    %c0_i32_1 = arith.constant 0 : i32
    return %c0_i32, %c0_i32_0 : i32, i32
  }
  func.func @transform_2(%arg0: i32) -> (i32, i32) {
    %c0_i32 = arith.constant 0 : i32
    %c0_i32_0 = arith.constant 0 : i32
    %c0_i32_1 = arith.constant 0 : i32
    return %c0_i32, %c0_i32_0 : i32, i32
  }
  func.func @transform_3(%arg0: i32) -> (i32, i32) {
    %c0_i32 = arith.constant 0 : i32
    %c0_i32_0 = arith.constant 0 : i32
    %c0_i32_1 = arith.constant 0 : i32
    return %c0_i32, %c0_i32_0 : i32, i32
  }
  func.func @transform_4(%arg0: i32) -> (i32, i32) {
    %c0_i32 = arith.constant 0 : i32
    %c0_i32_0 = arith.constant 0 : i32
    %c0_i32_1 = arith.constant 0 : i32
    return %c0_i32, %c0_i32_0 : i32, i32
  }
  func.func @transform_5(%arg0: i32) -> (i32, i32) {
    %c0_i32 = arith.constant 0 : i32
    %c0_i32_0 = arith.constant 0 : i32
    %c0_i32_1 = arith.constant 0 : i32
    return %c0_i32, %c0_i32_0 : i32, i32
  }
  func.func @transform_6(%arg0: i32) -> (i32, i32) {
    %c0_i32 = arith.constant 0 : i32
    %c0_i32_0 = arith.constant 0 : i32
    %c0_i32_1 = arith.constant 0 : i32
    return %c0_i32, %c0_i32_0 : i32, i32
  }
  func.func @transform_7(%arg0: i32) -> (i32, i32, i32) {
    %c0_i32 = arith.constant 0 : i32
    %c0_i32_0 = arith.constant 0 : i32
    %c0_i32_1 = arith.constant 0 : i32
    return %arg0, %c0_i32, %c0_i32_0 : i32, i32, i32
  }
  func.func @transform_8(%arg0: i32) -> (i32, i32, i32) {
    %c0_i32 = arith.constant 0 : i32
    %c0_i32_0 = arith.constant 0 : i32
    %c0_i32_1 = arith.constant 0 : i32
    return %arg0, %c0_i32, %c0_i32_0 : i32, i32, i32
  }
}

module attributes {stable_mosaic.version = 11 : i64} {
  func.func @_attn_block_kernel(%arg0: i32, %arg1: memref<1x7x128xbf16, #tpu.memory_space<vmem>>, %arg2: memref<128x384xbf16, #tpu.memory_space<vmem>>, %arg3: memref<1x384xf32, #tpu.memory_space<vmem>>, %arg4: memref<128x128xbf16, #tpu.memory_space<vmem>>, %arg5: memref<1x128xf32, #tpu.memory_space<vmem>>, %arg6: memref<1x128xf32, #tpu.memory_space<vmem>>, %arg7: memref<1x128xf32, #tpu.memory_space<vmem>>, %arg8: memref<1x1x7xf32, #tpu.memory_space<vmem>>, %arg9: memref<1x7x128xbf16, #tpu.memory_space<vmem>>) attributes {dimension_semantics = [#tpu.dimension_semantics<parallel>], iteration_bounds = array<i64: 2>, scalar_prefetch = 0 : i64, scratch_operands = 0 : i64, tpu.core_type = #tpu.core_type<tc>, window_params = [{transform_indices = @transform_0, window_bounds = array<i64: 1, 7, 128>}, {pipeline_mode = #tpu.pipeline_mode<synchronous>, transform_indices = @transform_1, window_bounds = array<i64: 128, 384>}, {pipeline_mode = #tpu.pipeline_mode<synchronous>, transform_indices = @transform_2, window_bounds = array<i64: 1, 384>}, {pipeline_mode = #tpu.pipeline_mode<synchronous>, transform_indices = @transform_3, window_bounds = array<i64: 128, 128>}, {pipeline_mode = #tpu.pipeline_mode<synchronous>, transform_indices = @transform_4, window_bounds = array<i64: 1, 128>}, {pipeline_mode = #tpu.pipeline_mode<synchronous>, transform_indices = @transform_5, window_bounds = array<i64: 1, 128>}, {pipeline_mode = #tpu.pipeline_mode<synchronous>, transform_indices = @transform_6, window_bounds = array<i64: 1, 128>}, {transform_indices = @transform_7, window_bounds = array<i64: 1, 1, 7>}, {transform_indices = @transform_8, window_bounds = array<i64: 1, 7, 128>}]} {
    %c0 = arith.constant 0 : index
    %c0_0 = arith.constant 0 : index
    %c0_1 = arith.constant 0 : index
    %0 = vector.load %arg1[%c0, %c0_0, %c0_1] : memref<1x7x128xbf16, #tpu.memory_space<vmem>>, vector<1x7x128xbf16>
    %1 = vector.shape_cast %0 : vector<1x7x128xbf16> to vector<7x128xbf16>
    %2 = arith.extf %1 : vector<7x128xbf16> to vector<7x128xf32>
    %c0_2 = arith.constant 0 : index
    %c0_3 = arith.constant 0 : index
    %3 = vector.load %arg6[%c0_2, %c0_3] : memref<1x128xf32, #tpu.memory_space<vmem>>, vector<1x128xf32>
    %c0_4 = arith.constant 0 : index
    %c0_5 = arith.constant 0 : index
    %4 = vector.load %arg7[%c0_4, %c0_5] : memref<1x128xf32, #tpu.memory_space<vmem>>, vector<1x128xf32>
    %cst = arith.constant dense<0.000000e+00> : vector<7xf32>
    %5 = vector.multi_reduction <add>, %2, %cst [1] : vector<7x128xf32> to vector<7xf32>
    %6 = vector.shape_cast %5 : vector<7xf32> to vector<7x1xf32>
    %cst_6 = arith.constant 1.280000e+02 : f32
    %7 = vector.broadcast %cst_6 : f32 to vector<7x1xf32>
    %8 = arith.divf %6, %7 : vector<7x1xf32>
    %9 = vector.broadcast %8 : vector<7x1xf32> to vector<7x128xf32>
    %10 = arith.subf %2, %9 : vector<7x128xf32>
    %11 = arith.mulf %10, %10 : vector<7x128xf32>
    %cst_7 = arith.constant dense<0.000000e+00> : vector<7xf32>
    %12 = vector.multi_reduction <add>, %11, %cst_7 [1] : vector<7x128xf32> to vector<7xf32>
    %13 = vector.shape_cast %12 : vector<7xf32> to vector<7x1xf32>
    %cst_8 = arith.constant 1.280000e+02 : f32
    %14 = vector.broadcast %cst_8 : f32 to vector<7x1xf32>
    %15 = arith.divf %13, %14 : vector<7x1xf32>
    %16 = vector.broadcast %8 : vector<7x1xf32> to vector<7x128xf32>
    %17 = arith.subf %2, %16 : vector<7x128xf32>
    %cst_9 = arith.constant 9.99999997E-7 : f32
    %18 = vector.broadcast %cst_9 : f32 to vector<7x1xf32>
    %19 = arith.addf %15, %18 : vector<7x1xf32>
    %20 = math.rsqrt %19 : vector<7x1xf32>
    %21 = vector.broadcast %20 : vector<7x1xf32> to vector<7x128xf32>
    %22 = arith.mulf %17, %21 : vector<7x128xf32>
    %23 = vector.broadcast %3 : vector<1x128xf32> to vector<7x128xf32>
    %24 = arith.mulf %22, %23 : vector<7x128xf32>
    %25 = vector.broadcast %4 : vector<1x128xf32> to vector<7x128xf32>
    %26 = arith.addf %24, %25 : vector<7x128xf32>
    %27 = arith.truncf %26 : vector<7x128xf32> to vector<7x128xbf16>
    %c0_10 = arith.constant 0 : index
    %c0_11 = arith.constant 0 : index
    %28 = vector.load %arg2[%c0_10, %c0_11] : memref<128x384xbf16, #tpu.memory_space<vmem>>, vector<128x384xbf16>
    %cst_12 = arith.constant dense<0.000000e+00> : vector<7x384xf32>
    %29 = tpu.matmul %27, %28, %cst_12 {dimension_numbers = #tpu.dot_dimension_numbers<[1], [0], [0], [1], [0, 0, 1, 1], [], []>} : vector<7x128xbf16>, vector<128x384xbf16>, vector<7x384xf32> -> vector<7x384xf32>
    %c0_13 = arith.constant 0 : index
    %c0_14 = arith.constant 0 : index
    %30 = vector.load %arg3[%c0_13, %c0_14] : memref<1x384xf32, #tpu.memory_space<vmem>>, vector<1x384xf32>
    %31 = vector.broadcast %30 : vector<1x384xf32> to vector<7x384xf32>
    %32 = arith.addf %29, %31 : vector<7x384xf32>
    %c0_15 = arith.constant 0 : index
    %c0_16 = arith.constant 0 : index
    %c0_17 = arith.constant 0 : index
    %33 = vector.load %arg8[%c0_15, %c0_16, %c0_17] : memref<1x1x7xf32, #tpu.memory_space<vmem>>, vector<1x1x7xf32>
    %34 = vector.shape_cast %33 : vector<1x1x7xf32> to vector<1x7xf32>
    %35 = tpu.iota {dimensions = array<i32: 0>} : vector<7x7xi32>
    %36 = tpu.iota {dimensions = array<i32: 1>} : vector<7x7xi32>
    %37 = arith.cmpi sgt, %36, %35 : vector<7x7xi32>
    %cst_18 = arith.constant -1.000000e+09 : f32
    %38 = vector.broadcast %cst_18 : f32 to vector<7x7xf32>
    %39 = vector.shape_cast %34 : vector<1x7xf32> to vector<1x7xf32>
    %40 = vector.broadcast %39 : vector<1x7xf32> to vector<7x7xf32>
    %41 = arith.select %37, %38, %40 : vector<7x7xi1>, vector<7x7xf32>
    %42 = vector.extract_strided_slice %32 {offsets = [0, 0], sizes = [7, 64], strides = [1, 1]} : vector<7x384xf32> to vector<7x64xf32>
    %43 = arith.truncf %42 : vector<7x64xf32> to vector<7x64xbf16>
    %44 = vector.extract_strided_slice %32 {offsets = [0, 128], sizes = [7, 64], strides = [1, 1]} : vector<7x384xf32> to vector<7x64xf32>
    %45 = arith.truncf %44 : vector<7x64xf32> to vector<7x64xbf16>
    %46 = vector.extract_strided_slice %32 {offsets = [0, 256], sizes = [7, 64], strides = [1, 1]} : vector<7x384xf32> to vector<7x64xf32>
    %47 = arith.truncf %46 : vector<7x64xf32> to vector<7x64xbf16>
    %cst_19 = arith.constant dense<0.000000e+00> : vector<7x7xf32>
    %48 = tpu.matmul %43, %45, %cst_19 {dimension_numbers = #tpu.dot_dimension_numbers<[1], [1], [0], [0], [0, 0, 1, 0], [], []>} : vector<7x64xbf16>, vector<7x64xbf16>, vector<7x7xf32> -> vector<7x7xf32>
    %49 = arith.addf %48, %41 : vector<7x7xf32>
    %cst_20 = arith.constant dense<0xFF800000> : vector<7xf32>
    %50 = vector.multi_reduction <maximumf>, %49, %cst_20 [1] : vector<7x7xf32> to vector<7xf32>
    %51 = vector.shape_cast %50 : vector<7xf32> to vector<7x1xf32>
    %52 = vector.broadcast %51 : vector<7x1xf32> to vector<7x7xf32>
    %53 = arith.subf %49, %52 : vector<7x7xf32>
    %54 = math.exp %53 : vector<7x7xf32>
    %cst_21 = arith.constant dense<0.000000e+00> : vector<7xf32>
    %55 = vector.multi_reduction <add>, %54, %cst_21 [1] : vector<7x7xf32> to vector<7xf32>
    %56 = vector.shape_cast %55 : vector<7xf32> to vector<7x1xf32>
    %57 = tpu.reciprocal %56 {approx = true} : vector<7x1xf32> -> vector<7x1xf32>
    %58 = vector.broadcast %57 : vector<7x1xf32> to vector<7x7xf32>
    %59 = arith.mulf %54, %58 : vector<7x7xf32>
    %60 = arith.truncf %59 : vector<7x7xf32> to vector<7x7xbf16>
    %cst_22 = arith.constant dense<0.000000e+00> : vector<7x64xf32>
    %61 = tpu.matmul %60, %47, %cst_22 {dimension_numbers = #tpu.dot_dimension_numbers<[1], [0], [0], [1], [0, 0, 1, 1], [], []>} : vector<7x7xbf16>, vector<7x64xbf16>, vector<7x64xf32> -> vector<7x64xf32>
    %62 = vector.extract_strided_slice %32 {offsets = [0, 64], sizes = [7, 64], strides = [1, 1]} : vector<7x384xf32> to vector<7x64xf32>
    %63 = arith.truncf %62 : vector<7x64xf32> to vector<7x64xbf16>
    %64 = vector.extract_strided_slice %32 {offsets = [0, 192], sizes = [7, 64], strides = [1, 1]} : vector<7x384xf32> to vector<7x64xf32>
    %65 = arith.truncf %64 : vector<7x64xf32> to vector<7x64xbf16>
    %66 = vector.extract_strided_slice %32 {offsets = [0, 320], sizes = [7, 64], strides = [1, 1]} : vector<7x384xf32> to vector<7x64xf32>
    %67 = arith.truncf %66 : vector<7x64xf32> to vector<7x64xbf16>
    %cst_23 = arith.constant dense<0.000000e+00> : vector<7x7xf32>
    %68 = tpu.matmul %63, %65, %cst_23 {dimension_numbers = #tpu.dot_dimension_numbers<[1], [1], [0], [0], [0, 0, 1, 0], [], []>} : vector<7x64xbf16>, vector<7x64xbf16>, vector<7x7xf32> -> vector<7x7xf32>
    %69 = arith.addf %68, %41 : vector<7x7xf32>
    %cst_24 = arith.constant dense<0xFF800000> : vector<7xf32>
    %70 = vector.multi_reduction <maximumf>, %69, %cst_24 [1] : vector<7x7xf32> to vector<7xf32>
    %71 = vector.shape_cast %70 : vector<7xf32> to vector<7x1xf32>
    %72 = vector.broadcast %71 : vector<7x1xf32> to vector<7x7xf32>
    %73 = arith.subf %69, %72 : vector<7x7xf32>
    %74 = math.exp %73 : vector<7x7xf32>
    %cst_25 = arith.constant dense<0.000000e+00> : vector<7xf32>
    %75 = vector.multi_reduction <add>, %74, %cst_25 [1] : vector<7x7xf32> to vector<7xf32>
    %76 = vector.shape_cast %75 : vector<7xf32> to vector<7x1xf32>
    %77 = tpu.reciprocal %76 {approx = true} : vector<7x1xf32> -> vector<7x1xf32>
    %78 = vector.broadcast %77 : vector<7x1xf32> to vector<7x7xf32>
    %79 = arith.mulf %74, %78 : vector<7x7xf32>
    %80 = arith.truncf %79 : vector<7x7xf32> to vector<7x7xbf16>
    %cst_26 = arith.constant dense<0.000000e+00> : vector<7x64xf32>
    %81 = tpu.matmul %80, %67, %cst_26 {dimension_numbers = #tpu.dot_dimension_numbers<[1], [0], [0], [1], [0, 0, 1, 1], [], []>} : vector<7x7xbf16>, vector<7x64xbf16>, vector<7x64xf32> -> vector<7x64xf32>
    %82 = tpu.concatenate %61, %81 in 1 : vector<7x64xf32>, vector<7x64xf32> -> vector<7x128xf32>
    %83 = arith.truncf %82 : vector<7x128xf32> to vector<7x128xbf16>
    %c0_27 = arith.constant 0 : index
    %c0_28 = arith.constant 0 : index
    %84 = vector.load %arg4[%c0_27, %c0_28] : memref<128x128xbf16, #tpu.memory_space<vmem>>, vector<128x128xbf16>
    %cst_29 = arith.constant dense<0.000000e+00> : vector<7x128xf32>
    %85 = tpu.matmul %83, %84, %cst_29 {dimension_numbers = #tpu.dot_dimension_numbers<[1], [0], [0], [1], [0, 0, 1, 1], [], []>} : vector<7x128xbf16>, vector<128x128xbf16>, vector<7x128xf32> -> vector<7x128xf32>
    %c0_30 = arith.constant 0 : index
    %c0_31 = arith.constant 0 : index
    %86 = vector.load %arg5[%c0_30, %c0_31] : memref<1x128xf32, #tpu.memory_space<vmem>>, vector<1x128xf32>
    %87 = vector.broadcast %86 : vector<1x128xf32> to vector<7x128xf32>
    %88 = arith.addf %85, %87 : vector<7x128xf32>
    %89 = arith.addf %88, %2 : vector<7x128xf32>
    %90 = arith.truncf %89 : vector<7x128xf32> to vector<7x128xbf16>
    %c0_32 = arith.constant 0 : index
    %c0_33 = arith.constant 0 : index
    %c0_34 = arith.constant 0 : index
    %91 = vector.load %arg9[%c0_32, %c0_33, %c0_34] : memref<1x7x128xbf16, #tpu.memory_space<vmem>>, vector<1x7x128xbf16>
    %92 = vector.shape_cast %91 : vector<1x7x128xbf16> to vector<7x128xbf16>
    %93 = vector.shape_cast %90 : vector<7x128xbf16> to vector<1x7x128xbf16>
    tpu.vector_store %arg9[%c0_32, %c0_33, %c0_34], %93 {strides = array<i32>} : memref<1x7x128xbf16, #tpu.memory_space<vmem>>, vector<1x7x128xbf16>,
    return
  }
  func.func @transform_0(%arg0: i32) -> (i32, i32, i32) {
    %c0_i32 = arith.constant 0 : i32
    %c0_i32_0 = arith.constant 0 : i32
    %c0_i32_1 = arith.constant 0 : i32
    return %arg0, %c0_i32, %c0_i32_0 : i32, i32, i32
  }
  func.func @transform_1(%arg0: i32) -> (i32, i32) {
    %c0_i32 = arith.constant 0 : i32
    %c0_i32_0 = arith.constant 0 : i32
    %c0_i32_1 = arith.constant 0 : i32
    return %c0_i32, %c0_i32_0 : i32, i32
  }
  func.func @transform_2(%arg0: i32) -> (i32, i32) {
    %c0_i32 = arith.constant 0 : i32
    %c0_i32_0 = arith.constant 0 : i32
    %c0_i32_1 = arith.constant 0 : i32
    return %c0_i32, %c0_i32_0 : i32, i32
  }
  func.func @transform_3(%arg0: i32) -> (i32, i32) {
    %c0_i32 = arith.constant 0 : i32
    %c0_i32_0 = arith.constant 0 : i32
    %c0_i32_1 = arith.constant 0 : i32
    return %c0_i32, %c0_i32_0 : i32, i32
  }
  func.func @transform_4(%arg0: i32) -> (i32, i32) {
    %c0_i32 = arith.constant 0 : i32
    %c0_i32_0 = arith.constant 0 : i32
    %c0_i32_1 = arith.constant 0 : i32
    return %c0_i32, %c0_i32_0 : i32, i32
  }
  func.func @transform_5(%arg0: i32) -> (i32, i32) {
    %c0_i32 = arith.constant 0 : i32
    %c0_i32_0 = arith.constant 0 : i32
    %c0_i32_1 = arith.constant 0 : i32
    return %c0_i32, %c0_i32_0 : i32, i32
  }
  func.func @transform_6(%arg0: i32) -> (i32, i32) {
    %c0_i32 = arith.constant 0 : i32
    %c0_i32_0 = arith.constant 0 : i32
    %c0_i32_1 = arith.constant 0 : i32
    return %c0_i32, %c0_i32_0 : i32, i32
  }
  func.func @transform_7(%arg0: i32) -> (i32, i32, i32) {
    %c0_i32 = arith.constant 0 : i32
    %c0_i32_0 = arith.constant 0 : i32
    %c0_i32_1 = arith.constant 0 : i32
    return %arg0, %c0_i32, %c0_i32_0 : i32, i32, i32
  }
  func.func @transform_8(%arg0: i32) -> (i32, i32, i32) {
    %c0_i32 = arith.constant 0 : i32
    %c0_i32_0 = arith.constant 0 : i32
    %c0_i32_1 = arith.constant 0 : i32
    return %arg0, %c0_i32, %c0_i32_0 : i32, i32, i32
  }
}

module attributes {stable_mosaic.version = 11 : i64} {
  func.func @_cross_block_kernel(%arg0: i32, %arg1: memref<1x7x128xbf16, #tpu.memory_space<vmem>>, %arg2: memref<1x16x128xbf16, #tpu.memory_space<vmem>>, %arg3: memref<128x128xbf16, #tpu.memory_space<vmem>>, %arg4: memref<1x128xf32, #tpu.memory_space<vmem>>, %arg5: memref<128x256xbf16, #tpu.memory_space<vmem>>, %arg6: memref<1x256xf32, #tpu.memory_space<vmem>>, %arg7: memref<128x128xbf16, #tpu.memory_space<vmem>>, %arg8: memref<1x128xf32, #tpu.memory_space<vmem>>, %arg9: memref<1x128xf32, #tpu.memory_space<vmem>>, %arg10: memref<1x128xf32, #tpu.memory_space<vmem>>, %arg11: memref<1x1x16xf32, #tpu.memory_space<vmem>>, %arg12: memref<1x7x128xbf16, #tpu.memory_space<vmem>>) attributes {dimension_semantics = [#tpu.dimension_semantics<parallel>], iteration_bounds = array<i64: 2>, scalar_prefetch = 0 : i64, scratch_operands = 0 : i64, tpu.core_type = #tpu.core_type<tc>, window_params = [{transform_indices = @transform_0, window_bounds = array<i64: 1, 7, 128>}, {transform_indices = @transform_1, window_bounds = array<i64: 1, 16, 128>}, {pipeline_mode = #tpu.pipeline_mode<synchronous>, transform_indices = @transform_2, window_bounds = array<i64: 128, 128>}, {pipeline_mode = #tpu.pipeline_mode<synchronous>, transform_indices = @transform_3, window_bounds = array<i64: 1, 128>}, {pipeline_mode = #tpu.pipeline_mode<synchronous>, transform_indices = @transform_4, window_bounds = array<i64: 128, 256>}, {pipeline_mode = #tpu.pipeline_mode<synchronous>, transform_indices = @transform_5, window_bounds = array<i64: 1, 256>}, {pipeline_mode = #tpu.pipeline_mode<synchronous>, transform_indices = @transform_6, window_bounds = array<i64: 128, 128>}, {pipeline_mode = #tpu.pipeline_mode<synchronous>, transform_indices = @transform_7, window_bounds = array<i64: 1, 128>}, {pipeline_mode = #tpu.pipeline_mode<synchronous>, transform_indices = @transform_8, window_bounds = array<i64: 1, 128>}, {pipeline_mode = #tpu.pipeline_mode<synchronous>, transform_indices = @transform_9, window_bounds = array<i64: 1, 128>}, {transform_indices = @transform_10, window_bounds = array<i64: 1, 1, 16>}, {transform_indices = @transform_11, window_bounds = array<i64: 1, 7, 128>}]} {
    %c0 = arith.constant 0 : index
    %c0_0 = arith.constant 0 : index
    %c0_1 = arith.constant 0 : index
    %0 = vector.load %arg1[%c0, %c0_0, %c0_1] : memref<1x7x128xbf16, #tpu.memory_space<vmem>>, vector<1x7x128xbf16>
    %1 = vector.shape_cast %0 : vector<1x7x128xbf16> to vector<7x128xbf16>
    %2 = arith.extf %1 : vector<7x128xbf16> to vector<7x128xf32>
    %c0_2 = arith.constant 0 : index
    %c0_3 = arith.constant 0 : index
    %c0_4 = arith.constant 0 : index
    %3 = vector.load %arg2[%c0_2, %c0_3, %c0_4] : memref<1x16x128xbf16, #tpu.memory_space<vmem>>, vector<1x16x128xbf16>
    %4 = vector.shape_cast %3 : vector<1x16x128xbf16> to vector<16x128xbf16>
    %c0_5 = arith.constant 0 : index
    %c0_6 = arith.constant 0 : index
    %5 = vector.load %arg9[%c0_5, %c0_6] : memref<1x128xf32, #tpu.memory_space<vmem>>, vector<1x128xf32>
    %c0_7 = arith.constant 0 : index
    %c0_8 = arith.constant 0 : index
    %6 = vector.load %arg10[%c0_7, %c0_8] : memref<1x128xf32, #tpu.memory_space<vmem>>, vector<1x128xf32>
    %cst = arith.constant dense<0.000000e+00> : vector<7xf32>
    %7 = vector.multi_reduction <add>, %2, %cst [1] : vector<7x128xf32> to vector<7xf32>
    %8 = vector.shape_cast %7 : vector<7xf32> to vector<7x1xf32>
    %cst_9 = arith.constant 1.280000e+02 : f32
    %9 = vector.broadcast %cst_9 : f32 to vector<7x1xf32>
    %10 = arith.divf %8, %9 : vector<7x1xf32>
    %11 = vector.broadcast %10 : vector<7x1xf32> to vector<7x128xf32>
    %12 = arith.subf %2, %11 : vector<7x128xf32>
    %13 = arith.mulf %12, %12 : vector<7x128xf32>
    %cst_10 = arith.constant dense<0.000000e+00> : vector<7xf32>
    %14 = vector.multi_reduction <add>, %13, %cst_10 [1] : vector<7x128xf32> to vector<7xf32>
    %15 = vector.shape_cast %14 : vector<7xf32> to vector<7x1xf32>
    %cst_11 = arith.constant 1.280000e+02 : f32
    %16 = vector.broadcast %cst_11 : f32 to vector<7x1xf32>
    %17 = arith.divf %15, %16 : vector<7x1xf32>
    %18 = vector.broadcast %10 : vector<7x1xf32> to vector<7x128xf32>
    %19 = arith.subf %2, %18 : vector<7x128xf32>
    %cst_12 = arith.constant 9.99999997E-7 : f32
    %20 = vector.broadcast %cst_12 : f32 to vector<7x1xf32>
    %21 = arith.addf %17, %20 : vector<7x1xf32>
    %22 = math.rsqrt %21 : vector<7x1xf32>
    %23 = vector.broadcast %22 : vector<7x1xf32> to vector<7x128xf32>
    %24 = arith.mulf %19, %23 : vector<7x128xf32>
    %25 = vector.broadcast %5 : vector<1x128xf32> to vector<7x128xf32>
    %26 = arith.mulf %24, %25 : vector<7x128xf32>
    %27 = vector.broadcast %6 : vector<1x128xf32> to vector<7x128xf32>
    %28 = arith.addf %26, %27 : vector<7x128xf32>
    %29 = arith.truncf %28 : vector<7x128xf32> to vector<7x128xbf16>
    %c0_13 = arith.constant 0 : index
    %c0_14 = arith.constant 0 : index
    %30 = vector.load %arg3[%c0_13, %c0_14] : memref<128x128xbf16, #tpu.memory_space<vmem>>, vector<128x128xbf16>
    %cst_15 = arith.constant dense<0.000000e+00> : vector<7x128xf32>
    %31 = tpu.matmul %29, %30, %cst_15 {dimension_numbers = #tpu.dot_dimension_numbers<[1], [0], [0], [1], [0, 0, 1, 1], [], []>} : vector<7x128xbf16>, vector<128x128xbf16>, vector<7x128xf32> -> vector<7x128xf32>
    %c0_16 = arith.constant 0 : index
    %c0_17 = arith.constant 0 : index
    %32 = vector.load %arg4[%c0_16, %c0_17] : memref<1x128xf32, #tpu.memory_space<vmem>>, vector<1x128xf32>
    %33 = vector.broadcast %32 : vector<1x128xf32> to vector<7x128xf32>
    %34 = arith.addf %31, %33 : vector<7x128xf32>
    %c0_18 = arith.constant 0 : index
    %c0_19 = arith.constant 0 : index
    %35 = vector.load %arg5[%c0_18, %c0_19] : memref<128x256xbf16, #tpu.memory_space<vmem>>, vector<128x256xbf16>
    %cst_20 = arith.constant dense<0.000000e+00> : vector<16x256xf32>
    %36 = tpu.matmul %4, %35, %cst_20 {dimension_numbers = #tpu.dot_dimension_numbers<[1], [0], [0], [1], [0, 0, 1, 1], [], []>} : vector<16x128xbf16>, vector<128x256xbf16>, vector<16x256xf32> -> vector<16x256xf32>
    %c0_21 = arith.constant 0 : index
    %c0_22 = arith.constant 0 : index
    %37 = vector.load %arg6[%c0_21, %c0_22] : memref<1x256xf32, #tpu.memory_space<vmem>>, vector<1x256xf32>
    %38 = vector.broadcast %37 : vector<1x256xf32> to vector<16x256xf32>
    %39 = arith.addf %36, %38 : vector<16x256xf32>
    %c0_23 = arith.constant 0 : index
    %c0_24 = arith.constant 0 : index
    %c0_25 = arith.constant 0 : index
    %40 = vector.load %arg11[%c0_23, %c0_24, %c0_25] : memref<1x1x16xf32, #tpu.memory_space<vmem>>, vector<1x1x16xf32>
    %41 = vector.shape_cast %40 : vector<1x1x16xf32> to vector<1x16xf32>
    %42 = vector.extract_strided_slice %34 {offsets = [0, 0], sizes = [7, 64], strides = [1, 1]} : vector<7x128xf32> to vector<7x64xf32>
    %43 = arith.truncf %42 : vector<7x64xf32> to vector<7x64xbf16>
    %44 = vector.extract_strided_slice %39 {offsets = [0, 0], sizes = [16, 64], strides = [1, 1]} : vector<16x256xf32> to vector<16x64xf32>
    %45 = arith.truncf %44 : vector<16x64xf32> to vector<16x64xbf16>
    %46 = vector.extract_strided_slice %39 {offsets = [0, 128], sizes = [16, 64], strides = [1, 1]} : vector<16x256xf32> to vector<16x64xf32>
    %47 = arith.truncf %46 : vector<16x64xf32> to vector<16x64xbf16>
    %cst_26 = arith.constant dense<0.000000e+00> : vector<7x16xf32>
    %48 = tpu.matmul %43, %45, %cst_26 {dimension_numbers = #tpu.dot_dimension_numbers<[1], [1], [0], [0], [0, 0, 1, 0], [], []>} : vector<7x64xbf16>, vector<16x64xbf16>, vector<7x16xf32> -> vector<7x16xf32>
    %49 = vector.broadcast %41 : vector<1x16xf32> to vector<7x16xf32>
    %50 = arith.addf %48, %49 : vector<7x16xf32>
    %cst_27 = arith.constant dense<0xFF800000> : vector<7xf32>
    %51 = vector.multi_reduction <maximumf>, %50, %cst_27 [1] : vector<7x16xf32> to vector<7xf32>
    %52 = vector.shape_cast %51 : vector<7xf32> to vector<7x1xf32>
    %53 = vector.broadcast %52 : vector<7x1xf32> to vector<7x16xf32>
    %54 = arith.subf %50, %53 : vector<7x16xf32>
    %55 = math.exp %54 : vector<7x16xf32>
    %cst_28 = arith.constant dense<0.000000e+00> : vector<7xf32>
    %56 = vector.multi_reduction <add>, %55, %cst_28 [1] : vector<7x16xf32> to vector<7xf32>
    %57 = vector.shape_cast %56 : vector<7xf32> to vector<7x1xf32>
    %58 = tpu.reciprocal %57 {approx = true} : vector<7x1xf32> -> vector<7x1xf32>
    %59 = vector.broadcast %58 : vector<7x1xf32> to vector<7x16xf32>
    %60 = arith.mulf %55, %59 : vector<7x16xf32>
    %61 = arith.truncf %60 : vector<7x16xf32> to vector<7x16xbf16>
    %cst_29 = arith.constant dense<0.000000e+00> : vector<7x64xf32>
    %62 = tpu.matmul %61, %47, %cst_29 {dimension_numbers = #tpu.dot_dimension_numbers<[1], [0], [0], [1], [0, 0, 1, 1], [], []>} : vector<7x16xbf16>, vector<16x64xbf16>, vector<7x64xf32> -> vector<7x64xf32>
    %63 = vector.extract_strided_slice %34 {offsets = [0, 64], sizes = [7, 64], strides = [1, 1]} : vector<7x128xf32> to vector<7x64xf32>
    %64 = arith.truncf %63 : vector<7x64xf32> to vector<7x64xbf16>
    %65 = vector.extract_strided_slice %39 {offsets = [0, 64], sizes = [16, 64], strides = [1, 1]} : vector<16x256xf32> to vector<16x64xf32>
    %66 = arith.truncf %65 : vector<16x64xf32> to vector<16x64xbf16>
    %67 = vector.extract_strided_slice %39 {offsets = [0, 192], sizes = [16, 64], strides = [1, 1]} : vector<16x256xf32> to vector<16x64xf32>
    %68 = arith.truncf %67 : vector<16x64xf32> to vector<16x64xbf16>
    %cst_30 = arith.constant dense<0.000000e+00> : vector<7x16xf32>
    %69 = tpu.matmul %64, %66, %cst_30 {dimension_numbers = #tpu.dot_dimension_numbers<[1], [1], [0], [0], [0, 0, 1, 0], [], []>} : vector<7x64xbf16>, vector<16x64xbf16>, vector<7x16xf32> -> vector<7x16xf32>
    %70 = vector.broadcast %41 : vector<1x16xf32> to vector<7x16xf32>
    %71 = arith.addf %69, %70 : vector<7x16xf32>
    %cst_31 = arith.constant dense<0xFF800000> : vector<7xf32>
    %72 = vector.multi_reduction <maximumf>, %71, %cst_31 [1] : vector<7x16xf32> to vector<7xf32>
    %73 = vector.shape_cast %72 : vector<7xf32> to vector<7x1xf32>
    %74 = vector.broadcast %73 : vector<7x1xf32> to vector<7x16xf32>
    %75 = arith.subf %71, %74 : vector<7x16xf32>
    %76 = math.exp %75 : vector<7x16xf32>
    %cst_32 = arith.constant dense<0.000000e+00> : vector<7xf32>
    %77 = vector.multi_reduction <add>, %76, %cst_32 [1] : vector<7x16xf32> to vector<7xf32>
    %78 = vector.shape_cast %77 : vector<7xf32> to vector<7x1xf32>
    %79 = tpu.reciprocal %78 {approx = true} : vector<7x1xf32> -> vector<7x1xf32>
    %80 = vector.broadcast %79 : vector<7x1xf32> to vector<7x16xf32>
    %81 = arith.mulf %76, %80 : vector<7x16xf32>
    %82 = arith.truncf %81 : vector<7x16xf32> to vector<7x16xbf16>
    %cst_33 = arith.constant dense<0.000000e+00> : vector<7x64xf32>
    %83 = tpu.matmul %82, %68, %cst_33 {dimension_numbers = #tpu.dot_dimension_numbers<[1], [0], [0], [1], [0, 0, 1, 1], [], []>} : vector<7x16xbf16>, vector<16x64xbf16>, vector<7x64xf32> -> vector<7x64xf32>
    %84 = tpu.concatenate %62, %83 in 1 : vector<7x64xf32>, vector<7x64xf32> -> vector<7x128xf32>
    %85 = arith.truncf %84 : vector<7x128xf32> to vector<7x128xbf16>
    %c0_34 = arith.constant 0 : index
    %c0_35 = arith.constant 0 : index
    %86 = vector.load %arg7[%c0_34, %c0_35] : memref<128x128xbf16, #tpu.memory_space<vmem>>, vector<128x128xbf16>
    %cst_36 = arith.constant dense<0.000000e+00> : vector<7x128xf32>
    %87 = tpu.matmul %85, %86, %cst_36 {dimension_numbers = #tpu.dot_dimension_numbers<[1], [0], [0], [1], [0, 0, 1, 1], [], []>} : vector<7x128xbf16>, vector<128x128xbf16>, vector<7x128xf32> -> vector<7x128xf32>
    %c0_37 = arith.constant 0 : index
    %c0_38 = arith.constant 0 : index
    %88 = vector.load %arg8[%c0_37, %c0_38] : memref<1x128xf32, #tpu.memory_space<vmem>>, vector<1x128xf32>
    %89 = vector.broadcast %88 : vector<1x128xf32> to vector<7x128xf32>
    %90 = arith.addf %87, %89 : vector<7x128xf32>
    %91 = arith.addf %90, %2 : vector<7x128xf32>
    %92 = arith.truncf %91 : vector<7x128xf32> to vector<7x128xbf16>
    %c0_39 = arith.constant 0 : index
    %c0_40 = arith.constant 0 : index
    %c0_41 = arith.constant 0 : index
    %93 = vector.load %arg12[%c0_39, %c0_40, %c0_41] : memref<1x7x128xbf16, #tpu.memory_space<vmem>>, vector<1x7x128xbf16>
    %94 = vector.shape_cast %93 : vector<1x7x128xbf16> to vector<7x128xbf16>
    %95 = vector.shape_cast %92 : vector<7x128xbf16> to vector<1x7x128xbf16>
    tpu.vector_store %arg12[%c0_39, %c0_40, %c0_41], %95 {strides = array<i32>} : memref<1x7x128xbf16, #tpu.memory_space<vmem>>, vector<1x7x128xbf16>,
    return
  }
  func.func @transform_0(%arg0: i32) -> (i32, i32, i32) {
    %c0_i32 = arith.constant 0 : i32
    %c0_i32_0 = arith.constant 0 : i32
    %c0_i32_1 = arith.constant 0 : i32
    return %arg0, %c0_i32, %c0_i32_0 : i32, i32, i32
  }
  func.func @transform_1(%arg0: i32) -> (i32, i32, i32) {
    %c0_i32 = arith.constant 0 : i32
    %c0_i32_0 = arith.constant 0 : i32
    %c0_i32_1 = arith.constant 0 : i32
    return %arg0, %c0_i32, %c0_i32_0 : i32, i32, i32
  }
  func.func @transform_2(%arg0: i32) -> (i32, i32) {
    %c0_i32 = arith.constant 0 : i32
    %c0_i32_0 = arith.constant 0 : i32
    %c0_i32_1 = arith.constant 0 : i32
    return %c0_i32, %c0_i32_0 : i32, i32
  }
  func.func @transform_3(%arg0: i32) -> (i32, i32) {
    %c0_i32 = arith.constant 0 : i32
    %c0_i32_0 = arith.constant 0 : i32
    %c0_i32_1 = arith.constant 0 : i32
    return %c0_i32, %c0_i32_0 : i32, i32
  }
  func.func @transform_4(%arg0: i32) -> (i32, i32) {
    %c0_i32 = arith.constant 0 : i32
    %c0_i32_0 = arith.constant 0 : i32
    %c0_i32_1 = arith.constant 0 : i32
    return %c0_i32, %c0_i32_0 : i32, i32
  }
  func.func @transform_5(%arg0: i32) -> (i32, i32) {
    %c0_i32 = arith.constant 0 : i32
    %c0_i32_0 = arith.constant 0 : i32
    %c0_i32_1 = arith.constant 0 : i32
    return %c0_i32, %c0_i32_0 : i32, i32
  }
  func.func @transform_6(%arg0: i32) -> (i32, i32) {
    %c0_i32 = arith.constant 0 : i32
    %c0_i32_0 = arith.constant 0 : i32
    %c0_i32_1 = arith.constant 0 : i32
    return %c0_i32, %c0_i32_0 : i32, i32
  }
  func.func @transform_7(%arg0: i32) -> (i32, i32) {
    %c0_i32 = arith.constant 0 : i32
    %c0_i32_0 = arith.constant 0 : i32
    %c0_i32_1 = arith.constant 0 : i32
    return %c0_i32, %c0_i32_0 : i32, i32
  }
  func.func @transform_8(%arg0: i32) -> (i32, i32) {
    %c0_i32 = arith.constant 0 : i32
    %c0_i32_0 = arith.constant 0 : i32
    %c0_i32_1 = arith.constant 0 : i32
    return %c0_i32, %c0_i32_0 : i32, i32
  }
  func.func @transform_9(%arg0: i32) -> (i32, i32) {
    %c0_i32 = arith.constant 0 : i32
    %c0_i32_0 = arith.constant 0 : i32
    %c0_i32_1 = arith.constant 0 : i32
    return %c0_i32, %c0_i32_0 : i32, i32
  }
  func.func @transform_10(%arg0: i32) -> (i32, i32, i32) {
    %c0_i32 = arith.constant 0 : i32
    %c0_i32_0 = arith.constant 0 : i32
    %c0_i32_1 = arith.constant 0 : i32
    return %arg0, %c0_i32, %c0_i32_0 : i32, i32, i32
  }
  func.func @transform_11(%arg0: i32) -> (i32, i32, i32) {
    %c0_i32 = arith.constant 0 : i32
    %c0_i32_0 = arith.constant 0 : i32
    %c0_i32_1 = arith.constant 0 : i32
    return %arg0, %c0_i32, %c0_i32_0 : i32, i32, i32
  }
}

module attributes {stable_mosaic.version = 11 : i64} {
  func.func @_ffn_block_kernel(%arg0: i32, %arg1: memref<1x7x128xbf16, #tpu.memory_space<vmem>>, %arg2: memref<128x256xbf16, #tpu.memory_space<vmem>>, %arg3: memref<1x256xf32, #tpu.memory_space<vmem>>, %arg4: memref<256x128xbf16, #tpu.memory_space<vmem>>, %arg5: memref<1x128xf32, #tpu.memory_space<vmem>>, %arg6: memref<1x128xf32, #tpu.memory_space<vmem>>, %arg7: memref<1x128xf32, #tpu.memory_space<vmem>>, %arg8: memref<1x7x128xbf16, #tpu.memory_space<vmem>>) attributes {dimension_semantics = [#tpu.dimension_semantics<parallel>], iteration_bounds = array<i64: 2>, scalar_prefetch = 0 : i64, scratch_operands = 0 : i64, tpu.core_type = #tpu.core_type<tc>, window_params = [{transform_indices = @transform_0, window_bounds = array<i64: 1, 7, 128>}, {pipeline_mode = #tpu.pipeline_mode<synchronous>, transform_indices = @transform_1, window_bounds = array<i64: 128, 256>}, {pipeline_mode = #tpu.pipeline_mode<synchronous>, transform_indices = @transform_2, window_bounds = array<i64: 1, 256>}, {pipeline_mode = #tpu.pipeline_mode<synchronous>, transform_indices = @transform_3, window_bounds = array<i64: 256, 128>}, {pipeline_mode = #tpu.pipeline_mode<synchronous>, transform_indices = @transform_4, window_bounds = array<i64: 1, 128>}, {pipeline_mode = #tpu.pipeline_mode<synchronous>, transform_indices = @transform_5, window_bounds = array<i64: 1, 128>}, {pipeline_mode = #tpu.pipeline_mode<synchronous>, transform_indices = @transform_6, window_bounds = array<i64: 1, 128>}, {transform_indices = @transform_7, window_bounds = array<i64: 1, 7, 128>}]} {
    %c0 = arith.constant 0 : index
    %c0_0 = arith.constant 0 : index
    %c0_1 = arith.constant 0 : index
    %0 = vector.load %arg1[%c0, %c0_0, %c0_1] : memref<1x7x128xbf16, #tpu.memory_space<vmem>>, vector<1x7x128xbf16>
    %1 = vector.shape_cast %0 : vector<1x7x128xbf16> to vector<7x128xbf16>
    %2 = arith.extf %1 : vector<7x128xbf16> to vector<7x128xf32>
    %c0_2 = arith.constant 0 : index
    %c0_3 = arith.constant 0 : index
    %3 = vector.load %arg6[%c0_2, %c0_3] : memref<1x128xf32, #tpu.memory_space<vmem>>, vector<1x128xf32>
    %c0_4 = arith.constant 0 : index
    %c0_5 = arith.constant 0 : index
    %4 = vector.load %arg7[%c0_4, %c0_5] : memref<1x128xf32, #tpu.memory_space<vmem>>, vector<1x128xf32>
    %cst = arith.constant dense<0.000000e+00> : vector<7xf32>
    %5 = vector.multi_reduction <add>, %2, %cst [1] : vector<7x128xf32> to vector<7xf32>
    %6 = vector.shape_cast %5 : vector<7xf32> to vector<7x1xf32>
    %cst_6 = arith.constant 1.280000e+02 : f32
    %7 = vector.broadcast %cst_6 : f32 to vector<7x1xf32>
    %8 = arith.divf %6, %7 : vector<7x1xf32>
    %9 = vector.broadcast %8 : vector<7x1xf32> to vector<7x128xf32>
    %10 = arith.subf %2, %9 : vector<7x128xf32>
    %11 = arith.mulf %10, %10 : vector<7x128xf32>
    %cst_7 = arith.constant dense<0.000000e+00> : vector<7xf32>
    %12 = vector.multi_reduction <add>, %11, %cst_7 [1] : vector<7x128xf32> to vector<7xf32>
    %13 = vector.shape_cast %12 : vector<7xf32> to vector<7x1xf32>
    %cst_8 = arith.constant 1.280000e+02 : f32
    %14 = vector.broadcast %cst_8 : f32 to vector<7x1xf32>
    %15 = arith.divf %13, %14 : vector<7x1xf32>
    %16 = vector.broadcast %8 : vector<7x1xf32> to vector<7x128xf32>
    %17 = arith.subf %2, %16 : vector<7x128xf32>
    %cst_9 = arith.constant 9.99999997E-7 : f32
    %18 = vector.broadcast %cst_9 : f32 to vector<7x1xf32>
    %19 = arith.addf %15, %18 : vector<7x1xf32>
    %20 = math.rsqrt %19 : vector<7x1xf32>
    %21 = vector.broadcast %20 : vector<7x1xf32> to vector<7x128xf32>
    %22 = arith.mulf %17, %21 : vector<7x128xf32>
    %23 = vector.broadcast %3 : vector<1x128xf32> to vector<7x128xf32>
    %24 = arith.mulf %22, %23 : vector<7x128xf32>
    %25 = vector.broadcast %4 : vector<1x128xf32> to vector<7x128xf32>
    %26 = arith.addf %24, %25 : vector<7x128xf32>
    %27 = arith.truncf %26 : vector<7x128xf32> to vector<7x128xbf16>
    %c0_10 = arith.constant 0 : index
    %c0_11 = arith.constant 0 : index
    %28 = vector.load %arg2[%c0_10, %c0_11] : memref<128x256xbf16, #tpu.memory_space<vmem>>, vector<128x256xbf16>
    %cst_12 = arith.constant dense<0.000000e+00> : vector<7x256xf32>
    %29 = tpu.matmul %27, %28, %cst_12 {dimension_numbers = #tpu.dot_dimension_numbers<[1], [0], [0], [1], [0, 0, 1, 1], [], []>} : vector<7x128xbf16>, vector<128x256xbf16>, vector<7x256xf32> -> vector<7x256xf32>
    %c0_13 = arith.constant 0 : index
    %c0_14 = arith.constant 0 : index
    %30 = vector.load %arg3[%c0_13, %c0_14] : memref<1x256xf32, #tpu.memory_space<vmem>>, vector<1x256xf32>
    %31 = vector.broadcast %30 : vector<1x256xf32> to vector<7x256xf32>
    %32 = arith.addf %29, %31 : vector<7x256xf32>
    %cst_15 = arith.constant 5.000000e-01 : f32
    %33 = vector.broadcast %cst_15 : f32 to vector<7x256xf32>
    %34 = arith.mulf %33, %32 : vector<7x256xf32>
    %cst_16 = arith.constant 4.471500e-02 : f32
    %35 = vector.broadcast %cst_16 : f32 to vector<7x256xf32>
    %36 = arith.mulf %35, %32 : vector<7x256xf32>
    %37 = arith.mulf %36, %32 : vector<7x256xf32>
    %38 = arith.mulf %37, %32 : vector<7x256xf32>
    %39 = arith.addf %32, %38 : vector<7x256xf32>
    %cst_17 = arith.constant 0.797884583 : f32
    %40 = vector.broadcast %cst_17 : f32 to vector<7x256xf32>
    %41 = arith.mulf %40, %39 : vector<7x256xf32>
    %42 = math.tanh %41 : vector<7x256xf32>
    %cst_18 = arith.constant 1.000000e+00 : f32
    %43 = vector.broadcast %cst_18 : f32 to vector<7x256xf32>
    %44 = arith.addf %43, %42 : vector<7x256xf32>
    %45 = arith.mulf %34, %44 : vector<7x256xf32>
    %46 = arith.truncf %45 : vector<7x256xf32> to vector<7x256xbf16>
    %c0_19 = arith.constant 0 : index
    %c0_20 = arith.constant 0 : index
    %47 = vector.load %arg4[%c0_19, %c0_20] : memref<256x128xbf16, #tpu.memory_space<vmem>>, vector<256x128xbf16>
    %cst_21 = arith.constant dense<0.000000e+00> : vector<7x128xf32>
    %48 = tpu.matmul %46, %47, %cst_21 {dimension_numbers = #tpu.dot_dimension_numbers<[1], [0], [0], [1], [0, 0, 1, 1], [], []>} : vector<7x256xbf16>, vector<256x128xbf16>, vector<7x128xf32> -> vector<7x128xf32>
    %c0_22 = arith.constant 0 : index
    %c0_23 = arith.constant 0 : index
    %49 = vector.load %arg5[%c0_22, %c0_23] : memref<1x128xf32, #tpu.memory_space<vmem>>, vector<1x128xf32>
    %50 = vector.broadcast %49 : vector<1x128xf32> to vector<7x128xf32>
    %51 = arith.addf %48, %50 : vector<7x128xf32>
    %52 = arith.addf %51, %2 : vector<7x128xf32>
    %53 = arith.truncf %52 : vector<7x128xf32> to vector<7x128xbf16>
    %c0_24 = arith.constant 0 : index
    %c0_25 = arith.constant 0 : index
    %c0_26 = arith.constant 0 : index
    %54 = vector.load %arg8[%c0_24, %c0_25, %c0_26] : memref<1x7x128xbf16, #tpu.memory_space<vmem>>, vector<1x7x128xbf16>
    %55 = vector.shape_cast %54 : vector<1x7x128xbf16> to vector<7x128xbf16>
    %56 = vector.shape_cast %53 : vector<7x128xbf16> to vector<1x7x128xbf16>
    tpu.vector_store %arg8[%c0_24, %c0_25, %c0_26], %56 {strides = array<i32>} : memref<1x7x128xbf16, #tpu.memory_space<vmem>>, vector<1x7x128xbf16>,
    return
  }
  func.func @transform_0(%arg0: i32) -> (i32, i32, i32) {
    %c0_i32 = arith.constant 0 : i32
    %c0_i32_0 = arith.constant 0 : i32
    %c0_i32_1 = arith.constant 0 : i32
    return %arg0, %c0_i32, %c0_i32_0 : i32, i32, i32
  }
  func.func @transform_1(%arg0: i32) -> (i32, i32) {
    %c0_i32 = arith.constant 0 : i32
    %c0_i32_0 = arith.constant 0 : i32
    %c0_i32_1 = arith.constant 0 : i32
    return %c0_i32, %c0_i32_0 : i32, i32
  }
  func.func @transform_2(%arg0: i32) -> (i32, i32) {
    %c0_i32 = arith.constant 0 : i32
    %c0_i32_0 = arith.constant 0 : i32
    %c0_i32_1 = arith.constant 0 : i32
    return %c0_i32, %c0_i32_0 : i32, i32
  }
  func.func @transform_3(%arg0: i32) -> (i32, i32) {
    %c0_i32 = arith.constant 0 : i32
    %c0_i32_0 = arith.constant 0 : i32
    %c0_i32_1 = arith.constant 0 : i32
    return %c0_i32, %c0_i32_0 : i32, i32
  }
  func.func @transform_4(%arg0: i32) -> (i32, i32) {
    %c0_i32 = arith.constant 0 : i32
    %c0_i32_0 = arith.constant 0 : i32
    %c0_i32_1 = arith.constant 0 : i32
    return %c0_i32, %c0_i32_0 : i32, i32
  }
  func.func @transform_5(%arg0: i32) -> (i32, i32) {
    %c0_i32 = arith.constant 0 : i32
    %c0_i32_0 = arith.constant 0 : i32
    %c0_i32_1 = arith.constant 0 : i32
    return %c0_i32, %c0_i32_0 : i32, i32
  }
  func.func @transform_6(%arg0: i32) -> (i32, i32) {
    %c0_i32 = arith.constant 0 : i32
    %c0_i32_0 = arith.constant 0 : i32
    %c0_i32_1 = arith.constant 0 : i32
    return %c0_i32, %c0_i32_0 : i32, i32
  }
  func.func @transform_7(%arg0: i32) -> (i32, i32, i32) {
    %c0_i32 = arith.constant 0 : i32
    %c0_i32_0 = arith.constant 0 : i32
    %c0_i32_1 = arith.constant 0 : i32
    return %arg0, %c0_i32, %c0_i32_0 : i32, i32, i32
  }
}

module attributes {stable_mosaic.version = 11 : i64} {
  func.func @_ln_kernel(%arg0: i32, %arg1: memref<1x7x128xbf16, #tpu.memory_space<vmem>>, %arg2: memref<1x128xf32, #tpu.memory_space<vmem>>, %arg3: memref<1x128xf32, #tpu.memory_space<vmem>>, %arg4: memref<1x7x128xf32, #tpu.memory_space<vmem>>) attributes {dimension_semantics = [#tpu.dimension_semantics<parallel>], iteration_bounds = array<i64: 2>, scalar_prefetch = 0 : i64, scratch_operands = 0 : i64, tpu.core_type = #tpu.core_type<tc>, window_params = [{transform_indices = @transform_0, window_bounds = array<i64: 1, 7, 128>}, {pipeline_mode = #tpu.pipeline_mode<synchronous>, transform_indices = @transform_1, window_bounds = array<i64: 1, 128>}, {pipeline_mode = #tpu.pipeline_mode<synchronous>, transform_indices = @transform_2, window_bounds = array<i64: 1, 128>}, {transform_indices = @transform_3, window_bounds = array<i64: 1, 7, 128>}]} {
    %c0 = arith.constant 0 : index
    %c0_0 = arith.constant 0 : index
    %c0_1 = arith.constant 0 : index
    %0 = vector.load %arg1[%c0, %c0_0, %c0_1] : memref<1x7x128xbf16, #tpu.memory_space<vmem>>, vector<1x7x128xbf16>
    %1 = vector.shape_cast %0 : vector<1x7x128xbf16> to vector<7x128xbf16>
    %2 = arith.extf %1 : vector<7x128xbf16> to vector<7x128xf32>
    %c0_2 = arith.constant 0 : index
    %c0_3 = arith.constant 0 : index
    %3 = vector.load %arg2[%c0_2, %c0_3] : memref<1x128xf32, #tpu.memory_space<vmem>>, vector<1x128xf32>
    %c0_4 = arith.constant 0 : index
    %c0_5 = arith.constant 0 : index
    %4 = vector.load %arg3[%c0_4, %c0_5] : memref<1x128xf32, #tpu.memory_space<vmem>>, vector<1x128xf32>
    %cst = arith.constant dense<0.000000e+00> : vector<7xf32>
    %5 = vector.multi_reduction <add>, %2, %cst [1] : vector<7x128xf32> to vector<7xf32>
    %6 = vector.shape_cast %5 : vector<7xf32> to vector<7x1xf32>
    %cst_6 = arith.constant 1.280000e+02 : f32
    %7 = vector.broadcast %cst_6 : f32 to vector<7x1xf32>
    %8 = arith.divf %6, %7 : vector<7x1xf32>
    %9 = vector.broadcast %8 : vector<7x1xf32> to vector<7x128xf32>
    %10 = arith.subf %2, %9 : vector<7x128xf32>
    %11 = arith.mulf %10, %10 : vector<7x128xf32>
    %cst_7 = arith.constant dense<0.000000e+00> : vector<7xf32>
    %12 = vector.multi_reduction <add>, %11, %cst_7 [1] : vector<7x128xf32> to vector<7xf32>
    %13 = vector.shape_cast %12 : vector<7xf32> to vector<7x1xf32>
    %cst_8 = arith.constant 1.280000e+02 : f32
    %14 = vector.broadcast %cst_8 : f32 to vector<7x1xf32>
    %15 = arith.divf %13, %14 : vector<7x1xf32>
    %16 = vector.broadcast %8 : vector<7x1xf32> to vector<7x128xf32>
    %17 = arith.subf %2, %16 : vector<7x128xf32>
    %cst_9 = arith.constant 9.99999997E-7 : f32
    %18 = vector.broadcast %cst_9 : f32 to vector<7x1xf32>
    %19 = arith.addf %15, %18 : vector<7x1xf32>
    %20 = math.rsqrt %19 : vector<7x1xf32>
    %21 = vector.broadcast %20 : vector<7x1xf32> to vector<7x128xf32>
    %22 = arith.mulf %17, %21 : vector<7x128xf32>
    %23 = vector.broadcast %3 : vector<1x128xf32> to vector<7x128xf32>
    %24 = arith.mulf %22, %23 : vector<7x128xf32>
    %25 = vector.broadcast %4 : vector<1x128xf32> to vector<7x128xf32>
    %26 = arith.addf %24, %25 : vector<7x128xf32>
    %c0_10 = arith.constant 0 : index
    %c0_11 = arith.constant 0 : index
    %c0_12 = arith.constant 0 : index
    %27 = vector.load %arg4[%c0_10, %c0_11, %c0_12] : memref<1x7x128xf32, #tpu.memory_space<vmem>>, vector<1x7x128xf32>
    %28 = vector.shape_cast %27 : vector<1x7x128xf32> to vector<7x128xf32>
    %29 = vector.shape_cast %26 : vector<7x128xf32> to vector<1x7x128xf32>
    tpu.vector_store %arg4[%c0_10, %c0_11, %c0_12], %29 {strides = array<i32>} : memref<1x7x128xf32, #tpu.memory_space<vmem>>, vector<1x7x128xf32>,
    return
  }
  func.func @transform_0(%arg0: i32) -> (i32, i32, i32) {
    %c0_i32 = arith.constant 0 : i32
    %c0_i32_0 = arith.constant 0 : i32
    %c0_i32_1 = arith.constant 0 : i32
    return %arg0, %c0_i32, %c0_i32_0 : i32, i32, i32
  }
  func.func @transform_1(%arg0: i32) -> (i32, i32) {
    %c0_i32 = arith.constant 0 : i32
    %c0_i32_0 = arith.constant 0 : i32
    %c0_i32_1 = arith.constant 0 : i32
    return %c0_i32, %c0_i32_0 : i32, i32
  }
  func.func @transform_2(%arg0: i32) -> (i32, i32) {
    %c0_i32 = arith.constant 0 : i32
    %c0_i32_0 = arith.constant 0 : i32
    %c0_i32_1 = arith.constant 0 : i32
    return %c0_i32, %c0_i32_0 : i32, i32
  }
  func.func @transform_3(%arg0: i32) -> (i32, i32, i32) {
    %c0_i32 = arith.constant 0 : i32
    %c0_i32_0 = arith.constant 0 : i32
    %c0_i32_1 = arith.constant 0 : i32
    return %arg0, %c0_i32, %c0_i32_0 : i32, i32, i32
  }
}

</mosaic_0001>

<llo_original>
// kernel: model_forward.12
$region0: #{model_forward.12}
  #allocation0 [shape = 'u32[]', space=smem, size = 0x4, offset = 0x4, fixed_abs, tag = 'smem constant byte address 0x4 - core index']
  #allocation1 [shape = 'u32[144,128]{1,0:T(1,128)}', space=vmem, size = 0x12000, scoped, tag = 'internal scratch']
  %s0 = inlined_call_operand.vmem [shape: f32[2,16,128], index: 0, kind: input, shape index: {}]
  %s1 = inlined_call_operand.vmem [shape: f32[1,128], index: 1, kind: input, shape index: {}]
  %s2 = inlined_call_operand.vmem [shape: f32[1,128], index: 2, kind: input, shape index: {}]
  %s3 = inlined_call_operand.vmem [shape: bf16[2,16,128], index: 3, kind: output, shape index: {}]
  %s4 = sld [smem:[#allocation0]]
  $region45: #{model_forward.12} parent=0
    _
  %s6 = ssub.s32 1, %s4
  %s7 = scalar_select 0, %s6, %s4
  loop: start=0, step=1, limit=4
  $region2: #{model_forward.12} parent=0 // loop_pre_header
    _
  $region3: #{model_forward.12} parent=0 // loop_header
    %s9 = sphi 0, %s13
    %p10 = scmp.ge.s32.totalorder %s9, 4
    %s19 = sphi 0, %s21
    %s22 = sphi 0, %s19
    %s23 = sphi 0, %s22
    %s39 = sphi 0, %s23
    %s43 = sphi 0, %s43
    %s45 = sphi 0, %s43
    %s46 = sphi 0, %s45
    %s60 = sphi 0, %s46
    %s64 = sphi 0, %s64
    %s66 = sphi 0, %s64
    %s67 = sphi 0, %s66
    %s81 = sphi 0, %s67
    %s87 = sphi 0, %s89
    %s90 = sphi 0, %s87
    %s91 = sphi 0, %s90
    %s107 = sphi 0, %s91
  $region4: #{model_forward.12} parent=0 // loop_header_branch
    %12 = sbr.rel (%p10) target = $region8
  $region5: #{model_forward.12} parent=0 // loop_body
    %s14 = ssub.s32 %s9, 1
    %s15 = ssub.s32 %s9, 2
    %s16 = sadd.s32 %s9, 1
    %s17 = ssub.s32 %s9, %s16
    %p18 = scmp.eq.s32.totalorder %s17, 0
    %s20 = sadd.s32 %s19, 1
    %s21 = scalar_select %p18, %s19, %s20
    %p24 = pneg %p18
    %p25 = scmp.eq.s32.totalorder %s9, 1
    %p26 = por %p24, %p25
    %p27 = scmp.ne.s32.totalorder %s19, %s22
    %p28 = scmp.eq.s32.totalorder %s9, 0
    %p29 = por %p27, %p28
    %p30 = scmp.ne.s32.totalorder %s19, %s22
    %p31 = scmp.eq.s32.totalorder %s14, 1
    %p32 = por %p30, %p31
    %p33 = scmp.ne.s32.totalorder %s22, %s23
    %p34 = scmp.eq.s32.totalorder %s14, 0
    %p35 = por %p33, %p34
    %p36 = scmp.ne.s32.totalorder %s22, %s23
    %p37 = scmp.eq.s32.totalorder %s15, 1
    %p38 = por %p36, %p37
    %p40 = scmp.ne.s32.totalorder %s23, %s39
    %p41 = scmp.eq.s32.totalorder %s15, 0
    %p42 = por %p40, %p41
    %s44 = sadd.s32 %s43, 1
    %p47 = scmp.eq.s32.totalorder %s9, 1
    %p48 = scmp.ne.s32.totalorder %s43, %s45
    %p49 = scmp.eq.s32.totalorder %s9, 0
    %p50 = por %p48, %p49
    %p51 = scmp.ne.s32.totalorder %s43, %s45
    %p52 = scmp.eq.s32.totalorder %s14, 1
    %p53 = por %p51, %p52
    %p54 = scmp.ne.s32.totalorder %s45, %s46
    %p55 = scmp.eq.s32.totalorder %s14, 0
    %p56 = por %p54, %p55
    %p57 = scmp.ne.s32.totalorder %s45, %s46
    %p58 = scmp.eq.s32.totalorder %s15, 1
    %p59 = por %p57, %p58
    %p61 = scmp.ne.s32.totalorder %s46, %s60
    %p62 = scmp.eq.s32.totalorder %s15, 0
    %p63 = por %p61, %p62
    %s65 = sadd.s32 %s64, 1
    %p68 = scmp.eq.s32.totalorder %s9, 1
    %p69 = scmp.ne.s32.totalorder %s64, %s66
    %p70 = scmp.eq.s32.totalorder %s9, 0
    %p71 = por %p69, %p70
    %p72 = scmp.ne.s32.totalorder %s64, %s66
    %p73 = scmp.eq.s32.totalorder %s14, 1
    %p74 = por %p72, %p73
    %p75 = scmp.ne.s32.totalorder %s66, %s67
    %p76 = scmp.eq.s32.totalorder %s14, 0
    %p77 = por %p75, %p76
    %p78 = scmp.ne.s32.totalorder %s66, %s67
    %p79 = scmp.eq.s32.totalorder %s15, 1
    %p80 = por %p78, %p79
    %p82 = scmp.ne.s32.totalorder %s67, %s81
    %p83 = scmp.eq.s32.totalorder %s15, 0
    %p84 = por %p82, %p83
    %s85 = ssub.s32 %s9, %s16
    %p86 = scmp.eq.s32.totalorder %s85, 0
    %s88 = sadd.s32 %s87, 1
    %s89 = scalar_select %p86, %s87, %s88
    %p92 = pneg %p86
    %p93 = scmp.eq.s32.totalorder %s9, 1
    %p94 = por %p92, %p93
    %p95 = scmp.ne.s32.totalorder %s87, %s90
    %p96 = scmp.eq.s32.totalorder %s9, 0
    %p97 = por %p95, %p96
    %p98 = scmp.ne.s32.totalorder %s87, %s90
    %p99 = scmp.eq.s32.totalorder %s14, 1
    %p100 = por %p98, %p99
    %p101 = scmp.ne.s32.totalorder %s90, %s91
    %p102 = scmp.eq.s32.totalorder %s14, 0
    %p103 = por %p101, %p102
    %p104 = scmp.ne.s32.totalorder %s90, %s91
    %p105 = scmp.eq.s32.totalorder %s15, 1
    %p106 = por %p104, %p105
    %p108 = scmp.ne.s32.totalorder %s91, %s107
    %p109 = scmp.eq.s32.totalorder %s15, 0
    %p110 = por %p108, %p109
    %p111 = scmp.le.s32.totalorder 1, %s9
    %p112 = scmp.lt.s32.totalorder %s9, 3
    %p113 = pnand %p111, %p112
    %p114 = pneg %p113
    // Predicated region
    $region9: #{model_forward.12} parent=5 // pred_check
      _
    $region10: #{model_forward.12} parent=5 // pred_check_branch
      %116 = sbr.rel (%p113) target = $region12
    $region11: #{model_forward.12} parent=5 // pred_region
      %s117 = ssub.s32 %s9, 1
      // Predicated region
      $region13: #{model_forward.12} parent=11 // pred_check
        %p118 = pneg %p56
      $region14: #{model_forward.12} parent=11 // pred_check_branch
        %120 = sbr.rel (%p118) target = $region16
      $region15: #{model_forward.12} parent=11 // pred_region
        _
      $region16: #{model_forward.12} parent=11 // pred_fallthru
        _
      // Predicated region
      $region17: #{model_forward.12} parent=11 // pred_check
        %p121 = pneg %p77
      $region18: #{model_forward.12} parent=11 // pred_check_branch
        %123 = sbr.rel (%p121) target = $region20
      $region19: #{model_forward.12} parent=11 // pred_region
        _
      $region20: #{model_forward.12} parent=11 // pred_fallthru
        _
    $region12: #{model_forward.12} parent=5 // pred_fallthru
      _
    %p124 = scmp.lt.s32.totalorder %s9, 2
    // Predicated region
    $region21: #{model_forward.12} parent=5 // pred_check
      %p125 = pneg %p124
    $region22: #{model_forward.12} parent=5 // pred_check_branch
      %127 = sbr.rel (%p125) target = $region24
    $region23: #{model_forward.12} parent=5 // pred_region
      // Predicated region
      $region25: #{model_forward.12} parent=23 // pred_check
        %p128 = pneg %p29
      $region26: #{model_forward.12} parent=23 // pred_check_branch
        %130 = sbr.rel (%p128) target = $region28
      $region27: #{model_forward.12} parent=23 // pred_region
        %p131 = scmp.lt.s32.totalorder %s9, 1
        %s132 = scalar_select %p131, %s9, 1
        %s133 = smul.addr %s132, 2
        %s134 = smul.addr %s133, 8
        %s135 = scalar_lea.vmem %s0, %s134
      $region28: #{model_forward.12} parent=23 // pred_fallthru
        _
    $region24: #{model_forward.12} parent=5 // pred_fallthru
      _
    %p136 = scmp.le.s32.totalorder 1, %s9
    %p137 = scmp.lt.s32.totalorder %s9, 3
    %p138 = pnand %p136, %p137
    %p139 = pneg %p138
    // Predicated region
    $region29: #{model_forward.12} parent=5 // pred_check
      _
    $region30: #{model_forward.12} parent=5 // pred_check_branch
      %141 = sbr.rel (%p138) target = $region32
    $region31: #{model_forward.12} parent=5 // pred_region
      %s142 = ssub.s32 %s9, 1
      %p143 = scmp.lt.s32.totalorder %s14, 1
      %s144 = scalar_select %p143, %s14, 1
      %s145 = smul.addr %s144, 2
      %s146 = smul.addr %s145, 8
      %s147 = scalar_lea.vmem %s0, %s146
      %p148 = pneg %p35
      %p149 = pneg %p32
      %p150 = pneg %p56
      %p151 = pneg %p53
      %p152 = pneg %p77
      %p153 = pneg %p74
      %p154 = pneg %p103
      %p155 = pneg %p100
      %p156 = scmp.lt.s32.totalorder %s14, 1
      %s157 = scalar_select %p156, %s14, 1
      %s158 = smul.addr %s157, 2
      %s159 = smul.addr %s158, 4
      %s160 = scalar_lea.vmem %s3, %s159
      %p161 = scmp.lt.s32.totalorder %s14, 1
      %s162 = scalar_select %p161, %s14, 1
      %s163 = smul.addr %s162, 2
      %s164 = smul.addr %s163, 8
      %s165 = scalar_lea.vmem %s0, %s164
      %p166 = scmp.lt.s32.totalorder %s14, 1
      %s167 = scalar_select %p166, %s14, 1
      %s168 = smul.addr %s167, 2
      %s169 = smul.addr %s168, 4
      %s170 = scalar_lea.vmem %s3, %s169
      %v171 = vld [vmem:[%s165] sm:$0xff]
      %v172 = vld [vmem:[%s165 + $0x8] sm:$0xff]
      %v173 = vld [vmem:[%s1] sm:$0x1]
      %v174 = vld [vmem:[%s2] sm:$0x1]
      %175 = vadd.xlane.f32.xlu0 %v171
      %v176 = vpop.xlane.xlu0 %175
      %177 = vadd.xlane.f32.xlu0 %v172
      %v178 = vpop.xlane.xlu0 %177
      %v179 = vrcp.pop 128.0
      %v180 = vmul.f32 %v176, %v179
      %v181 = vmul.f32 %v178, %v179
      %v182 = vsub.f32 %v171, %v180
      %v183 = vsub.f32 %v172, %v181
      %v184 = vmul.f32 %v182, %v182
      %v185 = vmul.f32 %v183, %v183
      %186 = vadd.xlane.f32.xlu0 %v184
      %v187 = vpop.xlane.xlu0 %186
      %188 = vadd.xlane.f32.xlu0 %v185
      %v189 = vpop.xlane.xlu0 %188
      %v190 = vmul.f32 %v187, %v179
      %v191 = vmul.f32 %v189, %v179
      %v192 = vadd.f32 %v190, 1e-12
      %v193 = vadd.f32 %v191, 1e-12
      %v194 = vrsqrt.pop %v192
      %v195 = vrsqrt.pop %v193
      %v196 = vmul.f32 %v182, %v194
      %v197 = vmul.f32 %v183, %v195
      %v199 = vlaneseq
      %v200 = vshrl.u32 %v199, 7
      %v201 = vsub.s32 0, %v200
      %v202 = vrot.slane %v173, %v201
      %v204 = vmul.f32 %v196, %v202
      %v205 = vmul.f32 %v197, %v202
      %v207 = vlaneseq
      %v208 = vshrl.u32 %v207, 7
      %v209 = vsub.s32 0, %v208
      %v210 = vrot.slane %v174, %v209
      %v212 = vadd.f32 %v204, %v210
      %v213 = vadd.f32 %v205, %v210
      %v214 = vpack.c.bf16 %v213, %v212
      %v216 = vunpack.c.l.b16 %v214
      %v217 = vunpack.c.h.b16 %v214
      %v218 = vpack.c.b16 %v216, %v216
      %v219 = vpack.c.b16 %v217, %v217
      %222 = vst [vmem:[%s170] sm:$0xf] %v218
      %223 = vst [vmem:[%s170 + $0x4] sm:$0xf] %v219
      %p224 = scmp.lt.s32.totalorder %s14, 1
      %s225 = scalar_select %p224, %s14, 1
      %s226 = smul.addr %s225, 2
      %s227 = smul.addr %s226, 4
      %s228 = scalar_lea.vmem %s3, %s227
      // Predicated region
      $region33: #{model_forward.12} parent=31 // pred_check
        %p229 = pneg %p100
      $region34: #{model_forward.12} parent=31 // pred_check_branch
        %231 = sbr.rel (%p229) target = $region36
      $region35: #{model_forward.12} parent=31 // pred_region
        _
      $region36: #{model_forward.12} parent=31 // pred_fallthru
        _
    $region32: #{model_forward.12} parent=5 // pred_fallthru
      _
    %p232 = scmp.le.s32.totalorder 2, %s9
    // Predicated region
    $region37: #{model_forward.12} parent=5 // pred_check
      %p233 = pneg %p232
    $region38: #{model_forward.12} parent=5 // pred_check_branch
      %235 = sbr.rel (%p233) target = $region40
    $region39: #{model_forward.12} parent=5 // pred_region
      %s236 = ssub.s32 %s9, 2
      // Predicated region
      $region41: #{model_forward.12} parent=39 // pred_check
        %p237 = pneg %p106
      $region42: #{model_forward.12} parent=39 // pred_check_branch
        %239 = sbr.rel (%p237) target = $region44
      $region43: #{model_forward.12} parent=39 // pred_region
        %p240 = scmp.lt.s32.totalorder %s15, 1
        %s241 = scalar_select %p240, %s15, 1
        %s242 = smul.addr %s241, 2
        %s243 = smul.addr %s242, 4
        %s244 = scalar_lea.vmem %s3, %s243
      $region44: #{model_forward.12} parent=39 // pred_fallthru
        _
    $region40: #{model_forward.12} parent=5 // pred_fallthru
      _
  $region6: #{model_forward.12} parent=0 // loop_footer
    %s13 = sadd.s32 1, %s9
  $region7: #{model_forward.12} parent=0 // loop_footer_branch
    %8 = sbr.rel target = $region3
  $region8: #{model_forward.12} parent=0 // loop_exit
    _

// kernel: model_forward.14
$region0: #{model_forward.14}
  #allocation0 [shape = 'u32[]', space=smem, size = 0x4, offset = 0x4, fixed_abs, tag = 'smem constant byte address 0x4 - core index']
  #allocation1 [shape = 'u32[144,128]{1,0:T(1,128)}', space=vmem, size = 0x12000, scoped, tag = 'internal scratch']
  %s0 = inlined_call_operand.vmem [shape: bf16[2,16,128], index: 0, kind: input, shape index: {}]
  %s1 = inlined_call_operand.vmem [shape: bf16[128,256], index: 1, kind: input, shape index: {}]
  %s2 = inlined_call_operand.vmem [shape: f32[1,256], index: 2, kind: input, shape index: {}]
  %s3 = inlined_call_operand.vmem [shape: bf16[256,128], index: 3, kind: input, shape index: {}]
  %s4 = inlined_call_operand.vmem [shape: f32[1,128], index: 4, kind: input, shape index: {}]
  %s5 = inlined_call_operand.vmem [shape: f32[1,128], index: 5, kind: input, shape index: {}]
  %s6 = inlined_call_operand.vmem [shape: f32[1,128], index: 6, kind: input, shape index: {}]
  %s7 = inlined_call_operand.vmem [shape: bf16[2,16,128], index: 7, kind: output, shape index: {}]
  %s8 = sld [smem:[#allocation0]]
  $region61: #{model_forward.14} parent=0
    _
  %s10 = ssub.s32 1, %s8
  %s11 = scalar_select 0, %s10, %s8
  loop: start=0, step=1, limit=4
  $region2: #{model_forward.14} parent=0 // loop_pre_header
    _
  $region3: #{model_forward.14} parent=0 // loop_header
    %s13 = sphi 0, %s17
    %p14 = scmp.ge.s32.totalorder %s13, 4
    %s23 = sphi 0, %s25
    %s26 = sphi 0, %s23
    %s27 = sphi 0, %s26
    %s43 = sphi 0, %s27
    %s47 = sphi 0, %s47
    %s49 = sphi 0, %s47
    %s50 = sphi 0, %s49
    %s64 = sphi 0, %s50
    %s68 = sphi 0, %s68
    %s70 = sphi 0, %s68
    %s71 = sphi 0, %s70
    %s85 = sphi 0, %s71
    %s89 = sphi 0, %s89
    %s91 = sphi 0, %s89
    %s92 = sphi 0, %s91
    %s106 = sphi 0, %s92
    %s110 = sphi 0, %s110
    %s112 = sphi 0, %s110
    %s113 = sphi 0, %s112
    %s127 = sphi 0, %s113
    %s131 = sphi 0, %s131
    %s133 = sphi 0, %s131
    %s134 = sphi 0, %s133
    %s148 = sphi 0, %s134
    %s152 = sphi 0, %s152
    %s154 = sphi 0, %s152
    %s155 = sphi 0, %s154
    %s169 = sphi 0, %s155
    %s175 = sphi 0, %s177
    %s178 = sphi 0, %s175
    %s179 = sphi 0, %s178
    %s195 = sphi 0, %s179
  $region4: #{model_forward.14} parent=0 // loop_header_branch
    %16 = sbr.rel (%p14) target = $region8
  $region5: #{model_forward.14} parent=0 // loop_body
    %s18 = ssub.s32 %s13, 1
    %s19 = ssub.s32 %s13, 2
    %s20 = sadd.s32 %s13, 1
    %s21 = ssub.s32 %s13, %s20
    %p22 = scmp.eq.s32.totalorder %s21, 0
    %s24 = sadd.s32 %s23, 1
    %s25 = scalar_select %p22, %s23, %s24
    %p28 = pneg %p22
    %p29 = scmp.eq.s32.totalorder %s13, 1
    %p30 = por %p28, %p29
    %p31 = scmp.ne.s32.totalorder %s23, %s26
    %p32 = scmp.eq.s32.totalorder %s13, 0
    %p33 = por %p31, %p32
    %p34 = scmp.ne.s32.totalorder %s23, %s26
    %p35 = scmp.eq.s32.totalorder %s18, 1
    %p36 = por %p34, %p35
    %p37 = scmp.ne.s32.totalorder %s26, %s27
    %p38 = scmp.eq.s32.totalorder %s18, 0
    %p39 = por %p37, %p38
    %p40 = scmp.ne.s32.totalorder %s26, %s27
    %p41 = scmp.eq.s32.totalorder %s19, 1
    %p42 = por %p40, %p41
    %p44 = scmp.ne.s32.totalorder %s27, %s43
    %p45 = scmp.eq.s32.totalorder %s19, 0
    %p46 = por %p44, %p45
    %s48 = sadd.s32 %s47, 1
    %p51 = scmp.eq.s32.totalorder %s13, 1
    %p52 = scmp.ne.s32.totalorder %s47, %s49
    %p53 = scmp.eq.s32.totalorder %s13, 0
    %p54 = por %p52, %p53
    %p55 = scmp.ne.s32.totalorder %s47, %s49
    %p56 = scmp.eq.s32.totalorder %s18, 1
    %p57 = por %p55, %p56
    %p58 = scmp.ne.s32.totalorder %s49, %s50
    %p59 = scmp.eq.s32.totalorder %s18, 0
    %p60 = por %p58, %p59
    %p61 = scmp.ne.s32.totalorder %s49, %s50
    %p62 = scmp.eq.s32.totalorder %s19, 1
    %p63 = por %p61, %p62
    %p65 = scmp.ne.s32.totalorder %s50, %s64
    %p66 = scmp.eq.s32.totalorder %s19, 0
    %p67 = por %p65, %p66
    %s69 = sadd.s32 %s68, 1
    %p72 = scmp.eq.s32.totalorder %s13, 1
    %p73 = scmp.ne.s32.totalorder %s68, %s70
    %p74 = scmp.eq.s32.totalorder %s13, 0
    %p75 = por %p73, %p74
    %p76 = scmp.ne.s32.totalorder %s68, %s70
    %p77 = scmp.eq.s32.totalorder %s18, 1
    %p78 = por %p76, %p77
    %p79 = scmp.ne.s32.totalorder %s70, %s71
    %p80 = scmp.eq.s32.totalorder %s18, 0
    %p81 = por %p79, %p80
    %p82 = scmp.ne.s32.totalorder %s70, %s71
    %p83 = scmp.eq.s32.totalorder %s19, 1
    %p84 = por %p82, %p83
    %p86 = scmp.ne.s32.totalorder %s71, %s85
    %p87 = scmp.eq.s32.totalorder %s19, 0
    %p88 = por %p86, %p87
    %s90 = sadd.s32 %s89, 1
    %p93 = scmp.eq.s32.totalorder %s13, 1
    %p94 = scmp.ne.s32.totalorder %s89, %s91
    %p95 = scmp.eq.s32.totalorder %s13, 0
    %p96 = por %p94, %p95
    %p97 = scmp.ne.s32.totalorder %s89, %s91
    %p98 = scmp.eq.s32.totalorder %s18, 1
    %p99 = por %p97, %p98
    %p100 = scmp.ne.s32.totalorder %s91, %s92
    %p101 = scmp.eq.s32.totalorder %s18, 0
    %p102 = por %p100, %p101
    %p103 = scmp.ne.s32.totalorder %s91, %s92
    %p104 = scmp.eq.s32.totalorder %s19, 1
    %p105 = por %p103, %p104
    %p107 = scmp.ne.s32.totalorder %s92, %s106
    %p108 = scmp.eq.s32.totalorder %s19, 0
    %p109 = por %p107, %p108
    %s111 = sadd.s32 %s110, 1
    %p114 = scmp.eq.s32.totalorder %s13, 1
    %p115 = scmp.ne.s32.totalorder %s110, %s112
    %p116 = scmp.eq.s32.totalorder %s13, 0
    %p117 = por %p115, %p116
    %p118 = scmp.ne.s32.totalorder %s110, %s112
    %p119 = scmp.eq.s32.totalorder %s18, 1
    %p120 = por %p118, %p119
    %p121 = scmp.ne.s32.totalorder %s112, %s113
    %p122 = scmp.eq.s32.totalorder %s18, 0
    %p123 = por %p121, %p122
    %p124 = scmp.ne.s32.totalorder %s112, %s113
    %p125 = scmp.eq.s32.totalorder %s19, 1
    %p126 = por %p124, %p125
    %p128 = scmp.ne.s32.totalorder %s113, %s127
    %p129 = scmp.eq.s32.totalorder %s19, 0
    %p130 = por %p128, %p129
    %s132 = sadd.s32 %s131, 1
    %p135 = scmp.eq.s32.totalorder %s13, 1
    %p136 = scmp.ne.s32.totalorder %s131, %s133
    %p137 = scmp.eq.s32.totalorder %s13, 0
    %p138 = por %p136, %p137
    %p139 = scmp.ne.s32.totalorder %s131, %s133
    %p140 = scmp.eq.s32.totalorder %s18, 1
    %p141 = por %p139, %p140
    %p142 = scmp.ne.s32.totalorder %s133, %s134
    %p143 = scmp.eq.s32.totalorder %s18, 0
    %p144 = por %p142, %p143
    %p145 = scmp.ne.s32.totalorder %s133, %s134
    %p146 = scmp.eq.s32.totalorder %s19, 1
    %p147 = por %p145, %p146
    %p149 = scmp.ne.s32.totalorder %s134, %s148
    %p150 = scmp.eq.s32.totalorder %s19, 0
    %p151 = por %p149, %p150
    %s153 = sadd.s32 %s152, 1
    %p156 = scmp.eq.s32.totalorder %s13, 1
    %p157 = scmp.ne.s32.totalorder %s152, %s154
    %p158 = scmp.eq.s32.totalorder %s13, 0
    %p159 = por %p157, %p158
    %p160 = scmp.ne.s32.totalorder %s152, %s154
    %p161 = scmp.eq.s32.totalorder %s18, 1
    %p162 = por %p160, %p161
    %p163 = scmp.ne.s32.totalorder %s154, %s155
    %p164 = scmp.eq.s32.totalorder %s18, 0
    %p165 = por %p163, %p164
    %p166 = scmp.ne.s32.totalorder %s154, %s155
    %p167 = scmp.eq.s32.totalorder %s19, 1
    %p168 = por %p166, %p167
    %p170 = scmp.ne.s32.totalorder %s155, %s169
    %p171 = scmp.eq.s32.totalorder %s19, 0
    %p172 = por %p170, %p171
    %s173 = ssub.s32 %s13, %s20
    %p174 = scmp.eq.s32.totalorder %s173, 0
    %s176 = sadd.s32 %s175, 1
    %s177 = scalar_select %p174, %s175, %s176
    %p180 = pneg %p174
    %p181 = scmp.eq.s32.totalorder %s13, 1
    %p182 = por %p180, %p181
    %p183 = scmp.ne.s32.totalorder %s175, %s178
    %p184 = scmp.eq.s32.totalorder %s13, 0
    %p185 = por %p183, %p184
    %p186 = scmp.ne.s32.totalorder %s175, %s178
    %p187 = scmp.eq.s32.totalorder %s18, 1
    %p188 = por %p186, %p187
    %p189 = scmp.ne.s32.totalorder %s178, %s179
    %p190 = scmp.eq.s32.totalorder %s18, 0
    %p191 = por %p189, %p190
    %p192 = scmp.ne.s32.totalorder %s178, %s179
    %p193 = scmp.eq.s32.totalorder %s19, 1
    %p194 = por %p192, %p193
    %p196 = scmp.ne.s32.totalorder %s179, %s195
    %p197 = scmp.eq.s32.totalorder %s19, 0
    %p198 = por %p196, %p197
    %p199 = scmp.le.s32.totalorder 1, %s13
    %p200 = scmp.lt.s32.totalorder %s13, 3
    %p201 = pnand %p199, %p200
    %p202 = pneg %p201
    // Predicated region
    $region9: #{model_forward.14} parent=5 // pred_check
      _
    $region10: #{model_forward.14} parent=5 // pred_check_branch
      %204 = sbr.rel (%p201) target = $region12
    $region11: #{model_forward.14} parent=5 // pred_region
      %s205 = ssub.s32 %s13, 1
      // Predicated region
      $region13: #{model_forward.14} parent=11 // pred_check
        %p206 = pneg %p60
      $region14: #{model_forward.14} parent=11 // pred_check_branch
        %208 = sbr.rel (%p206) target = $region16
      $region15: #{model_forward.14} parent=11 // pred_region
        _
      $region16: #{model_forward.14} parent=11 // pred_fallthru
        _
      // Predicated region
      $region17: #{model_forward.14} parent=11 // pred_check
        %p209 = pneg %p81
      $region18: #{model_forward.14} parent=11 // pred_check_branch
        %211 = sbr.rel (%p209) target = $region20
      $region19: #{model_forward.14} parent=11 // pred_region
        _
      $region20: #{model_forward.14} parent=11 // pred_fallthru
        _
      // Predicated region
      $region21: #{model_forward.14} parent=11 // pred_check
        %p212 = pneg %p102
      $region22: #{model_forward.14} parent=11 // pred_check_branch
        %214 = sbr.rel (%p212) target = $region24
      $region23: #{model_forward.14} parent=11 // pred_region
        _
      $region24: #{model_forward.14} parent=11 // pred_fallthru
        _
      // Predicated region
      $region25: #{model_forward.14} parent=11 // pred_check
        %p215 = pneg %p123
      $region26: #{model_forward.14} parent=11 // pred_check_branch
        %217 = sbr.rel (%p215) target = $region28
      $region27: #{model_forward.14} parent=11 // pred_region
        _
      $region28: #{model_forward.14} parent=11 // pred_fallthru
        _
      // Predicated region
      $region29: #{model_forward.14} parent=11 // pred_check
        %p218 = pneg %p144
      $region30: #{model_forward.14} parent=11 // pred_check_branch
        %220 = sbr.rel (%p218) target = $region32
      $region31: #{model_forward.14} parent=11 // pred_region
        _
      $region32: #{model_forward.14} parent=11 // pred_fallthru
        _
      // Predicated region
      $region33: #{model_forward.14} parent=11 // pred_check
        %p221 = pneg %p165
      $region34: #{model_forward.14} parent=11 // pred_check_branch
        %223 = sbr.rel (%p221) target = $region36
      $region35: #{model_forward.14} parent=11 // pred_region
        _
      $region36: #{model_forward.14} parent=11 // pred_fallthru
        _
    $region12: #{model_forward.14} parent=5 // pred_fallthru
      _
    %p224 = scmp.lt.s32.totalorder %s13, 2
    // Predicated region
    $region37: #{model_forward.14} parent=5 // pred_check
      %p225 = pneg %p224
    $region38: #{model_forward.14} parent=5 // pred_check_branch
      %227 = sbr.rel (%p225) target = $region40
    $region39: #{model_forward.14} parent=5 // pred_region
      // Predicated region
      $region41: #{model_forward.14} parent=39 // pred_check
        %p228 = pneg %p33
      $region42: #{model_forward.14} parent=39 // pred_check_branch
        %230 = sbr.rel (%p228) target = $region44
      $region43: #{model_forward.14} parent=39 // pred_region
        %p231 = scmp.lt.s32.totalorder %s13, 1
        %s232 = scalar_select %p231, %s13, 1
        %s233 = smul.addr %s232, 2
        %s234 = smul.addr %s233, 4
        %s235 = scalar_lea.vmem %s0, %s234
      $region44: #{model_forward.14} parent=39 // pred_fallthru
        _
    $region40: #{model_forward.14} parent=5 // pred_fallthru
      _
    %p236 = scmp.le.s32.totalorder 1, %s13
    %p237 = scmp.lt.s32.totalorder %s13, 3
    %p238 = pnand %p236, %p237
    %p239 = pneg %p238
    // Predicated region
    $region45: #{model_forward.14} parent=5 // pred_check
      _
    $region46: #{model_forward.14} parent=5 // pred_check_branch
      %241 = sbr.rel (%p238) target = $region48
    $region47: #{model_forward.14} parent=5 // pred_region
      %s242 = ssub.s32 %s13, 1
      %p243 = scmp.lt.s32.totalorder %s18, 1
      %s244 = scalar_select %p243, %s18, 1
      %s245 = smul.addr %s244, 2
      %s246 = smul.addr %s245, 4
      %s247 = scalar_lea.vmem %s0, %s246
      %p248 = pneg %p39
      %p249 = pneg %p36
      %p250 = pneg %p60
      %p251 = pneg %p57
      %p252 = pneg %p81
      %p253 = pneg %p78
      %p254 = pneg %p102
      %p255 = pneg %p99
      %p256 = pneg %p123
      %p257 = pneg %p120
      %p258 = pneg %p144
      %p259 = pneg %p141
      %p260 = pneg %p165
      %p261 = pneg %p162
      %p262 = pneg %p191
      %p263 = pneg %p188
      %p264 = scmp.lt.s32.totalorder %s18, 1
      %s265 = scalar_select %p264, %s18, 1
      %s266 = smul.addr %s265, 2
      %s267 = smul.addr %s266, 4
      %s268 = scalar_lea.vmem %s7, %s267
      %p269 = scmp.lt.s32.totalorder %s18, 1
      %s270 = scalar_select %p269, %s18, 1
      %s271 = smul.addr %s270, 2
      %s272 = smul.addr %s271, 4
      %s273 = scalar_lea.vmem %s0, %s272
      %p274 = scmp.lt.s32.totalorder %s18, 1
      %s275 = scalar_select %p274, %s18, 1
      %s276 = smul.addr %s275, 2
      %s277 = smul.addr %s276, 4
      %s278 = scalar_lea.vmem %s7, %s277
      %v280 = vld [vmem:[%s273] sm:$0xf]
      %v281 = vld [vmem:[%s273 + $0x4] sm:$0xf]
      %v282 = vunpack.c.l.bf16 %v280
      %v283 = vunpack.c.l.bf16 %v281
      %v284 = vld [vmem:[%s1] sm:$0xff]
      %v285 = vld [vmem:[%s1 + $0x8] sm:$0xff]
      %v286 = vld [vmem:[%s1 + $0x10] sm:$0xff]
      %v287 = vld [vmem:[%s1 + $0x18] sm:$0xff]
      %v288 = vld [vmem:[%s1 + $0x20] sm:$0xff]
      %v289 = vld [vmem:[%s1 + $0x28] sm:$0xff]
      %v290 = vld [vmem:[%s1 + $0x30] sm:$0xff]
      %v291 = vld [vmem:[%s1 + $0x38] sm:$0xff]
      %v292 = vld [vmem:[%s1 + $0x40] sm:$0xff]
      %v293 = vld [vmem:[%s1 + $0x48] sm:$0xff]
      %v294 = vld [vmem:[%s1 + $0x50] sm:$0xff]
      %v295 = vld [vmem:[%s1 + $0x58] sm:$0xff]
      %v296 = vld [vmem:[%s1 + $0x60] sm:$0xff]
      %v297 = vld [vmem:[%s1 + $0x68] sm:$0xff]
      %v298 = vld [vmem:[%s1 + $0x70] sm:$0xff]
      %v299 = vld [vmem:[%s1 + $0x78] sm:$0xff]
      %v300 = vld [vmem:[%s2] sm:$0x3]
      %v302 = vlaneseq
      %v303 = vshrl.u32 %v302, 7
      %v304 = vsub.s32 0, %v303
      %v305 = vrot.slane %v300, %v304
      %v306 = vlaneseq
      %v307 = vshrl.u32 %v306, 7
      %v308 = vsub.s32 1, %v307
      %v309 = vrot.slane %v300, %v308
      %v314 = vunpack.c.l.b16 %v280
      %v315 = vunpack.c.l.b16 %v281
      %v316 = vpack.c.b16 %v315, %v314
      %v334 = vunpack.c.l.b16 %v284
      %v335 = vunpack.c.h.b16 %v284
      %v336 = vunpack.c.l.b16 %v285
      %v337 = vunpack.c.h.b16 %v285
      %v338 = vunpack.c.l.b16 %v286
      %v339 = vunpack.c.h.b16 %v286
      %v340 = vunpack.c.l.b16 %v287
      %v341 = vunpack.c.h.b16 %v287
      %v342 = vunpack.c.l.b16 %v288
      %v343 = vunpack.c.h.b16 %v288
      %v344 = vunpack.c.l.b16 %v289
      %v345 = vunpack.c.h.b16 %v289
      %v346 = vunpack.c.l.b16 %v290
      %v347 = vunpack.c.h.b16 %v290
      %v348 = vunpack.c.l.b16 %v291
      %v349 = vunpack.c.h.b16 %v291
      %v350 = vunpack.c.l.b16 %v292
      %v351 = vunpack.c.h.b16 %v292
      %v352 = vunpack.c.l.b16 %v293
      %v353 = vunpack.c.h.b16 %v293
      %v354 = vunpack.c.l.b16 %v294
      %v355 = vunpack.c.h.b16 %v294
      %v356 = vunpack.c.l.b16 %v295
      %v357 = vunpack.c.h.b16 %v295
      %v358 = vunpack.c.l.b16 %v296
      %v359 = vunpack.c.h.b16 %v296
      %v360 = vunpack.c.l.b16 %v297
      %v361 = vunpack.c.h.b16 %v297
      %v362 = vunpack.c.l.b16 %v298
      %v363 = vunpack.c.h.b16 %v298
      %v364 = vunpack.c.l.b16 %v299
      %v365 = vunpack.c.h.b16 %v299
      %v366 = vpack.c.b16 %v336, %v334
      %v367 = vpack.c.b16 %v337, %v335
      %v368 = vpack.c.b16 %v340, %v338
      %v369 = vpack.c.b16 %v341, %v339
      %v370 = vpack.c.b16 %v344, %v342
      %v371 = vpack.c.b16 %v345, %v343
      %v372 = vpack.c.b16 %v348, %v346
      %v373 = vpack.c.b16 %v349, %v347
      %v374 = vpack.c.b16 %v352, %v350
      %v375 = vpack.c.b16 %v353, %v351
      %v376 = vpack.c.b16 %v356, %v354
      %v377 = vpack.c.b16 %v357, %v355
      %v378 = vpack.c.b16 %v360, %v358
      %v379 = vpack.c.b16 %v361, %v359
      %v380 = vpack.c.b16 %v364, %v362
      %v381 = vpack.c.b16 %v365, %v363
      %398 = vmatprep.subr.bf16.mxu0 %v367
      %399 = vmatpush1.bf16.msra.mxu0 %v366
      %400 = vmatprep.subr.bf16.mxu0 %v369
      %401 = vmatpush1.bf16.msra.mxu0 %v368
      %402 = vmatprep.subr.bf16.mxu0 %v371
      %403 = vmatpush1.bf16.msra.mxu0 %v370
      %404 = vmatprep.subr.bf16.mxu0 %v373
      %405 = vmatpush1.bf16.msra.mxu0 %v372
      %406 = vmatprep.subr.bf16.mxu0 %v375
      %407 = vmatpush1.bf16.msra.mxu0 %v374
      %408 = vmatprep.subr.bf16.mxu0 %v377
      %409 = vmatpush1.bf16.msra.mxu0 %v376
      %410 = vmatprep.subr.bf16.mxu0 %v379
      %411 = vmatpush1.bf16.msra.mxu0 %v378
      %412 = vmatprep.subr.bf16.mxu0 %v381
      %413 = vmatpush1.bf16.msra.mxu0 %v380
      %414 = vmatprep.subr.bf16.mxu0 0
      %415 = vmatpush1.bf16.msra.mxu0 0
      %416 = vmatprep.subr.bf16.mxu0 0
      %417 = vmatpush1.bf16.msra.mxu0 0
      %418 = vmatprep.subr.bf16.mxu0 0
      %419 = vmatpush1.bf16.msra.mxu0 0
      %420 = vmatprep.subr.bf16.mxu0 0
      %421 = vmatpush1.bf16.msra.mxu0 0
      %422 = vmatprep.subr.bf16.mxu0 0
      %423 = vmatpush1.bf16.msra.mxu0 0
      %424 = vmatprep.subr.bf16.mxu0 0
      %425 = vmatpush1.bf16.msra.mxu0 0
      %426 = vmatprep.subr.bf16.mxu0 0
      %427 = vmatpush1.bf16.msra.mxu0 0
      %428 = vmatprep.subr.bf16.mxu0 0
      %429 = vmatpush1.bf16.msra.mxu0 0
      %430 = vmatprep.mubr.bf16.mxu0 0
      %431 = vmatmul.mubr.bf16.gmra.mrb[0].mxu0 %v316
      %v432 = vpop.f32.mrb[0].mxu0
      %v433 = vadd.f32 %v305, %v432
      %v434 = vpop.f32.mrb[0].mxu0
      %v435 = vadd.f32 %v309, %v434
      %v436 = vpop.f32.mrb[0].mxu0
      %v437 = vadd.f32 %v305, %v436
      %v438 = vpop.f32.mrb[0].mxu0
      %v439 = vadd.f32 %v309, %v438
      %440 = vdwg.mxu0
      %v441 = vmul.f32 %v433, 0.5
      %v442 = vmul.f32 %v435, 0.5
      %v443 = vmul.f32 %v437, 0.5
      %v444 = vmul.f32 %v439, 0.5
      %v445 = vmul.f32 %v433, 0.044715
      %v446 = vmul.f32 %v435, 0.044715
      %v447 = vmul.f32 %v437, 0.044715
      %v448 = vmul.f32 %v439, 0.044715
      %v449 = vmul.f32 %v445, %v433
      %v450 = vmul.f32 %v446, %v435
      %v451 = vmul.f32 %v447, %v437
      %v452 = vmul.f32 %v448, %v439
      %v453 = vmul.f32 %v449, %v433
      %v454 = vmul.f32 %v450, %v435
      %v455 = vmul.f32 %v451, %v437
      %v456 = vmul.f32 %v452, %v439
      %v457 = vadd.f32 %v433, %v453
      %v458 = vadd.f32 %v435, %v454
      %v459 = vadd.f32 %v437, %v455
      %v460 = vadd.f32 %v439, %v456
      %v461 = vmul.f32 %v457, 0.7978846
      %v462 = vmul.f32 %v458, 0.7978846
      %v463 = vmul.f32 %v459, 0.7978846
      %v464 = vmul.f32 %v460, 0.7978846
      %v465 = vtanh.pop %v461
      %v466 = vtanh.pop %v462
      %v467 = vtanh.pop %v463
      %v468 = vtanh.pop %v464
      %v469 = vadd.f32 %v465, 1.0
      %v470 = vadd.f32 %v466, 1.0
      %v471 = vadd.f32 %v467, 1.0
      %v472 = vadd.f32 %v468, 1.0
      %v473 = vmul.f32 %v441, %v469
      %v474 = vmul.f32 %v442, %v470
      %v475 = vmul.f32 %v443, %v471
      %v476 = vmul.f32 %v444, %v472
      %v477 = vpack.c.bf16 %v475, %v473
      %v478 = vpack.c.bf16 %v476, %v474
      %v479 = vld [vmem:[%s3] sm:$0xf]
      %v480 = vld [vmem:[%s3 + $0x4] sm:$0xf]
      %v481 = vld [vmem:[%s3 + $0x8] sm:$0xf]
      %v482 = vld [vmem:[%s3 + $0xc] sm:$0xf]
      %v483 = vld [vmem:[%s3 + $0x10] sm:$0xf]
      %v484 = vld [vmem:[%s3 + $0x14] sm:$0xf]
      %v485 = vld [vmem:[%s3 + $0x18] sm:$0xf]
      %v486 = vld [vmem:[%s3 + $0x1c] sm:$0xf]
      %v487 = vld [vmem:[%s3 + $0x20] sm:$0xf]
      %v488 = vld [vmem:[%s3 + $0x24] sm:$0xf]
      %v489 = vld [vmem:[%s3 + $0x28] sm:$0xf]
      %v490 = vld [vmem:[%s3 + $0x2c] sm:$0xf]
      %v491 = vld [vmem:[%s3 + $0x30] sm:$0xf]
      %v492 = vld [vmem:[%s3 + $0x34] sm:$0xf]
      %v493 = vld [vmem:[%s3 + $0x38] sm:$0xf]
      %v494 = vld [vmem:[%s3 + $0x3c] sm:$0xf]
      %v495 = vld [vmem:[%s3 + $0x40] sm:$0xf]
      %v496 = vld [vmem:[%s3 + $0x44] sm:$0xf]
      %v497 = vld [vmem:[%s3 + $0x48] sm:$0xf]
      %v498 = vld [vmem:[%s3 + $0x4c] sm:$0xf]
      %v499 = vld [vmem:[%s3 + $0x50] sm:$0xf]
      %v500 = vld [vmem:[%s3 + $0x54] sm:$0xf]
      %v501 = vld [vmem:[%s3 + $0x58] sm:$0xf]
      %v502 = vld [vmem:[%s3 + $0x5c] sm:$0xf]
      %v503 = vld [vmem:[%s3 + $0x60] sm:$0xf]
      %v504 = vld [vmem:[%s3 + $0x64] sm:$0xf]
      %v505 = vld [vmem:[%s3 + $0x68] sm:$0xf]
      %v506 = vld [vmem:[%s3 + $0x6c] sm:$0xf]
      %v507 = vld [vmem:[%s3 + $0x70] sm:$0xf]
      %v508 = vld [vmem:[%s3 + $0x74] sm:$0xf]
      %v509 = vld [vmem:[%s3 + $0x78] sm:$0xf]
      %v510 = vld [vmem:[%s3 + $0x7c] sm:$0xf]
      %v511 = vld [vmem:[%s4] sm:$0x1]
      %v513 = vlaneseq
      %v514 = vshrl.u32 %v513, 7
      %v515 = vsub.s32 0, %v514
      %v516 = vrot.slane %v511, %v515
      %v550 = vunpack.c.l.b16 %v479
      %v551 = vunpack.c.l.b16 %v480
      %v552 = vunpack.c.l.b16 %v481
      %v553 = vunpack.c.l.b16 %v482
      %v554 = vunpack.c.l.b16 %v483
      %v555 = vunpack.c.l.b16 %v484
      %v556 = vunpack.c.l.b16 %v485
      %v557 = vunpack.c.l.b16 %v486
      %v558 = vunpack.c.l.b16 %v487
      %v559 = vunpack.c.l.b16 %v488
      %v560 = vunpack.c.l.b16 %v489
      %v561 = vunpack.c.l.b16 %v490
      %v562 = vunpack.c.l.b16 %v491
      %v563 = vunpack.c.l.b16 %v492
      %v564 = vunpack.c.l.b16 %v493
      %v565 = vunpack.c.l.b16 %v494
      %v566 = vunpack.c.l.b16 %v495
      %v567 = vunpack.c.l.b16 %v496
      %v568 = vunpack.c.l.b16 %v497
      %v569 = vunpack.c.l.b16 %v498
      %v570 = vunpack.c.l.b16 %v499
      %v571 = vunpack.c.l.b16 %v500
      %v572 = vunpack.c.l.b16 %v501
      %v573 = vunpack.c.l.b16 %v502
      %v574 = vunpack.c.l.b16 %v503
      %v575 = vunpack.c.l.b16 %v504
      %v576 = vunpack.c.l.b16 %v505
      %v577 = vunpack.c.l.b16 %v506
      %v578 = vunpack.c.l.b16 %v507
      %v579 = vunpack.c.l.b16 %v508
      %v580 = vunpack.c.l.b16 %v509
      %v581 = vunpack.c.l.b16 %v510
      %v582 = vpack.c.b16 %v551, %v550
      %v583 = vpack.c.b16 %v553, %v552
      %v584 = vpack.c.b16 %v555, %v554
      %v585 = vpack.c.b16 %v557, %v556
      %v586 = vpack.c.b16 %v559, %v558
      %v587 = vpack.c.b16 %v561, %v560
      %v588 = vpack.c.b16 %v563, %v562
      %v589 = vpack.c.b16 %v565, %v564
      %v590 = vpack.c.b16 %v567, %v566
      %v591 = vpack.c.b16 %v569, %v568
      %v592 = vpack.c.b16 %v571, %v570
      %v593 = vpack.c.b16 %v573, %v572
      %v594 = vpack.c.b16 %v575, %v574
      %v595 = vpack.c.b16 %v577, %v576
      %v596 = vpack.c.b16 %v579, %v578
      %v597 = vpack.c.b16 %v581, %v580
      %614 = vmatprep.subr.bf16.mxu0 0
      %615 = vmatpush1.bf16.msra.mxu0 %v582
      %616 = vmatprep.subr.bf16.mxu0 0
      %617 = vmatpush1.bf16.msra.mxu0 %v583
      %618 = vmatprep.subr.bf16.mxu0 0
      %619 = vmatpush1.bf16.msra.mxu0 %v584
      %620 = vmatprep.subr.bf16.mxu0 0
      %621 = vmatpush1.bf16.msra.mxu0 %v585
      %622 = vmatprep.subr.bf16.mxu0 0
      %623 = vmatpush1.bf16.msra.mxu0 %v586
      %624 = vmatprep.subr.bf16.mxu0 0
      %625 = vmatpush1.bf16.msra.mxu0 %v587
      %626 = vmatprep.subr.bf16.mxu0 0
      %627 = vmatpush1.bf16.msra.mxu0 %v588
      %628 = vmatprep.subr.bf16.mxu0 0
      %629 = vmatpush1.bf16.msra.mxu0 %v589
      %630 = vmatprep.subr.bf16.mxu0 0
      %631 = vmatpush1.bf16.msra.mxu0 %v590
      %632 = vmatprep.subr.bf16.mxu0 0
      %633 = vmatpush1.bf16.msra.mxu0 %v591
      %634 = vmatprep.subr.bf16.mxu0 0
      %635 = vmatpush1.bf16.msra.mxu0 %v592
      %636 = vmatprep.subr.bf16.mxu0 0
      %637 = vmatpush1.bf16.msra.mxu0 %v593
      %638 = vmatprep.subr.bf16.mxu0 0
      %639 = vmatpush1.bf16.msra.mxu0 %v594
      %640 = vmatprep.subr.bf16.mxu0 0
      %641 = vmatpush1.bf16.msra.mxu0 %v595
      %642 = vmatprep.subr.bf16.mxu0 0
      %643 = vmatpush1.bf16.msra.mxu0 %v596
      %644 = vmatprep.subr.bf16.mxu0 0
      %645 = vmatpush1.bf16.msra.mxu0 %v597
      %646 = vmatprep.mubr.bf16.mxu0 %v478
      %647 = vmatmul.mubr.bf16.gmra.mrb[0].mxu0 %v477
      %v648 = vpop.f32.mrb[0].mxu0
      %v649 = vadd.f32 %v516, %v648
      %v650 = vpop.f32.mrb[0].mxu0
      %v651 = vpop.f32.mrb[0].mxu0
      %v652 = vadd.f32 %v516, %v651
      %v653 = vpop.f32.mrb[0].mxu0
      %654 = vdwg.mxu0
      %v655 = vadd.f32 %v649, %v282
      %v656 = vadd.f32 %v652, %v283
      %v657 = vld [vmem:[%s5] sm:$0x1]
      %v658 = vld [vmem:[%s6] sm:$0x1]
      %659 = vadd.xlane.f32.xlu0 %v655
      %v660 = vpop.xlane.xlu0 %659
      %661 = vadd.xlane.f32.xlu0 %v656
      %v662 = vpop.xlane.xlu0 %661
      %v663 = vrcp.pop 128.0
      %v664 = vmul.f32 %v660, %v663
      %v665 = vmul.f32 %v662, %v663
      %v666 = vsub.f32 %v655, %v664
      %v667 = vsub.f32 %v656, %v665
      %v668 = vmul.f32 %v666, %v666
      %v669 = vmul.f32 %v667, %v667
      %670 = vadd.xlane.f32.xlu0 %v668
      %v671 = vpop.xlane.xlu0 %670
      %672 = vadd.xlane.f32.xlu0 %v669
      %v673 = vpop.xlane.xlu0 %672
      %v674 = vmul.f32 %v671, %v663
      %v675 = vmul.f32 %v673, %v663
      %v676 = vadd.f32 %v674, 1e-12
      %v677 = vadd.f32 %v675, 1e-12
      %v678 = vrsqrt.pop %v676
      %v679 = vrsqrt.pop %v677
      %v680 = vmul.f32 %v666, %v678
      %v681 = vmul.f32 %v667, %v679
      %v683 = vlaneseq
      %v684 = vshrl.u32 %v683, 7
      %v685 = vsub.s32 0, %v684
      %v686 = vrot.slane %v657, %v685
      %v688 = vmul.f32 %v680, %v686
      %v689 = vmul.f32 %v681, %v686
      %v691 = vlaneseq
      %v692 = vshrl.u32 %v691, 7
      %v693 = vsub.s32 0, %v692
      %v694 = vrot.slane %v658, %v693
      %v696 = vadd.f32 %v688, %v694
      %v697 = vadd.f32 %v689, %v694
      %v698 = vpack.c.bf16 %v697, %v696
      %v700 = vunpack.c.l.b16 %v698
      %v701 = vunpack.c.h.b16 %v698
      %v702 = vpack.c.b16 %v700, %v700
      %v703 = vpack.c.b16 %v701, %v701
      %706 = vst [vmem:[%s278] sm:$0xf] %v702
      %707 = vst [vmem:[%s278 + $0x4] sm:$0xf] %v703
      %p708 = scmp.lt.s32.totalorder %s18, 1
      %s709 = scalar_select %p708, %s18, 1
      %s710 = smul.addr %s709, 2
      %s711 = smul.addr %s710, 4
      %s712 = scalar_lea.vmem %s7, %s711
      // Predicated region
      $region49: #{model_forward.14} parent=47 // pred_check
        %p713 = pneg %p188
      $region50: #{model_forward.14} parent=47 // pred_check_branch
        %715 = sbr.rel (%p713) target = $region52
      $region51: #{model_forward.14} parent=47 // pred_region
        _
      $region52: #{model_forward.14} parent=47 // pred_fallthru
        _
    $region48: #{model_forward.14} parent=5 // pred_fallthru
      _
    %p716 = scmp.le.s32.totalorder 2, %s13
    // Predicated region
    $region53: #{model_forward.14} parent=5 // pred_check
      %p717 = pneg %p716
    $region54: #{model_forward.14} parent=5 // pred_check_branch
      %719 = sbr.rel (%p717) target = $region56
    $region55: #{model_forward.14} parent=5 // pred_region
      %s720 = ssub.s32 %s13, 2
      // Predicated region
      $region57: #{model_forward.14} parent=55 // pred_check
        %p721 = pneg %p194
      $region58: #{model_forward.14} parent=55 // pred_check_branch
        %723 = sbr.rel (%p721) target = $region60
      $region59: #{model_forward.14} parent=55 // pred_region
        %p724 = scmp.lt.s32.totalorder %s19, 1
        %s725 = scalar_select %p724, %s19, 1
        %s726 = smul.addr %s725, 2
        %s727 = smul.addr %s726, 4
        %s728 = scalar_lea.vmem %s7, %s727
      $region60: #{model_forward.14} parent=55 // pred_fallthru
        _
    $region56: #{model_forward.14} parent=5 // pred_fallthru
      _
  $region6: #{model_forward.14} parent=0 // loop_footer
    %s17 = sadd.s32 1, %s13
  $region7: #{model_forward.14} parent=0 // loop_footer_branch
    %12 = sbr.rel target = $region3
  $region8: #{model_forward.14} parent=0 // loop_exit
    _

// kernel: model_forward.13
$region0: #{model_forward.13}
  #allocation0 [shape = 'u32[]', space=smem, size = 0x4, offset = 0x4, fixed_abs, tag = 'smem constant byte address 0x4 - core index']
  #allocation1 [shape = 'u32[144,128]{1,0:T(1,128)}', space=vmem, size = 0x12000, scoped, tag = 'internal scratch']
  %s0 = inlined_call_operand.vmem [shape: bf16[2,16,128], index: 0, kind: input, shape index: {}]
  %s1 = inlined_call_operand.vmem [shape: bf16[128,384], index: 1, kind: input, shape index: {}]
  %s2 = inlined_call_operand.vmem [shape: f32[1,384], index: 2, kind: input, shape index: {}]
  %s3 = inlined_call_operand.vmem [shape: bf16[128,128], index: 3, kind: input, shape index: {}]
  %s4 = inlined_call_operand.vmem [shape: f32[1,128], index: 4, kind: input, shape index: {}]
  %s5 = inlined_call_operand.vmem [shape: f32[1,128], index: 5, kind: input, shape index: {}]
  %s6 = inlined_call_operand.vmem [shape: f32[1,128], index: 6, kind: input, shape index: {}]
  %s7 = inlined_call_operand.vmem [shape: f32[2,1,16], index: 7, kind: input, shape index: {}]
  %s8 = inlined_call_operand.vmem [shape: bf16[2,16,128], index: 8, kind: output, shape index: {}]
  %s9 = sld [smem:[#allocation0]]
  $region65: #{model_forward.13} parent=0
    _
  %s11 = ssub.s32 1, %s9
  %s12 = scalar_select 0, %s11, %s9
  loop: start=0, step=1, limit=4
  $region2: #{model_forward.13} parent=0 // loop_pre_header
    _
  $region3: #{model_forward.13} parent=0 // loop_header
    %s14 = sphi 0, %s18
    %p15 = scmp.ge.s32.totalorder %s14, 4
    %s24 = sphi 0, %s26
    %s27 = sphi 0, %s24
    %s28 = sphi 0, %s27
    %s44 = sphi 0, %s28
    %s48 = sphi 0, %s48
    %s50 = sphi 0, %s48
    %s51 = sphi 0, %s50
    %s65 = sphi 0, %s51
    %s69 = sphi 0, %s69
    %s71 = sphi 0, %s69
    %s72 = sphi 0, %s71
    %s86 = sphi 0, %s72
    %s90 = sphi 0, %s90
    %s92 = sphi 0, %s90
    %s93 = sphi 0, %s92
    %s107 = sphi 0, %s93
    %s111 = sphi 0, %s111
    %s113 = sphi 0, %s111
    %s114 = sphi 0, %s113
    %s128 = sphi 0, %s114
    %s132 = sphi 0, %s132
    %s134 = sphi 0, %s132
    %s135 = sphi 0, %s134
    %s149 = sphi 0, %s135
    %s153 = sphi 0, %s153
    %s155 = sphi 0, %s153
    %s156 = sphi 0, %s155
    %s170 = sphi 0, %s156
    %s176 = sphi 0, %s178
    %s179 = sphi 0, %s176
    %s180 = sphi 0, %s179
    %s196 = sphi 0, %s180
    %s202 = sphi 0, %s204
    %s205 = sphi 0, %s202
    %s206 = sphi 0, %s205
    %s222 = sphi 0, %s206
  $region4: #{model_forward.13} parent=0 // loop_header_branch
    %17 = sbr.rel (%p15) target = $region8
  $region5: #{model_forward.13} parent=0 // loop_body
    %s19 = ssub.s32 %s14, 1
    %s20 = ssub.s32 %s14, 2
    %s21 = sadd.s32 %s14, 1
    %s22 = ssub.s32 %s14, %s21
    %p23 = scmp.eq.s32.totalorder %s22, 0
    %s25 = sadd.s32 %s24, 1
    %s26 = scalar_select %p23, %s24, %s25
    %p29 = pneg %p23
    %p30 = scmp.eq.s32.totalorder %s14, 1
    %p31 = por %p29, %p30
    %p32 = scmp.ne.s32.totalorder %s24, %s27
    %p33 = scmp.eq.s32.totalorder %s14, 0
    %p34 = por %p32, %p33
    %p35 = scmp.ne.s32.totalorder %s24, %s27
    %p36 = scmp.eq.s32.totalorder %s19, 1
    %p37 = por %p35, %p36
    %p38 = scmp.ne.s32.totalorder %s27, %s28
    %p39 = scmp.eq.s32.totalorder %s19, 0
    %p40 = por %p38, %p39
    %p41 = scmp.ne.s32.totalorder %s27, %s28
    %p42 = scmp.eq.s32.totalorder %s20, 1
    %p43 = por %p41, %p42
    %p45 = scmp.ne.s32.totalorder %s28, %s44
    %p46 = scmp.eq.s32.totalorder %s20, 0
    %p47 = por %p45, %p46
    %s49 = sadd.s32 %s48, 1
    %p52 = scmp.eq.s32.totalorder %s14, 1
    %p53 = scmp.ne.s32.totalorder %s48, %s50
    %p54 = scmp.eq.s32.totalorder %s14, 0
    %p55 = por %p53, %p54
    %p56 = scmp.ne.s32.totalorder %s48, %s50
    %p57 = scmp.eq.s32.totalorder %s19, 1
    %p58 = por %p56, %p57
    %p59 = scmp.ne.s32.totalorder %s50, %s51
    %p60 = scmp.eq.s32.totalorder %s19, 0
    %p61 = por %p59, %p60
    %p62 = scmp.ne.s32.totalorder %s50, %s51
    %p63 = scmp.eq.s32.totalorder %s20, 1
    %p64 = por %p62, %p63
    %p66 = scmp.ne.s32.totalorder %s51, %s65
    %p67 = scmp.eq.s32.totalorder %s20, 0
    %p68 = por %p66, %p67
    %s70 = sadd.s32 %s69, 1
    %p73 = scmp.eq.s32.totalorder %s14, 1
    %p74 = scmp.ne.s32.totalorder %s69, %s71
    %p75 = scmp.eq.s32.totalorder %s14, 0
    %p76 = por %p74, %p75
    %p77 = scmp.ne.s32.totalorder %s69, %s71
    %p78 = scmp.eq.s32.totalorder %s19, 1
    %p79 = por %p77, %p78
    %p80 = scmp.ne.s32.totalorder %s71, %s72
    %p81 = scmp.eq.s32.totalorder %s19, 0
    %p82 = por %p80, %p81
    %p83 = scmp.ne.s32.totalorder %s71, %s72
    %p84 = scmp.eq.s32.totalorder %s20, 1
    %p85 = por %p83, %p84
    %p87 = scmp.ne.s32.totalorder %s72, %s86
    %p88 = scmp.eq.s32.totalorder %s20, 0
    %p89 = por %p87, %p88
    %s91 = sadd.s32 %s90, 1
    %p94 = scmp.eq.s32.totalorder %s14, 1
    %p95 = scmp.ne.s32.totalorder %s90, %s92
    %p96 = scmp.eq.s32.totalorder %s14, 0
    %p97 = por %p95, %p96
    %p98 = scmp.ne.s32.totalorder %s90, %s92
    %p99 = scmp.eq.s32.totalorder %s19, 1
    %p100 = por %p98, %p99
    %p101 = scmp.ne.s32.totalorder %s92, %s93
    %p102 = scmp.eq.s32.totalorder %s19, 0
    %p103 = por %p101, %p102
    %p104 = scmp.ne.s32.totalorder %s92, %s93
    %p105 = scmp.eq.s32.totalorder %s20, 1
    %p106 = por %p104, %p105
    %p108 = scmp.ne.s32.totalorder %s93, %s107
    %p109 = scmp.eq.s32.totalorder %s20, 0
    %p110 = por %p108, %p109
    %s112 = sadd.s32 %s111, 1
    %p115 = scmp.eq.s32.totalorder %s14, 1
    %p116 = scmp.ne.s32.totalorder %s111, %s113
    %p117 = scmp.eq.s32.totalorder %s14, 0
    %p118 = por %p116, %p117
    %p119 = scmp.ne.s32.totalorder %s111, %s113
    %p120 = scmp.eq.s32.totalorder %s19, 1
    %p121 = por %p119, %p120
    %p122 = scmp.ne.s32.totalorder %s113, %s114
    %p123 = scmp.eq.s32.totalorder %s19, 0
    %p124 = por %p122, %p123
    %p125 = scmp.ne.s32.totalorder %s113, %s114
    %p126 = scmp.eq.s32.totalorder %s20, 1
    %p127 = por %p125, %p126
    %p129 = scmp.ne.s32.totalorder %s114, %s128
    %p130 = scmp.eq.s32.totalorder %s20, 0
    %p131 = por %p129, %p130
    %s133 = sadd.s32 %s132, 1
    %p136 = scmp.eq.s32.totalorder %s14, 1
    %p137 = scmp.ne.s32.totalorder %s132, %s134
    %p138 = scmp.eq.s32.totalorder %s14, 0
    %p139 = por %p137, %p138
    %p140 = scmp.ne.s32.totalorder %s132, %s134
    %p141 = scmp.eq.s32.totalorder %s19, 1
    %p142 = por %p140, %p141
    %p143 = scmp.ne.s32.totalorder %s134, %s135
    %p144 = scmp.eq.s32.totalorder %s19, 0
    %p145 = por %p143, %p144
    %p146 = scmp.ne.s32.totalorder %s134, %s135
    %p147 = scmp.eq.s32.totalorder %s20, 1
    %p148 = por %p146, %p147
    %p150 = scmp.ne.s32.totalorder %s135, %s149
    %p151 = scmp.eq.s32.totalorder %s20, 0
    %p152 = por %p150, %p151
    %s154 = sadd.s32 %s153, 1
    %p157 = scmp.eq.s32.totalorder %s14, 1
    %p158 = scmp.ne.s32.totalorder %s153, %s155
    %p159 = scmp.eq.s32.totalorder %s14, 0
    %p160 = por %p158, %p159
    %p161 = scmp.ne.s32.totalorder %s153, %s155
    %p162 = scmp.eq.s32.totalorder %s19, 1
    %p163 = por %p161, %p162
    %p164 = scmp.ne.s32.totalorder %s155, %s156
    %p165 = scmp.eq.s32.totalorder %s19, 0
    %p166 = por %p164, %p165
    %p167 = scmp.ne.s32.totalorder %s155, %s156
    %p168 = scmp.eq.s32.totalorder %s20, 1
    %p169 = por %p167, %p168
    %p171 = scmp.ne.s32.totalorder %s156, %s170
    %p172 = scmp.eq.s32.totalorder %s20, 0
    %p173 = por %p171, %p172
    %s174 = ssub.s32 %s14, %s21
    %p175 = scmp.eq.s32.totalorder %s174, 0
    %s177 = sadd.s32 %s176, 1
    %s178 = scalar_select %p175, %s176, %s177
    %p181 = pneg %p175
    %p182 = scmp.eq.s32.totalorder %s14, 1
    %p183 = por %p181, %p182
    %p184 = scmp.ne.s32.totalorder %s176, %s179
    %p185 = scmp.eq.s32.totalorder %s14, 0
    %p186 = por %p184, %p185
    %p187 = scmp.ne.s32.totalorder %s176, %s179
    %p188 = scmp.eq.s32.totalorder %s19, 1
    %p189 = por %p187, %p188
    %p190 = scmp.ne.s32.totalorder %s179, %s180
    %p191 = scmp.eq.s32.totalorder %s19, 0
    %p192 = por %p190, %p191
    %p193 = scmp.ne.s32.totalorder %s179, %s180
    %p194 = scmp.eq.s32.totalorder %s20, 1
    %p195 = por %p193, %p194
    %p197 = scmp.ne.s32.totalorder %s180, %s196
    %p198 = scmp.eq.s32.totalorder %s20, 0
    %p199 = por %p197, %p198
    %s200 = ssub.s32 %s14, %s21
    %p201 = scmp.eq.s32.totalorder %s200, 0
    %s203 = sadd.s32 %s202, 1
    %s204 = scalar_select %p201, %s202, %s203
    %p207 = pneg %p201
    %p208 = scmp.eq.s32.totalorder %s14, 1
    %p209 = por %p207, %p208
    %p210 = scmp.ne.s32.totalorder %s202, %s205
    %p211 = scmp.eq.s32.totalorder %s14, 0
    %p212 = por %p210, %p211
    %p213 = scmp.ne.s32.totalorder %s202, %s205
    %p214 = scmp.eq.s32.totalorder %s19, 1
    %p215 = por %p213, %p214
    %p216 = scmp.ne.s32.totalorder %s205, %s206
    %p217 = scmp.eq.s32.totalorder %s19, 0
    %p218 = por %p216, %p217
    %p219 = scmp.ne.s32.totalorder %s205, %s206
    %p220 = scmp.eq.s32.totalorder %s20, 1
    %p221 = por %p219, %p220
    %p223 = scmp.ne.s32.totalorder %s206, %s222
    %p224 = scmp.eq.s32.totalorder %s20, 0
    %p225 = por %p223, %p224
    %p226 = scmp.le.s32.totalorder 1, %s14
    %p227 = scmp.lt.s32.totalorder %s14, 3
    %p228 = pnand %p226, %p227
    %p229 = pneg %p228
    // Predicated region
    $region9: #{model_forward.13} parent=5 // pred_check
      _
    $region10: #{model_forward.13} parent=5 // pred_check_branch
      %231 = sbr.rel (%p228) target = $region12
    $region11: #{model_forward.13} parent=5 // pred_region
      %s232 = ssub.s32 %s14, 1
      // Predicated region
      $region13: #{model_forward.13} parent=11 // pred_check
        %p233 = pneg %p61
      $region14: #{model_forward.13} parent=11 // pred_check_branch
        %235 = sbr.rel (%p233) target = $region16
      $region15: #{model_forward.13} parent=11 // pred_region
        _
      $region16: #{model_forward.13} parent=11 // pred_fallthru
        _
      // Predicated region
      $region17: #{model_forward.13} parent=11 // pred_check
        %p236 = pneg %p82
      $region18: #{model_forward.13} parent=11 // pred_check_branch
        %238 = sbr.rel (%p236) target = $region20
      $region19: #{model_forward.13} parent=11 // pred_region
        _
      $region20: #{model_forward.13} parent=11 // pred_fallthru
        _
      // Predicated region
      $region21: #{model_forward.13} parent=11 // pred_check
        %p239 = pneg %p103
      $region22: #{model_forward.13} parent=11 // pred_check_branch
        %241 = sbr.rel (%p239) target = $region24
      $region23: #{model_forward.13} parent=11 // pred_region
        _
      $region24: #{model_forward.13} parent=11 // pred_fallthru
        _
      // Predicated region
      $region25: #{model_forward.13} parent=11 // pred_check
        %p242 = pneg %p124
      $region26: #{model_forward.13} parent=11 // pred_check_branch
        %244 = sbr.rel (%p242) target = $region28
      $region27: #{model_forward.13} parent=11 // pred_region
        _
      $region28: #{model_forward.13} parent=11 // pred_fallthru
        _
      // Predicated region
      $region29: #{model_forward.13} parent=11 // pred_check
        %p245 = pneg %p145
      $region30: #{model_forward.13} parent=11 // pred_check_branch
        %247 = sbr.rel (%p245) target = $region32
      $region31: #{model_forward.13} parent=11 // pred_region
        _
      $region32: #{model_forward.13} parent=11 // pred_fallthru
        _
      // Predicated region
      $region33: #{model_forward.13} parent=11 // pred_check
        %p248 = pneg %p166
      $region34: #{model_forward.13} parent=11 // pred_check_branch
        %250 = sbr.rel (%p248) target = $region36
      $region35: #{model_forward.13} parent=11 // pred_region
        _
      $region36: #{model_forward.13} parent=11 // pred_fallthru
        _
    $region12: #{model_forward.13} parent=5 // pred_fallthru
      _
    %p251 = scmp.lt.s32.totalorder %s14, 2
    // Predicated region
    $region37: #{model_forward.13} parent=5 // pred_check
      %p252 = pneg %p251
    $region38: #{model_forward.13} parent=5 // pred_check_branch
      %254 = sbr.rel (%p252) target = $region40
    $region39: #{model_forward.13} parent=5 // pred_region
      // Predicated region
      $region41: #{model_forward.13} parent=39 // pred_check
        %p255 = pneg %p34
      $region42: #{model_forward.13} parent=39 // pred_check_branch
        %257 = sbr.rel (%p255) target = $region44
      $region43: #{model_forward.13} parent=39 // pred_region
        %p258 = scmp.lt.s32.totalorder %s14, 1
        %s259 = scalar_select %p258, %s14, 1
        %s260 = smul.addr %s259, 2
        %s261 = smul.addr %s260, 4
        %s262 = scalar_lea.vmem %s0, %s261
      $region44: #{model_forward.13} parent=39 // pred_fallthru
        _
      // Predicated region
      $region45: #{model_forward.13} parent=39 // pred_check
        %p263 = pneg %p186
      $region46: #{model_forward.13} parent=39 // pred_check_branch
        %265 = sbr.rel (%p263) target = $region48
      $region47: #{model_forward.13} parent=39 // pred_region
        %p266 = scmp.lt.s32.totalorder %s14, 1
        %s267 = scalar_select %p266, %s14, 1
        %s268 = scalar_lea.vmem %s7, %s267
      $region48: #{model_forward.13} parent=39 // pred_fallthru
        _
    $region40: #{model_forward.13} parent=5 // pred_fallthru
      _
    %p269 = scmp.le.s32.totalorder 1, %s14
    %p270 = scmp.lt.s32.totalorder %s14, 3
    %p271 = pnand %p269, %p270
    %p272 = pneg %p271
    // Predicated region
    $region49: #{model_forward.13} parent=5 // pred_check
      _
    $region50: #{model_forward.13} parent=5 // pred_check_branch
      %274 = sbr.rel (%p271) target = $region52
    $region51: #{model_forward.13} parent=5 // pred_region
      %s275 = ssub.s32 %s14, 1
      %p276 = scmp.lt.s32.totalorder %s19, 1
      %s277 = scalar_select %p276, %s19, 1
      %s278 = smul.addr %s277, 2
      %s279 = smul.addr %s278, 4
      %s280 = scalar_lea.vmem %s0, %s279
      %p281 = pneg %p40
      %p282 = pneg %p37
      %p283 = pneg %p61
      %p284 = pneg %p58
      %p285 = pneg %p82
      %p286 = pneg %p79
      %p287 = pneg %p103
      %p288 = pneg %p100
      %p289 = pneg %p124
      %p290 = pneg %p121
      %p291 = pneg %p145
      %p292 = pneg %p142
      %p293 = pneg %p166
      %p294 = pneg %p163
      %p295 = scmp.lt.s32.totalorder %s19, 1
      %s296 = scalar_select %p295, %s19, 1
      %s297 = scalar_lea.vmem %s7, %s296
      %p298 = pneg %p192
      %p299 = pneg %p189
      %p300 = pneg %p218
      %p301 = pneg %p215
      %p302 = scmp.lt.s32.totalorder %s19, 1
      %s303 = scalar_select %p302, %s19, 1
      %s304 = smul.addr %s303, 2
      %s305 = smul.addr %s304, 4
      %s306 = scalar_lea.vmem %s8, %s305
      %p307 = scmp.lt.s32.totalorder %s19, 1
      %s308 = scalar_select %p307, %s19, 1
      %s309 = smul.addr %s308, 2
      %s310 = smul.addr %s309, 4
      %s311 = scalar_lea.vmem %s0, %s310
      %p312 = scmp.lt.s32.totalorder %s19, 1
      %s313 = scalar_select %p312, %s19, 1
      %s314 = scalar_lea.vmem %s7, %s313
      %p315 = scmp.lt.s32.totalorder %s19, 1
      %s316 = scalar_select %p315, %s19, 1
      %s317 = smul.addr %s316, 2
      %s318 = smul.addr %s317, 4
      %s319 = scalar_lea.vmem %s8, %s318
      %v321 = vld [vmem:[%s311] sm:$0xf]
      %v322 = vld [vmem:[%s311 + $0x4] sm:$0xf]
      %v323 = vunpack.c.l.bf16 %v321
      %v324 = vunpack.c.l.bf16 %v322
      %v325 = vld [vmem:[%s1] sm:$0xff]
      %v326 = vld [vmem:[%s1 + $0x8] sm:$0xf]
      %v327 = vld [vmem:[%s1 + $0xc] sm:$0xff]
      %v328 = vld [vmem:[%s1 + $0x14] sm:$0xf]
      %v329 = vld [vmem:[%s1 + $0x18] sm:$0xff]
      %v330 = vld [vmem:[%s1 + $0x20] sm:$0xf]
      %v331 = vld [vmem:[%s1 + $0x24] sm:$0xff]
      %v332 = vld [vmem:[%s1 + $0x2c] sm:$0xf]
      %v333 = vld [vmem:[%s1 + $0x30] sm:$0xff]
      %v334 = vld [vmem:[%s1 + $0x38] sm:$0xf]
      %v335 = vld [vmem:[%s1 + $0x3c] sm:$0xff]
      %v336 = vld [vmem:[%s1 + $0x44] sm:$0xf]
      %v337 = vld [vmem:[%s1 + $0x48] sm:$0xff]
      %v338 = vld [vmem:[%s1 + $0x50] sm:$0xf]
      %v339 = vld [vmem:[%s1 + $0x54] sm:$0xff]
      %v340 = vld [vmem:[%s1 + $0x5c] sm:$0xf]
      %v341 = vld [vmem:[%s1 + $0x60] sm:$0xff]
      %v342 = vld [vmem:[%s1 + $0x68] sm:$0xf]
      %v343 = vld [vmem:[%s1 + $0x6c] sm:$0xff]
      %v344 = vld [vmem:[%s1 + $0x74] sm:$0xf]
      %v345 = vld [vmem:[%s1 + $0x78] sm:$0xff]
      %v346 = vld [vmem:[%s1 + $0x80] sm:$0xf]
      %v347 = vld [vmem:[%s1 + $0x84] sm:$0xff]
      %v348 = vld [vmem:[%s1 + $0x8c] sm:$0xf]
      %v349 = vld [vmem:[%s1 + $0x90] sm:$0xff]
      %v350 = vld [vmem:[%s1 + $0x98] sm:$0xf]
      %v351 = vld [vmem:[%s1 + $0x9c] sm:$0xff]
      %v352 = vld [vmem:[%s1 + $0xa4] sm:$0xf]
      %v353 = vld [vmem:[%s1 + $0xa8] sm:$0xff]
      %v354 = vld [vmem:[%s1 + $0xb0] sm:$0xf]
      %v355 = vld [vmem:[%s1 + $0xb4] sm:$0xff]
      %v356 = vld [vmem:[%s1 + $0xbc] sm:$0xf]
      %v357 = vld [vmem:[%s2] sm:$0x7]
      %v359 = vlaneseq
      %v360 = vshrl.u32 %v359, 7
      %v361 = vsub.s32 0, %v360
      %v362 = vrot.slane %v357, %v361
      %v363 = vlaneseq
      %v364 = vshrl.u32 %v363, 7
      %v365 = vsub.s32 1, %v364
      %v366 = vrot.slane %v357, %v365
      %v367 = vlaneseq
      %v368 = vshrl.u32 %v367, 7
      %v369 = vsub.s32 2, %v368
      %v370 = vrot.slane %v357, %v369
      %v376 = vunpack.c.l.b16 %v321
      %v377 = vunpack.c.l.b16 %v322
      %v378 = vpack.c.b16 %v377, %v376
      %v412 = vunpack.c.l.b16 %v325
      %v413 = vunpack.c.h.b16 %v325
      %v414 = vunpack.c.l.b16 %v326
      %v415 = vunpack.c.l.b16 %v327
      %v416 = vunpack.c.h.b16 %v327
      %v417 = vunpack.c.l.b16 %v328
      %v418 = vunpack.c.l.b16 %v329
      %v419 = vunpack.c.h.b16 %v329
      %v420 = vunpack.c.l.b16 %v330
      %v421 = vunpack.c.l.b16 %v331
      %v422 = vunpack.c.h.b16 %v331
      %v423 = vunpack.c.l.b16 %v332
      %v424 = vunpack.c.l.b16 %v333
      %v425 = vunpack.c.h.b16 %v333
      %v426 = vunpack.c.l.b16 %v334
      %v427 = vunpack.c.l.b16 %v335
      %v428 = vunpack.c.h.b16 %v335
      %v429 = vunpack.c.l.b16 %v336
      %v430 = vunpack.c.l.b16 %v337
      %v431 = vunpack.c.h.b16 %v337
      %v432 = vunpack.c.l.b16 %v338
      %v433 = vunpack.c.l.b16 %v339
      %v434 = vunpack.c.h.b16 %v339
      %v435 = vunpack.c.l.b16 %v340
      %v436 = vunpack.c.l.b16 %v341
      %v437 = vunpack.c.h.b16 %v341
      %v438 = vunpack.c.l.b16 %v342
      %v439 = vunpack.c.l.b16 %v343
      %v440 = vunpack.c.h.b16 %v343
      %v441 = vunpack.c.l.b16 %v344
      %v442 = vunpack.c.l.b16 %v345
      %v443 = vunpack.c.h.b16 %v345
      %v444 = vunpack.c.l.b16 %v346
      %v445 = vunpack.c.l.b16 %v347
      %v446 = vunpack.c.h.b16 %v347
      %v447 = vunpack.c.l.b16 %v348
      %v448 = vunpack.c.l.b16 %v349
      %v449 = vunpack.c.h.b16 %v349
      %v450 = vunpack.c.l.b16 %v350
      %v451 = vunpack.c.l.b16 %v351
      %v452 = vunpack.c.h.b16 %v351
      %v453 = vunpack.c.l.b16 %v352
      %v454 = vunpack.c.l.b16 %v353
      %v455 = vunpack.c.h.b16 %v353
      %v456 = vunpack.c.l.b16 %v354
      %v457 = vunpack.c.l.b16 %v355
      %v458 = vunpack.c.h.b16 %v355
      %v459 = vunpack.c.l.b16 %v356
      %v460 = vpack.c.b16 %v415, %v412
      %v461 = vpack.c.b16 %v416, %v413
      %v462 = vpack.c.b16 %v417, %v414
      %v463 = vpack.c.b16 %v421, %v418
      %v464 = vpack.c.b16 %v422, %v419
      %v465 = vpack.c.b16 %v423, %v420
      %v466 = vpack.c.b16 %v427, %v424
      %v467 = vpack.c.b16 %v428, %v425
      %v468 = vpack.c.b16 %v429, %v426
      %v469 = vpack.c.b16 %v433, %v430
      %v470 = vpack.c.b16 %v434, %v431
      %v471 = vpack.c.b16 %v435, %v432
      %v472 = vpack.c.b16 %v439, %v436
      %v473 = vpack.c.b16 %v440, %v437
      %v474 = vpack.c.b16 %v441, %v438
      %v475 = vpack.c.b16 %v445, %v442
      %v476 = vpack.c.b16 %v446, %v443
      %v477 = vpack.c.b16 %v447, %v444
      %v478 = vpack.c.b16 %v451, %v448
      %v479 = vpack.c.b16 %v452, %v449
      %v480 = vpack.c.b16 %v453, %v450
      %v481 = vpack.c.b16 %v457, %v454
      %v482 = vpack.c.b16 %v458, %v455
      %v483 = vpack.c.b16 %v459, %v456
      %508 = vmatprep.subr.bf16.mxu0 %v461
      %509 = vmatpush1.bf16.msra.mxu0 %v460
      %510 = vmatprep.subr.bf16.mxu0 %v464
      %511 = vmatpush1.bf16.msra.mxu0 %v463
      %512 = vmatprep.subr.bf16.mxu0 %v467
      %513 = vmatpush1.bf16.msra.mxu0 %v466
      %514 = vmatprep.subr.bf16.mxu0 %v470
      %515 = vmatpush1.bf16.msra.mxu0 %v469
      %516 = vmatprep.subr.bf16.mxu0 %v473
      %517 = vmatpush1.bf16.msra.mxu0 %v472
      %518 = vmatprep.subr.bf16.mxu0 %v476
      %519 = vmatpush1.bf16.msra.mxu0 %v475
      %520 = vmatprep.subr.bf16.mxu0 %v479
      %521 = vmatpush1.bf16.msra.mxu0 %v478
      %522 = vmatprep.subr.bf16.mxu0 %v482
      %523 = vmatpush1.bf16.msra.mxu0 %v481
      %524 = vmatprep.subr.bf16.mxu0 0
      %525 = vmatpush1.bf16.msra.mxu0 0
      %526 = vmatprep.subr.bf16.mxu0 0
      %527 = vmatpush1.bf16.msra.mxu0 0
      %528 = vmatprep.subr.bf16.mxu0 0
      %529 = vmatpush1.bf16.msra.mxu0 0
      %530 = vmatprep.subr.bf16.mxu0 0
      %531 = vmatpush1.bf16.msra.mxu0 0
      %532 = vmatprep.subr.bf16.mxu0 0
      %533 = vmatpush1.bf16.msra.mxu0 0
      %534 = vmatprep.subr.bf16.mxu0 0
      %535 = vmatpush1.bf16.msra.mxu0 0
      %536 = vmatprep.subr.bf16.mxu0 0
      %537 = vmatpush1.bf16.msra.mxu0 0
      %538 = vmatprep.subr.bf16.mxu0 0
      %539 = vmatpush1.bf16.msra.mxu0 0
      %540 = vmatprep.mubr.bf16.mxu0 0
      %541 = vmatmul.mubr.bf16.gmra.mrb[0].mxu0 %v378
      %v542 = vpop.f32.mrb[0].mxu0
      %v543 = vadd.f32 %v362, %v542
      %v544 = vpop.f32.mrb[0].mxu0
      %v545 = vadd.f32 %v366, %v544
      %v546 = vpop.f32.mrb[0].mxu0
      %v547 = vadd.f32 %v362, %v546
      %v548 = vpop.f32.mrb[0].mxu0
      %v549 = vadd.f32 %v366, %v548
      %550 = vdwg.mxu0
      %551 = vmatprep.subr.bf16.mxu0 0
      %552 = vmatpush1.bf16.msra.mxu0 %v462
      %553 = vmatprep.subr.bf16.mxu0 0
      %554 = vmatpush1.bf16.msra.mxu0 %v465
      %555 = vmatprep.subr.bf16.mxu0 0
      %556 = vmatpush1.bf16.msra.mxu0 %v468
      %557 = vmatprep.subr.bf16.mxu0 0
      %558 = vmatpush1.bf16.msra.mxu0 %v471
      %559 = vmatprep.subr.bf16.mxu0 0
      %560 = vmatpush1.bf16.msra.mxu0 %v474
      %561 = vmatprep.subr.bf16.mxu0 0
      %562 = vmatpush1.bf16.msra.mxu0 %v477
      %563 = vmatprep.subr.bf16.mxu0 0
      %564 = vmatpush1.bf16.msra.mxu0 %v480
      %565 = vmatprep.subr.bf16.mxu0 0
      %566 = vmatpush1.bf16.msra.mxu0 %v483
      %567 = vmatprep.subr.bf16.mxu0 0
      %568 = vmatpush1.bf16.msra.mxu0 0
      %569 = vmatprep.subr.bf16.mxu0 0
      %570 = vmatpush1.bf16.msra.mxu0 0
      %571 = vmatprep.subr.bf16.mxu0 0
      %572 = vmatpush1.bf16.msra.mxu0 0
      %573 = vmatprep.subr.bf16.mxu0 0
      %574 = vmatpush1.bf16.msra.mxu0 0
      %575 = vmatprep.subr.bf16.mxu0 0
      %576 = vmatpush1.bf16.msra.mxu0 0
      %577 = vmatprep.subr.bf16.mxu0 0
      %578 = vmatpush1.bf16.msra.mxu0 0
      %579 = vmatprep.subr.bf16.mxu0 0
      %580 = vmatpush1.bf16.msra.mxu0 0
      %581 = vmatprep.subr.bf16.mxu0 0
      %582 = vmatpush1.bf16.msra.mxu0 0
      %583 = vmatprep.mubr.bf16.mxu0 0
      %584 = vmatmul.mubr.bf16.gmra.mrb[0].mxu0 %v378
      %v585 = vpop.f32.mrb[0].mxu0
      %v586 = vadd.f32 %v370, %v585
      %v587 = vpop.f32.mrb[0].mxu0
      %v588 = vpop.f32.mrb[0].mxu0
      %v589 = vadd.f32 %v370, %v588
      %v590 = vpop.f32.mrb[0].mxu0
      %591 = vdwg.mxu0
      %v592 = vld [vmem:[%s314] sm:$0x1]
      %v593 = vpack.c.bf16 %v547, %v543
      %v594 = vpack.c.bf16 %v549, %v545
      %v595 = vpack.c.bf16 %v589, %v586
      %v597 = vlaneseq
      %v598 = vshrl.u32 %v597, 7
      %v599 = vsub.s32 0, %v598
      %v600 = vrot.slane %v592, %v599
      %vm602 = vcmask 523264
      %v604 = vsel %vm602, %v593, 0
      %v607 = vsel %vm602, %v594, 0
      %609 = vmatprep.subr.bf16.mxu0 0
      %610 = vmatpush1.bf16.xpose.msra.mxu0 %v607
      %611 = vmatprep.subr.bf16.mxu0 0
      %612 = vmatpush1.bf16.xpose.msra.mxu0 0
      %613 = vmatprep.subr.bf16.mxu0 0
      %614 = vmatpush1.bf16.xpose.msra.mxu0 0
      %615 = vmatprep.subr.bf16.mxu0 0
      %616 = vmatpush1.bf16.xpose.msra.mxu0 0
      %617 = vmatprep.subr.bf16.mxu0 0
      %618 = vmatpush1.bf16.xpose.msra.mxu0 0
      %619 = vmatprep.subr.bf16.mxu0 0
      %620 = vmatpush1.bf16.xpose.msra.mxu0 0
      %621 = vmatprep.subr.bf16.mxu0 0
      %622 = vmatpush1.bf16.xpose.msra.mxu0 0
      %623 = vmatprep.subr.bf16.mxu0 0
      %624 = vmatpush1.bf16.xpose.msra.mxu0 0
      %625 = vmatprep.subr.bf16.mxu0 0
      %626 = vmatpush1.bf16.xpose.msra.mxu0 0
      %627 = vmatprep.subr.bf16.mxu0 0
      %628 = vmatpush1.bf16.xpose.msra.mxu0 0
      %629 = vmatprep.subr.bf16.mxu0 0
      %630 = vmatpush1.bf16.xpose.msra.mxu0 0
      %631 = vmatprep.subr.bf16.mxu0 0
      %632 = vmatpush1.bf16.xpose.msra.mxu0 0
      %633 = vmatprep.subr.bf16.mxu0 0
      %634 = vmatpush1.bf16.xpose.msra.mxu0 0
      %635 = vmatprep.subr.bf16.mxu0 0
      %636 = vmatpush1.bf16.xpose.msra.mxu0 0
      %637 = vmatprep.subr.bf16.mxu0 0
      %638 = vmatpush1.bf16.xpose.msra.mxu0 0
      %639 = vmatprep.subr.bf16.mxu0 0
      %640 = vmatpush1.bf16.xpose.msra.mxu0 0
      %641 = vmatprep.mubr.bf16.mxu0 0
      %642 = vmatmul.mubr.bf16.gmra.mrb[0].mxu0 %v604
      %v643 = vpop.f32.mrb[0].mxu0
      %v644 = vadd.f32 %v600, %v643
      %v645 = vpop.f32.mrb[0].mxu0
      %v646 = vpop.f32.mrb[0].mxu0
      %v647 = vadd.f32 %v600, %v646
      %v648 = vpop.f32.mrb[0].mxu0
      %649 = vdwg.mxu0
      %vm650 = vcmask 130048
      %v651 = vsel %vm650, %v644, -inf
      %652 = vmax.xlane.f32.xlu0 %v651
      %v653 = vpop.xlane.xlu0 %652
      %v654 = vsel %vm650, %v647, -inf
      %655 = vmax.xlane.f32.xlu0 %v654
      %v656 = vpop.xlane.xlu0 %655
      %v657 = vsub.f32 %v644, %v653
      %v658 = vsub.f32 %v647, %v656
      %v659 = vmul.f32 %v657, 1.442695
      %v660 = vpow.pop %v659
      %v661 = vmul.f32 %v658, 1.442695
      %v662 = vpow.pop %v661
      %v663 = vsel %vm650, %v660, 0.0
      %664 = vadd.xlane.f32.xlu0 %v663
      %v665 = vpop.xlane.xlu0 %664
      %v666 = vsel %vm650, %v662, 0.0
      %667 = vadd.xlane.f32.xlu0 %v666
      %v668 = vpop.xlane.xlu0 %667
      %v669 = vrcp.pop %v665
      %v670 = vrcp.pop %v668
      %v671 = vmul.f32 %v660, %v669
      %v672 = vmul.f32 %v662, %v670
      %v673 = vpack.c.bf16 %v672, %v671
      %v675 = vsel %vm650, %v673, 0
      %677 = vmatprep.subr.bf16.mxu0 0
      %678 = vmatpush1.bf16.msra.mxu0 %v595
      %679 = vmatprep.subr.bf16.mxu0 0
      %680 = vmatpush1.bf16.msra.mxu0 0
      %681 = vmatprep.subr.bf16.mxu0 0
      %682 = vmatpush1.bf16.msra.mxu0 0
      %683 = vmatprep.subr.bf16.mxu0 0
      %684 = vmatpush1.bf16.msra.mxu0 0
      %685 = vmatprep.subr.bf16.mxu0 0
      %686 = vmatpush1.bf16.msra.mxu0 0
      %687 = vmatprep.subr.bf16.mxu0 0
      %688 = vmatpush1.bf16.msra.mxu0 0
      %689 = vmatprep.subr.bf16.mxu0 0
      %690 = vmatpush1.bf16.msra.mxu0 0
      %691 = vmatprep.subr.bf16.mxu0 0
      %692 = vmatpush1.bf16.msra.mxu0 0
      %693 = vmatprep.subr.bf16.mxu0 0
      %694 = vmatpush1.bf16.msra.mxu0 0
      %695 = vmatprep.subr.bf16.mxu0 0
      %696 = vmatpush1.bf16.msra.mxu0 0
      %697 = vmatprep.subr.bf16.mxu0 0
      %698 = vmatpush1.bf16.msra.mxu0 0
      %699 = vmatprep.subr.bf16.mxu0 0
      %700 = vmatpush1.bf16.msra.mxu0 0
      %701 = vmatprep.subr.bf16.mxu0 0
      %702 = vmatpush1.bf16.msra.mxu0 0
      %703 = vmatprep.subr.bf16.mxu0 0
      %704 = vmatpush1.bf16.msra.mxu0 0
      %705 = vmatprep.subr.bf16.mxu0 0
      %706 = vmatpush1.bf16.msra.mxu0 0
      %707 = vmatprep.subr.bf16.mxu0 0
      %708 = vmatpush1.bf16.msra.mxu0 0
      %709 = vmatprep.mubr.bf16.mxu0 0
      %710 = vmatmul.mubr.bf16.gmra.mrb[0].mxu0 %v675
      %v711 = vpop.f32.mrb[0].mxu0
      %v712 = vadd.f32 0.0, %v711
      %v713 = vpop.f32.mrb[0].mxu0
      %v714 = vpop.f32.mrb[0].mxu0
      %v715 = vadd.f32 0.0, %v714
      %v716 = vpop.f32.mrb[0].mxu0
      %717 = vdwg.mxu0
      %719 = vrot.lane.b32.xlu0 %v593, 64
      %v720 = vpop.permute.xlu0 %719
      %722 = vrot.lane.b32.xlu0 %v594, 64
      %v723 = vpop.permute.xlu0 %722
      %v725 = vsel %vm602, %v720, 0
      %v728 = vsel %vm602, %v723, 0
      %730 = vmatprep.subr.bf16.mxu0 0
      %731 = vmatpush1.bf16.xpose.msra.mxu0 %v728
      %732 = vmatprep.subr.bf16.mxu0 0
      %733 = vmatpush1.bf16.xpose.msra.mxu0 0
      %734 = vmatprep.subr.bf16.mxu0 0
      %735 = vmatpush1.bf16.xpose.msra.mxu0 0
      %736 = vmatprep.subr.bf16.mxu0 0
      %737 = vmatpush1.bf16.xpose.msra.mxu0 0
      %738 = vmatprep.subr.bf16.mxu0 0
      %739 = vmatpush1.bf16.xpose.msra.mxu0 0
      %740 = vmatprep.subr.bf16.mxu0 0
      %741 = vmatpush1.bf16.xpose.msra.mxu0 0
      %742 = vmatprep.subr.bf16.mxu0 0
      %743 = vmatpush1.bf16.xpose.msra.mxu0 0
      %744 = vmatprep.subr.bf16.mxu0 0
      %745 = vmatpush1.bf16.xpose.msra.mxu0 0
      %746 = vmatprep.subr.bf16.mxu0 0
      %747 = vmatpush1.bf16.xpose.msra.mxu0 0
      %748 = vmatprep.subr.bf16.mxu0 0
      %749 = vmatpush1.bf16.xpose.msra.mxu0 0
      %750 = vmatprep.subr.bf16.mxu0 0
      %751 = vmatpush1.bf16.xpose.msra.mxu0 0
      %752 = vmatprep.subr.bf16.mxu0 0
      %753 = vmatpush1.bf16.xpose.msra.mxu0 0
      %754 = vmatprep.subr.bf16.mxu0 0
      %755 = vmatpush1.bf16.xpose.msra.mxu0 0
      %756 = vmatprep.subr.bf16.mxu0 0
      %757 = vmatpush1.bf16.xpose.msra.mxu0 0
      %758 = vmatprep.subr.bf16.mxu0 0
      %759 = vmatpush1.bf16.xpose.msra.mxu0 0
      %760 = vmatprep.subr.bf16.mxu0 0
      %761 = vmatpush1.bf16.xpose.msra.mxu0 0
      %762 = vmatprep.mubr.bf16.mxu0 0
      %763 = vmatmul.mubr.bf16.gmra.mrb[0].mxu0 %v725
      %v764 = vpop.f32.mrb[0].mxu0
      %v765 = vadd.f32 %v600, %v764
      %v766 = vpop.f32.mrb[0].mxu0
      %v767 = vpop.f32.mrb[0].mxu0
      %v768 = vadd.f32 %v600, %v767
      %v769 = vpop.f32.mrb[0].mxu0
      %770 = vdwg.mxu0
      %v771 = vsel %vm650, %v765, -inf
      %772 = vmax.xlane.f32.xlu0 %v771
      %v773 = vpop.xlane.xlu0 %772
      %v774 = vsel %vm650, %v768, -inf
      %775 = vmax.xlane.f32.xlu0 %v774
      %v776 = vpop.xlane.xlu0 %775
      %v777 = vsub.f32 %v765, %v773
      %v778 = vsub.f32 %v768, %v776
      %v779 = vmul.f32 %v777, 1.442695
      %v780 = vpow.pop %v779
      %v781 = vmul.f32 %v778, 1.442695
      %v782 = vpow.pop %v781
      %v783 = vsel %vm650, %v780, 0.0
      %784 = vadd.xlane.f32.xlu0 %v783
      %v785 = vpop.xlane.xlu0 %784
      %v786 = vsel %vm650, %v782, 0.0
      %787 = vadd.xlane.f32.xlu0 %v786
      %v788 = vpop.xlane.xlu0 %787
      %v789 = vrcp.pop %v785
      %v790 = vrcp.pop %v788
      %v791 = vmul.f32 %v780, %v789
      %v792 = vmul.f32 %v782, %v790
      %v793 = vpack.c.bf16 %v792, %v791
      %795 = vrot.lane.b32.xlu0 %v595, 64
      %v796 = vpop.permute.xlu0 %795
      %v799 = vsel %vm650, %v793, 0
      %801 = vmatprep.subr.bf16.mxu0 0
      %802 = vmatpush1.bf16.msra.mxu0 %v796
      %803 = vmatprep.subr.bf16.mxu0 0
      %804 = vmatpush1.bf16.msra.mxu0 0
      %805 = vmatprep.subr.bf16.mxu0 0
      %806 = vmatpush1.bf16.msra.mxu0 0
      %807 = vmatprep.subr.bf16.mxu0 0
      %808 = vmatpush1.bf16.msra.mxu0 0
      %809 = vmatprep.subr.bf16.mxu0 0
      %810 = vmatpush1.bf16.msra.mxu0 0
      %811 = vmatprep.subr.bf16.mxu0 0
      %812 = vmatpush1.bf16.msra.mxu0 0
      %813 = vmatprep.subr.bf16.mxu0 0
      %814 = vmatpush1.bf16.msra.mxu0 0
      %815 = vmatprep.subr.bf16.mxu0 0
      %816 = vmatpush1.bf16.msra.mxu0 0
      %817 = vmatprep.subr.bf16.mxu0 0
      %818 = vmatpush1.bf16.msra.mxu0 0
      %819 = vmatprep.subr.bf16.mxu0 0
      %820 = vmatpush1.bf16.msra.mxu0 0
      %821 = vmatprep.subr.bf16.mxu0 0
      %822 = vmatpush1.bf16.msra.mxu0 0
      %823 = vmatprep.subr.bf16.mxu0 0
      %824 = vmatpush1.bf16.msra.mxu0 0
      %825 = vmatprep.subr.bf16.mxu0 0
      %826 = vmatpush1.bf16.msra.mxu0 0
      %827 = vmatprep.subr.bf16.mxu0 0
      %828 = vmatpush1.bf16.msra.mxu0 0
      %829 = vmatprep.subr.bf16.mxu0 0
      %830 = vmatpush1.bf16.msra.mxu0 0
      %831 = vmatprep.subr.bf16.mxu0 0
      %832 = vmatpush1.bf16.msra.mxu0 0
      %833 = vmatprep.mubr.bf16.mxu0 0
      %834 = vmatmul.mubr.bf16.gmra.mrb[0].mxu0 %v799
      %v835 = vpop.f32.mrb[0].mxu0
      %v836 = vadd.f32 0.0, %v835
      %v837 = vpop.f32.mrb[0].mxu0
      %v838 = vpop.f32.mrb[0].mxu0
      %v839 = vadd.f32 0.0, %v838
      %v840 = vpop.f32.mrb[0].mxu0
      %841 = vdwg.mxu0
      %844 = vrot.lane.b32.xlu0 %v836, 64
      %v845 = vpop.permute.xlu0 %844
      %846 = vrot.lane.b32.xlu0 %v839, 64
      %v847 = vpop.permute.xlu0 %846
      %v850 = vsel %vm602, %v712, %v845
      %v851 = vsel %vm602, %v715, %v847
      %v852 = vpack.c.bf16 %v851, %v850
      %v853 = vld [vmem:[%s3] sm:$0xf]
      %v854 = vld [vmem:[%s3 + $0x4] sm:$0xf]
      %v855 = vld [vmem:[%s3 + $0x8] sm:$0xf]
      %v856 = vld [vmem:[%s3 + $0xc] sm:$0xf]
      %v857 = vld [vmem:[%s3 + $0x10] sm:$0xf]
      %v858 = vld [vmem:[%s3 + $0x14] sm:$0xf]
      %v859 = vld [vmem:[%s3 + $0x18] sm:$0xf]
      %v860 = vld [vmem:[%s3 + $0x1c] sm:$0xf]
      %v861 = vld [vmem:[%s3 + $0x20] sm:$0xf]
      %v862 = vld [vmem:[%s3 + $0x24] sm:$0xf]
      %v863 = vld [vmem:[%s3 + $0x28] sm:$0xf]
      %v864 = vld [vmem:[%s3 + $0x2c] sm:$0xf]
      %v865 = vld [vmem:[%s3 + $0x30] sm:$0xf]
      %v866 = vld [vmem:[%s3 + $0x34] sm:$0xf]
      %v867 = vld [vmem:[%s3 + $0x38] sm:$0xf]
      %v868 = vld [vmem:[%s3 + $0x3c] sm:$0xf]
      %v869 = vld [vmem:[%s4] sm:$0x1]
      %v871 = vlaneseq
      %v872 = vshrl.u32 %v871, 7
      %v873 = vsub.s32 0, %v872
      %v874 = vrot.slane %v869, %v873
      %v892 = vunpack.c.l.b16 %v853
      %v893 = vunpack.c.l.b16 %v854
      %v894 = vunpack.c.l.b16 %v855
      %v895 = vunpack.c.l.b16 %v856
      %v896 = vunpack.c.l.b16 %v857
      %v897 = vunpack.c.l.b16 %v858
      %v898 = vunpack.c.l.b16 %v859
      %v899 = vunpack.c.l.b16 %v860
      %v900 = vunpack.c.l.b16 %v861
      %v901 = vunpack.c.l.b16 %v862
      %v902 = vunpack.c.l.b16 %v863
      %v903 = vunpack.c.l.b16 %v864
      %v904 = vunpack.c.l.b16 %v865
      %v905 = vunpack.c.l.b16 %v866
      %v906 = vunpack.c.l.b16 %v867
      %v907 = vunpack.c.l.b16 %v868
      %v908 = vpack.c.b16 %v893, %v892
      %v909 = vpack.c.b16 %v895, %v894
      %v910 = vpack.c.b16 %v897, %v896
      %v911 = vpack.c.b16 %v899, %v898
      %v912 = vpack.c.b16 %v901, %v900
      %v913 = vpack.c.b16 %v903, %v902
      %v914 = vpack.c.b16 %v905, %v904
      %v915 = vpack.c.b16 %v907, %v906
      %924 = vmatprep.subr.bf16.mxu0 0
      %925 = vmatpush1.bf16.msra.mxu0 %v908
      %926 = vmatprep.subr.bf16.mxu0 0
      %927 = vmatpush1.bf16.msra.mxu0 %v909
      %928 = vmatprep.subr.bf16.mxu0 0
      %929 = vmatpush1.bf16.msra.mxu0 %v910
      %930 = vmatprep.subr.bf16.mxu0 0
      %931 = vmatpush1.bf16.msra.mxu0 %v911
      %932 = vmatprep.subr.bf16.mxu0 0
      %933 = vmatpush1.bf16.msra.mxu0 %v912
      %934 = vmatprep.subr.bf16.mxu0 0
      %935 = vmatpush1.bf16.msra.mxu0 %v913
      %936 = vmatprep.subr.bf16.mxu0 0
      %937 = vmatpush1.bf16.msra.mxu0 %v914
      %938 = vmatprep.subr.bf16.mxu0 0
      %939 = vmatpush1.bf16.msra.mxu0 %v915
      %940 = vmatprep.subr.bf16.mxu0 0
      %941 = vmatpush1.bf16.msra.mxu0 0
      %942 = vmatprep.subr.bf16.mxu0 0
      %943 = vmatpush1.bf16.msra.mxu0 0
      %944 = vmatprep.subr.bf16.mxu0 0
      %945 = vmatpush1.bf16.msra.mxu0 0
      %946 = vmatprep.subr.bf16.mxu0 0
      %947 = vmatpush1.bf16.msra.mxu0 0
      %948 = vmatprep.subr.bf16.mxu0 0
      %949 = vmatpush1.bf16.msra.mxu0 0
      %950 = vmatprep.subr.bf16.mxu0 0
      %951 = vmatpush1.bf16.msra.mxu0 0
      %952 = vmatprep.subr.bf16.mxu0 0
      %953 = vmatpush1.bf16.msra.mxu0 0
      %954 = vmatprep.subr.bf16.mxu0 0
      %955 = vmatpush1.bf16.msra.mxu0 0
      %956 = vmatprep.mubr.bf16.mxu0 0
      %957 = vmatmul.mubr.bf16.gmra.mrb[0].mxu0 %v852
      %v958 = vpop.f32.mrb[0].mxu0
      %v959 = vadd.f32 %v874, %v958
      %v960 = vpop.f32.mrb[0].mxu0
      %v961 = vpop.f32.mrb[0].mxu0
      %v962 = vadd.f32 %v874, %v961
      %v963 = vpop.f32.mrb[0].mxu0
      %964 = vdwg.mxu0
      %v965 = vadd.f32 %v959, %v323
      %v966 = vadd.f32 %v962, %v324
      %v967 = vld [vmem:[%s5] sm:$0x1]
      %v968 = vld [vmem:[%s6] sm:$0x1]
      %969 = vadd.xlane.f32.xlu0 %v965
      %v970 = vpop.xlane.xlu0 %969
      %971 = vadd.xlane.f32.xlu0 %v966
      %v972 = vpop.xlane.xlu0 %971
      %v973 = vrcp.pop 128.0
      %v974 = vmul.f32 %v970, %v973
      %v975 = vmul.f32 %v972, %v973
      %v976 = vsub.f32 %v965, %v974
      %v977 = vsub.f32 %v966, %v975
      %v978 = vmul.f32 %v976, %v976
      %v979 = vmul.f32 %v977, %v977
      %980 = vadd.xlane.f32.xlu0 %v978
      %v981 = vpop.xlane.xlu0 %980
      %982 = vadd.xlane.f32.xlu0 %v979
      %v983 = vpop.xlane.xlu0 %982
      %v984 = vmul.f32 %v981, %v973
      %v985 = vmul.f32 %v983, %v973
      %v986 = vadd.f32 %v984, 1e-12
      %v987 = vadd.f32 %v985, 1e-12
      %v988 = vrsqrt.pop %v986
      %v989 = vrsqrt.pop %v987
      %v990 = vmul.f32 %v976, %v988
      %v991 = vmul.f32 %v977, %v989
      %v993 = vlaneseq
      %v994 = vshrl.u32 %v993, 7
      %v995 = vsub.s32 0, %v994
      %v996 = vrot.slane %v967, %v995
      %v998 = vmul.f32 %v990, %v996
      %v999 = vmul.f32 %v991, %v996
      %v1001 = vlaneseq
      %v1002 = vshrl.u32 %v1001, 7
      %v1003 = vsub.s32 0, %v1002
      %v1004 = vrot.slane %v968, %v1003
      %v1006 = vadd.f32 %v998, %v1004
      %v1007 = vadd.f32 %v999, %v1004
      %v1008 = vpack.c.bf16 %v1007, %v1006
      %v1010 = vunpack.c.l.b16 %v1008
      %v1011 = vunpack.c.h.b16 %v1008
      %v1012 = vpack.c.b16 %v1010, %v1010
      %v1013 = vpack.c.b16 %v1011, %v1011
      %1016 = vst [vmem:[%s319] sm:$0xf] %v1012
      %1017 = vst [vmem:[%s319 + $0x4] sm:$0xf] %v1013
      %p1018 = scmp.lt.s32.totalorder %s19, 1
      %s1019 = scalar_select %p1018, %s19, 1
      %s1020 = smul.addr %s1019, 2
      %s1021 = smul.addr %s1020, 4
      %s1022 = scalar_lea.vmem %s8, %s1021
      // Predicated region
      $region53: #{model_forward.13} parent=51 // pred_check
        %p1023 = pneg %p215
      $region54: #{model_forward.13} parent=51 // pred_check_branch
        %1025 = sbr.rel (%p1023) target = $region56
      $region55: #{model_forward.13} parent=51 // pred_region
        _
      $region56: #{model_forward.13} parent=51 // pred_fallthru
        _
    $region52: #{model_forward.13} parent=5 // pred_fallthru
      _
    %p1026 = scmp.le.s32.totalorder 2, %s14
    // Predicated region
    $region57: #{model_forward.13} parent=5 // pred_check
      %p1027 = pneg %p1026
    $region58: #{model_forward.13} parent=5 // pred_check_branch
      %1029 = sbr.rel (%p1027) target = $region60
    $region59: #{model_forward.13} parent=5 // pred_region
      %s1030 = ssub.s32 %s14, 2
      // Predicated region
      $region61: #{model_forward.13} parent=59 // pred_check
        %p1031 = pneg %p221
      $region62: #{model_forward.13} parent=59 // pred_check_branch
        %1033 = sbr.rel (%p1031) target = $region64
      $region63: #{model_forward.13} parent=59 // pred_region
        %p1034 = scmp.lt.s32.totalorder %s20, 1
        %s1035 = scalar_select %p1034, %s20, 1
        %s1036 = smul.addr %s1035, 2
        %s1037 = smul.addr %s1036, 4
        %s1038 = scalar_lea.vmem %s8, %s1037
      $region64: #{model_forward.13} parent=59 // pred_fallthru
        _
    $region60: #{model_forward.13} parent=5 // pred_fallthru
      _
  $region6: #{model_forward.13} parent=0 // loop_footer
    %s18 = sadd.s32 1, %s14
  $region7: #{model_forward.13} parent=0 // loop_footer_branch
    %13 = sbr.rel target = $region3
  $region8: #{model_forward.13} parent=0 // loop_exit
    _

// kernel: model_forward.17
$region0: #{model_forward.17}
  #allocation0 [shape = 'u32[]', space=smem, size = 0x4, offset = 0x4, fixed_abs, tag = 'smem constant byte address 0x4 - core index']
  #allocation1 [shape = 'u32[144,128]{1,0:T(1,128)}', space=vmem, size = 0x12000, scoped, tag = 'internal scratch']
  %s0 = inlined_call_operand.vmem [shape: bf16[2,7,128], index: 0, kind: input, shape index: {}]
  %s1 = inlined_call_operand.vmem [shape: bf16[128,384], index: 1, kind: input, shape index: {}]
  %s2 = inlined_call_operand.vmem [shape: f32[1,384], index: 2, kind: input, shape index: {}]
  %s3 = inlined_call_operand.vmem [shape: bf16[128,128], index: 3, kind: input, shape index: {}]
  %s4 = inlined_call_operand.vmem [shape: f32[1,128], index: 4, kind: input, shape index: {}]
  %s5 = inlined_call_operand.vmem [shape: f32[1,128], index: 5, kind: input, shape index: {}]
  %s6 = inlined_call_operand.vmem [shape: f32[1,128], index: 6, kind: input, shape index: {}]
  %s7 = inlined_call_operand.vmem [shape: f32[2,1,7], index: 7, kind: input, shape index: {}]
  %s8 = inlined_call_operand.vmem [shape: bf16[2,7,128], index: 8, kind: output, shape index: {}]
  %s9 = sld [smem:[#allocation0]]
  $region65: #{model_forward.17} parent=0
    _
  %s11 = ssub.s32 1, %s9
  %s12 = scalar_select 0, %s11, %s9
  loop: start=0, step=1, limit=4
  $region2: #{model_forward.17} parent=0 // loop_pre_header
    _
  $region3: #{model_forward.17} parent=0 // loop_header
    %s14 = sphi 0, %s18
    %p15 = scmp.ge.s32.totalorder %s14, 4
    %s24 = sphi 0, %s26
    %s27 = sphi 0, %s24
    %s28 = sphi 0, %s27
    %s44 = sphi 0, %s28
    %s48 = sphi 0, %s48
    %s50 = sphi 0, %s48
    %s51 = sphi 0, %s50
    %s65 = sphi 0, %s51
    %s69 = sphi 0, %s69
    %s71 = sphi 0, %s69
    %s72 = sphi 0, %s71
    %s86 = sphi 0, %s72
    %s90 = sphi 0, %s90
    %s92 = sphi 0, %s90
    %s93 = sphi 0, %s92
    %s107 = sphi 0, %s93
    %s111 = sphi 0, %s111
    %s113 = sphi 0, %s111
    %s114 = sphi 0, %s113
    %s128 = sphi 0, %s114
    %s132 = sphi 0, %s132
    %s134 = sphi 0, %s132
    %s135 = sphi 0, %s134
    %s149 = sphi 0, %s135
    %s153 = sphi 0, %s153
    %s155 = sphi 0, %s153
    %s156 = sphi 0, %s155
    %s170 = sphi 0, %s156
    %s176 = sphi 0, %s178
    %s179 = sphi 0, %s176
    %s180 = sphi 0, %s179
    %s196 = sphi 0, %s180
    %s202 = sphi 0, %s204
    %s205 = sphi 0, %s202
    %s206 = sphi 0, %s205
    %s222 = sphi 0, %s206
  $region4: #{model_forward.17} parent=0 // loop_header_branch
    %17 = sbr.rel (%p15) target = $region8
  $region5: #{model_forward.17} parent=0 // loop_body
    %s19 = ssub.s32 %s14, 1
    %s20 = ssub.s32 %s14, 2
    %s21 = sadd.s32 %s14, 1
    %s22 = ssub.s32 %s14, %s21
    %p23 = scmp.eq.s32.totalorder %s22, 0
    %s25 = sadd.s32 %s24, 1
    %s26 = scalar_select %p23, %s24, %s25
    %p29 = pneg %p23
    %p30 = scmp.eq.s32.totalorder %s14, 1
    %p31 = por %p29, %p30
    %p32 = scmp.ne.s32.totalorder %s24, %s27
    %p33 = scmp.eq.s32.totalorder %s14, 0
    %p34 = por %p32, %p33
    %p35 = scmp.ne.s32.totalorder %s24, %s27
    %p36 = scmp.eq.s32.totalorder %s19, 1
    %p37 = por %p35, %p36
    %p38 = scmp.ne.s32.totalorder %s27, %s28
    %p39 = scmp.eq.s32.totalorder %s19, 0
    %p40 = por %p38, %p39
    %p41 = scmp.ne.s32.totalorder %s27, %s28
    %p42 = scmp.eq.s32.totalorder %s20, 1
    %p43 = por %p41, %p42
    %p45 = scmp.ne.s32.totalorder %s28, %s44
    %p46 = scmp.eq.s32.totalorder %s20, 0
    %p47 = por %p45, %p46
    %s49 = sadd.s32 %s48, 1
    %p52 = scmp.eq.s32.totalorder %s14, 1
    %p53 = scmp.ne.s32.totalorder %s48, %s50
    %p54 = scmp.eq.s32.totalorder %s14, 0
    %p55 = por %p53, %p54
    %p56 = scmp.ne.s32.totalorder %s48, %s50
    %p57 = scmp.eq.s32.totalorder %s19, 1
    %p58 = por %p56, %p57
    %p59 = scmp.ne.s32.totalorder %s50, %s51
    %p60 = scmp.eq.s32.totalorder %s19, 0
    %p61 = por %p59, %p60
    %p62 = scmp.ne.s32.totalorder %s50, %s51
    %p63 = scmp.eq.s32.totalorder %s20, 1
    %p64 = por %p62, %p63
    %p66 = scmp.ne.s32.totalorder %s51, %s65
    %p67 = scmp.eq.s32.totalorder %s20, 0
    %p68 = por %p66, %p67
    %s70 = sadd.s32 %s69, 1
    %p73 = scmp.eq.s32.totalorder %s14, 1
    %p74 = scmp.ne.s32.totalorder %s69, %s71
    %p75 = scmp.eq.s32.totalorder %s14, 0
    %p76 = por %p74, %p75
    %p77 = scmp.ne.s32.totalorder %s69, %s71
    %p78 = scmp.eq.s32.totalorder %s19, 1
    %p79 = por %p77, %p78
    %p80 = scmp.ne.s32.totalorder %s71, %s72
    %p81 = scmp.eq.s32.totalorder %s19, 0
    %p82 = por %p80, %p81
    %p83 = scmp.ne.s32.totalorder %s71, %s72
    %p84 = scmp.eq.s32.totalorder %s20, 1
    %p85 = por %p83, %p84
    %p87 = scmp.ne.s32.totalorder %s72, %s86
    %p88 = scmp.eq.s32.totalorder %s20, 0
    %p89 = por %p87, %p88
    %s91 = sadd.s32 %s90, 1
    %p94 = scmp.eq.s32.totalorder %s14, 1
    %p95 = scmp.ne.s32.totalorder %s90, %s92
    %p96 = scmp.eq.s32.totalorder %s14, 0
    %p97 = por %p95, %p96
    %p98 = scmp.ne.s32.totalorder %s90, %s92
    %p99 = scmp.eq.s32.totalorder %s19, 1
    %p100 = por %p98, %p99
    %p101 = scmp.ne.s32.totalorder %s92, %s93
    %p102 = scmp.eq.s32.totalorder %s19, 0
    %p103 = por %p101, %p102
    %p104 = scmp.ne.s32.totalorder %s92, %s93
    %p105 = scmp.eq.s32.totalorder %s20, 1
    %p106 = por %p104, %p105
    %p108 = scmp.ne.s32.totalorder %s93, %s107
    %p109 = scmp.eq.s32.totalorder %s20, 0
    %p110 = por %p108, %p109
    %s112 = sadd.s32 %s111, 1
    %p115 = scmp.eq.s32.totalorder %s14, 1
    %p116 = scmp.ne.s32.totalorder %s111, %s113
    %p117 = scmp.eq.s32.totalorder %s14, 0
    %p118 = por %p116, %p117
    %p119 = scmp.ne.s32.totalorder %s111, %s113
    %p120 = scmp.eq.s32.totalorder %s19, 1
    %p121 = por %p119, %p120
    %p122 = scmp.ne.s32.totalorder %s113, %s114
    %p123 = scmp.eq.s32.totalorder %s19, 0
    %p124 = por %p122, %p123
    %p125 = scmp.ne.s32.totalorder %s113, %s114
    %p126 = scmp.eq.s32.totalorder %s20, 1
    %p127 = por %p125, %p126
    %p129 = scmp.ne.s32.totalorder %s114, %s128
    %p130 = scmp.eq.s32.totalorder %s20, 0
    %p131 = por %p129, %p130
    %s133 = sadd.s32 %s132, 1
    %p136 = scmp.eq.s32.totalorder %s14, 1
    %p137 = scmp.ne.s32.totalorder %s132, %s134
    %p138 = scmp.eq.s32.totalorder %s14, 0
    %p139 = por %p137, %p138
    %p140 = scmp.ne.s32.totalorder %s132, %s134
    %p141 = scmp.eq.s32.totalorder %s19, 1
    %p142 = por %p140, %p141
    %p143 = scmp.ne.s32.totalorder %s134, %s135
    %p144 = scmp.eq.s32.totalorder %s19, 0
    %p145 = por %p143, %p144
    %p146 = scmp.ne.s32.totalorder %s134, %s135
    %p147 = scmp.eq.s32.totalorder %s20, 1
    %p148 = por %p146, %p147
    %p150 = scmp.ne.s32.totalorder %s135, %s149
    %p151 = scmp.eq.s32.totalorder %s20, 0
    %p152 = por %p150, %p151
    %s154 = sadd.s32 %s153, 1
    %p157 = scmp.eq.s32.totalorder %s14, 1
    %p158 = scmp.ne.s32.totalorder %s153, %s155
    %p159 = scmp.eq.s32.totalorder %s14, 0
    %p160 = por %p158, %p159
    %p161 = scmp.ne.s32.totalorder %s153, %s155
    %p162 = scmp.eq.s32.totalorder %s19, 1
    %p163 = por %p161, %p162
    %p164 = scmp.ne.s32.totalorder %s155, %s156
    %p165 = scmp.eq.s32.totalorder %s19, 0
    %p166 = por %p164, %p165
    %p167 = scmp.ne.s32.totalorder %s155, %s156
    %p168 = scmp.eq.s32.totalorder %s20, 1
    %p169 = por %p167, %p168
    %p171 = scmp.ne.s32.totalorder %s156, %s170
    %p172 = scmp.eq.s32.totalorder %s20, 0
    %p173 = por %p171, %p172
    %s174 = ssub.s32 %s14, %s21
    %p175 = scmp.eq.s32.totalorder %s174, 0
    %s177 = sadd.s32 %s176, 1
    %s178 = scalar_select %p175, %s176, %s177
    %p181 = pneg %p175
    %p182 = scmp.eq.s32.totalorder %s14, 1
    %p183 = por %p181, %p182
    %p184 = scmp.ne.s32.totalorder %s176, %s179
    %p185 = scmp.eq.s32.totalorder %s14, 0
    %p186 = por %p184, %p185
    %p187 = scmp.ne.s32.totalorder %s176, %s179
    %p188 = scmp.eq.s32.totalorder %s19, 1
    %p189 = por %p187, %p188
    %p190 = scmp.ne.s32.totalorder %s179, %s180
    %p191 = scmp.eq.s32.totalorder %s19, 0
    %p192 = por %p190, %p191
    %p193 = scmp.ne.s32.totalorder %s179, %s180
    %p194 = scmp.eq.s32.totalorder %s20, 1
    %p195 = por %p193, %p194
    %p197 = scmp.ne.s32.totalorder %s180, %s196
    %p198 = scmp.eq.s32.totalorder %s20, 0
    %p199 = por %p197, %p198
    %s200 = ssub.s32 %s14, %s21
    %p201 = scmp.eq.s32.totalorder %s200, 0
    %s203 = sadd.s32 %s202, 1
    %s204 = scalar_select %p201, %s202, %s203
    %p207 = pneg %p201
    %p208 = scmp.eq.s32.totalorder %s14, 1
    %p209 = por %p207, %p208
    %p210 = scmp.ne.s32.totalorder %s202, %s205
    %p211 = scmp.eq.s32.totalorder %s14, 0
    %p212 = por %p210, %p211
    %p213 = scmp.ne.s32.totalorder %s202, %s205
    %p214 = scmp.eq.s32.totalorder %s19, 1
    %p215 = por %p213, %p214
    %p216 = scmp.ne.s32.totalorder %s205, %s206
    %p217 = scmp.eq.s32.totalorder %s19, 0
    %p218 = por %p216, %p217
    %p219 = scmp.ne.s32.totalorder %s205, %s206
    %p220 = scmp.eq.s32.totalorder %s20, 1
    %p221 = por %p219, %p220
    %p223 = scmp.ne.s32.totalorder %s206, %s222
    %p224 = scmp.eq.s32.totalorder %s20, 0
    %p225 = por %p223, %p224
    %p226 = scmp.le.s32.totalorder 1, %s14
    %p227 = scmp.lt.s32.totalorder %s14, 3
    %p228 = pnand %p226, %p227
    %p229 = pneg %p228
    // Predicated region
    $region9: #{model_forward.17} parent=5 // pred_check
      _
    $region10: #{model_forward.17} parent=5 // pred_check_branch
      %231 = sbr.rel (%p228) target = $region12
    $region11: #{model_forward.17} parent=5 // pred_region
      %s232 = ssub.s32 %s14, 1
      // Predicated region
      $region13: #{model_forward.17} parent=11 // pred_check
        %p233 = pneg %p61
      $region14: #{model_forward.17} parent=11 // pred_check_branch
        %235 = sbr.rel (%p233) target = $region16
      $region15: #{model_forward.17} parent=11 // pred_region
        _
      $region16: #{model_forward.17} parent=11 // pred_fallthru
        _
      // Predicated region
      $region17: #{model_forward.17} parent=11 // pred_check
        %p236 = pneg %p82
      $region18: #{model_forward.17} parent=11 // pred_check_branch
        %238 = sbr.rel (%p236) target = $region20
      $region19: #{model_forward.17} parent=11 // pred_region
        _
      $region20: #{model_forward.17} parent=11 // pred_fallthru
        _
      // Predicated region
      $region21: #{model_forward.17} parent=11 // pred_check
        %p239 = pneg %p103
      $region22: #{model_forward.17} parent=11 // pred_check_branch
        %241 = sbr.rel (%p239) target = $region24
      $region23: #{model_forward.17} parent=11 // pred_region
        _
      $region24: #{model_forward.17} parent=11 // pred_fallthru
        _
      // Predicated region
      $region25: #{model_forward.17} parent=11 // pred_check
        %p242 = pneg %p124
      $region26: #{model_forward.17} parent=11 // pred_check_branch
        %244 = sbr.rel (%p242) target = $region28
      $region27: #{model_forward.17} parent=11 // pred_region
        _
      $region28: #{model_forward.17} parent=11 // pred_fallthru
        _
      // Predicated region
      $region29: #{model_forward.17} parent=11 // pred_check
        %p245 = pneg %p145
      $region30: #{model_forward.17} parent=11 // pred_check_branch
        %247 = sbr.rel (%p245) target = $region32
      $region31: #{model_forward.17} parent=11 // pred_region
        _
      $region32: #{model_forward.17} parent=11 // pred_fallthru
        _
      // Predicated region
      $region33: #{model_forward.17} parent=11 // pred_check
        %p248 = pneg %p166
      $region34: #{model_forward.17} parent=11 // pred_check_branch
        %250 = sbr.rel (%p248) target = $region36
      $region35: #{model_forward.17} parent=11 // pred_region
        _
      $region36: #{model_forward.17} parent=11 // pred_fallthru
        _
    $region12: #{model_forward.17} parent=5 // pred_fallthru
      _
    %p251 = scmp.lt.s32.totalorder %s14, 2
    // Predicated region
    $region37: #{model_forward.17} parent=5 // pred_check
      %p252 = pneg %p251
    $region38: #{model_forward.17} parent=5 // pred_check_branch
      %254 = sbr.rel (%p252) target = $region40
    $region39: #{model_forward.17} parent=5 // pred_region
      // Predicated region
      $region41: #{model_forward.17} parent=39 // pred_check
        %p255 = pneg %p34
      $region42: #{model_forward.17} parent=39 // pred_check_branch
        %257 = sbr.rel (%p255) target = $region44
      $region43: #{model_forward.17} parent=39 // pred_region
        %p258 = scmp.lt.s32.totalorder %s14, 1
        %s259 = scalar_select %p258, %s14, 1
        %s260 = smul.addr %s259, 4
        %s261 = scalar_lea.vmem %s0, %s260
      $region44: #{model_forward.17} parent=39 // pred_fallthru
        _
      // Predicated region
      $region45: #{model_forward.17} parent=39 // pred_check
        %p262 = pneg %p186
      $region46: #{model_forward.17} parent=39 // pred_check_branch
        %264 = sbr.rel (%p262) target = $region48
      $region47: #{model_forward.17} parent=39 // pred_region
        %p265 = scmp.lt.s32.totalorder %s14, 1
        %s266 = scalar_select %p265, %s14, 1
        %s267 = scalar_lea.vmem %s7, %s266
      $region48: #{model_forward.17} parent=39 // pred_fallthru
        _
    $region40: #{model_forward.17} parent=5 // pred_fallthru
      _
    %p268 = scmp.le.s32.totalorder 1, %s14
    %p269 = scmp.lt.s32.totalorder %s14, 3
    %p270 = pnand %p268, %p269
    %p271 = pneg %p270
    // Predicated region
    $region49: #{model_forward.17} parent=5 // pred_check
      _
    $region50: #{model_forward.17} parent=5 // pred_check_branch
      %273 = sbr.rel (%p270) target = $region52
    $region51: #{model_forward.17} parent=5 // pred_region
      %s274 = ssub.s32 %s14, 1
      %p275 = scmp.lt.s32.totalorder %s19, 1
      %s276 = scalar_select %p275, %s19, 1
      %s277 = smul.addr %s276, 4
      %s278 = scalar_lea.vmem %s0, %s277
      %p279 = pneg %p40
      %p280 = pneg %p37
      %p281 = pneg %p61
      %p282 = pneg %p58
      %p283 = pneg %p82
      %p284 = pneg %p79
      %p285 = pneg %p103
      %p286 = pneg %p100
      %p287 = pneg %p124
      %p288 = pneg %p121
      %p289 = pneg %p145
      %p290 = pneg %p142
      %p291 = pneg %p166
      %p292 = pneg %p163
      %p293 = scmp.lt.s32.totalorder %s19, 1
      %s294 = scalar_select %p293, %s19, 1
      %s295 = scalar_lea.vmem %s7, %s294
      %p296 = pneg %p192
      %p297 = pneg %p189
      %p298 = pneg %p218
      %p299 = pneg %p215
      %p300 = scmp.lt.s32.totalorder %s19, 1
      %s301 = scalar_select %p300, %s19, 1
      %s302 = smul.addr %s301, 4
      %s303 = scalar_lea.vmem %s8, %s302
      %p304 = scmp.lt.s32.totalorder %s19, 1
      %s305 = scalar_select %p304, %s19, 1
      %s306 = smul.addr %s305, 4
      %s307 = scalar_lea.vmem %s0, %s306
      %p308 = scmp.lt.s32.totalorder %s19, 1
      %s309 = scalar_select %p308, %s19, 1
      %s310 = scalar_lea.vmem %s7, %s309
      %p311 = scmp.lt.s32.totalorder %s19, 1
      %s312 = scalar_select %p311, %s19, 1
      %s313 = smul.addr %s312, 4
      %s314 = scalar_lea.vmem %s8, %s313
      %v316 = vld [vmem:[%s307] sm:$0xf]
      %v317 = vunpack.c.l.bf16 %v316
      %v318 = vld [vmem:[%s5] sm:$0x1]
      %v319 = vld [vmem:[%s6] sm:$0x1]
      %vm320 = vcmask 1046528
      %v321 = vsel %vm320, %v317, 0.0
      %322 = vadd.xlane.f32.xlu0 %v321
      %v323 = vpop.xlane.xlu0 %322
      %v324 = vrcp.pop 128.0
      %v325 = vmul.f32 %v323, %v324
      %v326 = vsub.f32 %v317, %v325
      %v327 = vmul.f32 %v326, %v326
      %v328 = vsel %vm320, %v327, 0.0
      %329 = vadd.xlane.f32.xlu0 %v328
      %v330 = vpop.xlane.xlu0 %329
      %v331 = vmul.f32 %v330, %v324
      %v332 = vadd.f32 %v331, 1e-06
      %v333 = vrsqrt.pop %v332
      %v334 = vmul.f32 %v326, %v333
      %v336 = vlaneseq
      %v337 = vshrl.u32 %v336, 7
      %v338 = vsub.s32 0, %v337
      %v339 = vrot.slane %v318, %v338
      %v341 = vmul.f32 %v334, %v339
      %v343 = vlaneseq
      %v344 = vshrl.u32 %v343, 7
      %v345 = vsub.s32 0, %v344
      %v346 = vrot.slane %v319, %v345
      %v348 = vadd.f32 %v341, %v346
      %v349 = vpack.c.bf16 %v348, %v348
      %v350 = vld [vmem:[%s1] sm:$0xff]
      %v351 = vld [vmem:[%s1 + $0x8] sm:$0xf]
      %v352 = vld [vmem:[%s1 + $0xc] sm:$0xff]
      %v353 = vld [vmem:[%s1 + $0x14] sm:$0xf]
      %v354 = vld [vmem:[%s1 + $0x18] sm:$0xff]
      %v355 = vld [vmem:[%s1 + $0x20] sm:$0xf]
      %v356 = vld [vmem:[%s1 + $0x24] sm:$0xff]
      %v357 = vld [vmem:[%s1 + $0x2c] sm:$0xf]
      %v358 = vld [vmem:[%s1 + $0x30] sm:$0xff]
      %v359 = vld [vmem:[%s1 + $0x38] sm:$0xf]
      %v360 = vld [vmem:[%s1 + $0x3c] sm:$0xff]
      %v361 = vld [vmem:[%s1 + $0x44] sm:$0xf]
      %v362 = vld [vmem:[%s1 + $0x48] sm:$0xff]
      %v363 = vld [vmem:[%s1 + $0x50] sm:$0xf]
      %v364 = vld [vmem:[%s1 + $0x54] sm:$0xff]
      %v365 = vld [vmem:[%s1 + $0x5c] sm:$0xf]
      %v366 = vld [vmem:[%s1 + $0x60] sm:$0xff]
      %v367 = vld [vmem:[%s1 + $0x68] sm:$0xf]
      %v368 = vld [vmem:[%s1 + $0x6c] sm:$0xff]
      %v369 = vld [vmem:[%s1 + $0x74] sm:$0xf]
      %v370 = vld [vmem:[%s1 + $0x78] sm:$0xff]
      %v371 = vld [vmem:[%s1 + $0x80] sm:$0xf]
      %v372 = vld [vmem:[%s1 + $0x84] sm:$0xff]
      %v373 = vld [vmem:[%s1 + $0x8c] sm:$0xf]
      %v374 = vld [vmem:[%s1 + $0x90] sm:$0xff]
      %v375 = vld [vmem:[%s1 + $0x98] sm:$0xf]
      %v376 = vld [vmem:[%s1 + $0x9c] sm:$0xff]
      %v377 = vld [vmem:[%s1 + $0xa4] sm:$0xf]
      %v378 = vld [vmem:[%s1 + $0xa8] sm:$0xff]
      %v379 = vld [vmem:[%s1 + $0xb0] sm:$0xf]
      %v380 = vld [vmem:[%s1 + $0xb4] sm:$0xff]
      %v381 = vld [vmem:[%s1 + $0xbc] sm:$0xf]
      %v382 = vld [vmem:[%s2] sm:$0x7]
      %v384 = vlaneseq
      %v385 = vshrl.u32 %v384, 7
      %v386 = vsub.s32 0, %v385
      %v387 = vrot.slane %v382, %v386
      %v388 = vlaneseq
      %v389 = vshrl.u32 %v388, 7
      %v390 = vsub.s32 1, %v389
      %v391 = vrot.slane %v382, %v390
      %v392 = vlaneseq
      %v393 = vshrl.u32 %v392, 7
      %v394 = vsub.s32 2, %v393
      %v395 = vrot.slane %v382, %v394
      %v431 = vunpack.c.l.b16 %v350
      %v432 = vunpack.c.h.b16 %v350
      %v433 = vunpack.c.l.b16 %v351
      %v434 = vunpack.c.l.b16 %v352
      %v435 = vunpack.c.h.b16 %v352
      %v436 = vunpack.c.l.b16 %v353
      %v437 = vunpack.c.l.b16 %v354
      %v438 = vunpack.c.h.b16 %v354
      %v439 = vunpack.c.l.b16 %v355
      %v440 = vunpack.c.l.b16 %v356
      %v441 = vunpack.c.h.b16 %v356
      %v442 = vunpack.c.l.b16 %v357
      %v443 = vunpack.c.l.b16 %v358
      %v444 = vunpack.c.h.b16 %v358
      %v445 = vunpack.c.l.b16 %v359
      %v446 = vunpack.c.l.b16 %v360
      %v447 = vunpack.c.h.b16 %v360
      %v448 = vunpack.c.l.b16 %v361
      %v449 = vunpack.c.l.b16 %v362
      %v450 = vunpack.c.h.b16 %v362
      %v451 = vunpack.c.l.b16 %v363
      %v452 = vunpack.c.l.b16 %v364
      %v453 = vunpack.c.h.b16 %v364
      %v454 = vunpack.c.l.b16 %v365
      %v455 = vunpack.c.l.b16 %v366
      %v456 = vunpack.c.h.b16 %v366
      %v457 = vunpack.c.l.b16 %v367
      %v458 = vunpack.c.l.b16 %v368
      %v459 = vunpack.c.h.b16 %v368
      %v460 = vunpack.c.l.b16 %v369
      %v461 = vunpack.c.l.b16 %v370
      %v462 = vunpack.c.h.b16 %v370
      %v463 = vunpack.c.l.b16 %v371
      %v464 = vunpack.c.l.b16 %v372
      %v465 = vunpack.c.h.b16 %v372
      %v466 = vunpack.c.l.b16 %v373
      %v467 = vunpack.c.l.b16 %v374
      %v468 = vunpack.c.h.b16 %v374
      %v469 = vunpack.c.l.b16 %v375
      %v470 = vunpack.c.l.b16 %v376
      %v471 = vunpack.c.h.b16 %v376
      %v472 = vunpack.c.l.b16 %v377
      %v473 = vunpack.c.l.b16 %v378
      %v474 = vunpack.c.h.b16 %v378
      %v475 = vunpack.c.l.b16 %v379
      %v476 = vunpack.c.l.b16 %v380
      %v477 = vunpack.c.h.b16 %v380
      %v478 = vunpack.c.l.b16 %v381
      %v479 = vpack.c.b16 %v434, %v431
      %v480 = vpack.c.b16 %v435, %v432
      %v481 = vpack.c.b16 %v436, %v433
      %v482 = vpack.c.b16 %v440, %v437
      %v483 = vpack.c.b16 %v441, %v438
      %v484 = vpack.c.b16 %v442, %v439
      %v485 = vpack.c.b16 %v446, %v443
      %v486 = vpack.c.b16 %v447, %v444
      %v487 = vpack.c.b16 %v448, %v445
      %v488 = vpack.c.b16 %v452, %v449
      %v489 = vpack.c.b16 %v453, %v450
      %v490 = vpack.c.b16 %v454, %v451
      %v491 = vpack.c.b16 %v458, %v455
      %v492 = vpack.c.b16 %v459, %v456
      %v493 = vpack.c.b16 %v460, %v457
      %v494 = vpack.c.b16 %v464, %v461
      %v495 = vpack.c.b16 %v465, %v462
      %v496 = vpack.c.b16 %v466, %v463
      %v497 = vpack.c.b16 %v470, %v467
      %v498 = vpack.c.b16 %v471, %v468
      %v499 = vpack.c.b16 %v472, %v469
      %v500 = vpack.c.b16 %v476, %v473
      %v501 = vpack.c.b16 %v477, %v474
      %v502 = vpack.c.b16 %v478, %v475
      %527 = vmatprep.subr.bf16.mxu0 %v480
      %528 = vmatpush1.bf16.msra.mxu0 %v479
      %529 = vmatprep.subr.bf16.mxu0 %v483
      %530 = vmatpush1.bf16.msra.mxu0 %v482
      %531 = vmatprep.subr.bf16.mxu0 %v486
      %532 = vmatpush1.bf16.msra.mxu0 %v485
      %533 = vmatprep.subr.bf16.mxu0 %v489
      %534 = vmatpush1.bf16.msra.mxu0 %v488
      %535 = vmatprep.subr.bf16.mxu0 %v492
      %536 = vmatpush1.bf16.msra.mxu0 %v491
      %537 = vmatprep.subr.bf16.mxu0 %v495
      %538 = vmatpush1.bf16.msra.mxu0 %v494
      %539 = vmatprep.subr.bf16.mxu0 %v498
      %540 = vmatpush1.bf16.msra.mxu0 %v497
      %541 = vmatprep.subr.bf16.mxu0 %v501
      %542 = vmatpush1.bf16.msra.mxu0 %v500
      %543 = vmatprep.subr.bf16.mxu0 0
      %544 = vmatpush1.bf16.msra.mxu0 0
      %545 = vmatprep.subr.bf16.mxu0 0
      %546 = vmatpush1.bf16.msra.mxu0 0
      %547 = vmatprep.subr.bf16.mxu0 0
      %548 = vmatpush1.bf16.msra.mxu0 0
      %549 = vmatprep.subr.bf16.mxu0 0
      %550 = vmatpush1.bf16.msra.mxu0 0
      %551 = vmatprep.subr.bf16.mxu0 0
      %552 = vmatpush1.bf16.msra.mxu0 0
      %553 = vmatprep.subr.bf16.mxu0 0
      %554 = vmatpush1.bf16.msra.mxu0 0
      %555 = vmatprep.subr.bf16.mxu0 0
      %556 = vmatpush1.bf16.msra.mxu0 0
      %557 = vmatprep.subr.bf16.mxu0 0
      %558 = vmatpush1.bf16.msra.mxu0 0
      %559 = vmatprep.mubr.bf16.mxu0 0
      %560 = vmatmul.mubr.bf16.gmra.mrb[0].mxu0 %v349
      %v561 = vpop.f32.mrb[0].mxu0
      %v562 = vadd.f32 %v387, %v561
      %v563 = vpop.f32.mrb[0].mxu0
      %v564 = vadd.f32 %v391, %v563
      %v565 = vpop.f32.mrb[0].mxu0
      %v566 = vpop.f32.mrb[0].mxu0
      %567 = vdwg.mxu0
      %568 = vmatprep.subr.bf16.mxu0 0
      %569 = vmatpush1.bf16.msra.mxu0 %v481
      %570 = vmatprep.subr.bf16.mxu0 0
      %571 = vmatpush1.bf16.msra.mxu0 %v484
      %572 = vmatprep.subr.bf16.mxu0 0
      %573 = vmatpush1.bf16.msra.mxu0 %v487
      %574 = vmatprep.subr.bf16.mxu0 0
      %575 = vmatpush1.bf16.msra.mxu0 %v490
      %576 = vmatprep.subr.bf16.mxu0 0
      %577 = vmatpush1.bf16.msra.mxu0 %v493
      %578 = vmatprep.subr.bf16.mxu0 0
      %579 = vmatpush1.bf16.msra.mxu0 %v496
      %580 = vmatprep.subr.bf16.mxu0 0
      %581 = vmatpush1.bf16.msra.mxu0 %v499
      %582 = vmatprep.subr.bf16.mxu0 0
      %583 = vmatpush1.bf16.msra.mxu0 %v502
      %584 = vmatprep.subr.bf16.mxu0 0
      %585 = vmatpush1.bf16.msra.mxu0 0
      %586 = vmatprep.subr.bf16.mxu0 0
      %587 = vmatpush1.bf16.msra.mxu0 0
      %588 = vmatprep.subr.bf16.mxu0 0
      %589 = vmatpush1.bf16.msra.mxu0 0
      %590 = vmatprep.subr.bf16.mxu0 0
      %591 = vmatpush1.bf16.msra.mxu0 0
      %592 = vmatprep.subr.bf16.mxu0 0
      %593 = vmatpush1.bf16.msra.mxu0 0
      %594 = vmatprep.subr.bf16.mxu0 0
      %595 = vmatpush1.bf16.msra.mxu0 0
      %596 = vmatprep.subr.bf16.mxu0 0
      %597 = vmatpush1.bf16.msra.mxu0 0
      %598 = vmatprep.subr.bf16.mxu0 0
      %599 = vmatpush1.bf16.msra.mxu0 0
      %600 = vmatprep.mubr.bf16.mxu0 0
      %601 = vmatmul.mubr.bf16.gmra.mrb[0].mxu0 %v349
      %v602 = vpop.f32.mrb[0].mxu0
      %v603 = vadd.f32 %v395, %v602
      %v604 = vpop.f32.mrb[0].mxu0
      %v605 = vpop.f32.mrb[0].mxu0
      %v606 = vpop.f32.mrb[0].mxu0
      %607 = vdwg.mxu0
      %v608 = vld [vmem:[%s310] sm:$0x1]
      %v609 = vlaneseq
      %v610 = vshrl.u32 %v609, 7
      %v611 = vlaneseq
      %v612 = vand.u32 %v611, 127
      %vm613 = vcmp.gt.s32.totalorder %v612, %v610
      %v615 = vlaneseq
      %v616 = vshrl.u32 %v615, 7
      %v617 = vsub.s32 0, %v616
      %v618 = vrot.slane %v608, %v617
      %v620 = vsel %vm613, -1e+09, %v618
      %v621 = vpack.c.bf16 %v562, %v562
      %v622 = vpack.c.bf16 %v564, %v564
      %v623 = vpack.c.bf16 %v603, %v603
      %vm624 = vcmask 523264
      %v626 = vsel %vm624, %v621, 0
      %v629 = vsel %vm624, %v622, 0
      %631 = vmatprep.subr.bf16.mxu0 0
      %632 = vmatpush1.bf16.xpose.msra.mxu0 %v629
      %633 = vmatprep.subr.bf16.mxu0 0
      %634 = vmatpush1.bf16.xpose.msra.mxu0 0
      %635 = vmatprep.subr.bf16.mxu0 0
      %636 = vmatpush1.bf16.xpose.msra.mxu0 0
      %637 = vmatprep.subr.bf16.mxu0 0
      %638 = vmatpush1.bf16.xpose.msra.mxu0 0
      %639 = vmatprep.subr.bf16.mxu0 0
      %640 = vmatpush1.bf16.xpose.msra.mxu0 0
      %641 = vmatprep.subr.bf16.mxu0 0
      %642 = vmatpush1.bf16.xpose.msra.mxu0 0
      %643 = vmatprep.subr.bf16.mxu0 0
      %644 = vmatpush1.bf16.xpose.msra.mxu0 0
      %645 = vmatprep.subr.bf16.mxu0 0
      %646 = vmatpush1.bf16.xpose.msra.mxu0 0
      %647 = vmatprep.subr.bf16.mxu0 0
      %648 = vmatpush1.bf16.xpose.msra.mxu0 0
      %649 = vmatprep.subr.bf16.mxu0 0
      %650 = vmatpush1.bf16.xpose.msra.mxu0 0
      %651 = vmatprep.subr.bf16.mxu0 0
      %652 = vmatpush1.bf16.xpose.msra.mxu0 0
      %653 = vmatprep.subr.bf16.mxu0 0
      %654 = vmatpush1.bf16.xpose.msra.mxu0 0
      %655 = vmatprep.subr.bf16.mxu0 0
      %656 = vmatpush1.bf16.xpose.msra.mxu0 0
      %657 = vmatprep.subr.bf16.mxu0 0
      %658 = vmatpush1.bf16.xpose.msra.mxu0 0
      %659 = vmatprep.subr.bf16.mxu0 0
      %660 = vmatpush1.bf16.xpose.msra.mxu0 0
      %661 = vmatprep.subr.bf16.mxu0 0
      %662 = vmatpush1.bf16.xpose.msra.mxu0 0
      %663 = vmatprep.mubr.bf16.mxu0 0
      %664 = vmatmul.mubr.bf16.gmra.mrb[0].mxu0 %v626
      %v665 = vpop.f32.mrb[0].mxu0
      %v666 = vadd.f32 %v620, %v665
      %v667 = vpop.f32.mrb[0].mxu0
      %v668 = vpop.f32.mrb[0].mxu0
      %v669 = vpop.f32.mrb[0].mxu0
      %670 = vdwg.mxu0
      %vm671 = vcmask 55296
      %v672 = vsel %vm671, %v666, -inf
      %673 = vmax.xlane.f32.xlu0 %v672
      %v674 = vpop.xlane.xlu0 %673
      %v675 = vsub.f32 %v666, %v674
      %v676 = vmul.f32 %v675, 1.442695
      %v677 = vpow.pop %v676
      %v678 = vsel %vm671, %v677, 0.0
      %679 = vadd.xlane.f32.xlu0 %v678
      %v680 = vpop.xlane.xlu0 %679
      %v681 = vrcp.pop %v680
      %v682 = vmul.f32 %v677, %v681
      %v683 = vpack.c.bf16 %v682, %v682
      %vm684 = vcmask 56320
      %v686 = vsel %vm684, %v683, 0
      %vm688 = vcmask 1042432
      %vm689 = vcmask 1043456
      %v690 = vsel %vm688, 4294967295, 65535
      %v691 = vsel %vm689, %v690, 0
      %v693 = vand.u32 %v623, %v691
      %695 = vmatprep.subr.bf16.mxu0 0
      %696 = vmatpush1.bf16.msra.mxu0 %v693
      %697 = vmatprep.subr.bf16.mxu0 0
      %698 = vmatpush1.bf16.msra.mxu0 0
      %699 = vmatprep.subr.bf16.mxu0 0
      %700 = vmatpush1.bf16.msra.mxu0 0
      %701 = vmatprep.subr.bf16.mxu0 0
      %702 = vmatpush1.bf16.msra.mxu0 0
      %703 = vmatprep.subr.bf16.mxu0 0
      %704 = vmatpush1.bf16.msra.mxu0 0
      %705 = vmatprep.subr.bf16.mxu0 0
      %706 = vmatpush1.bf16.msra.mxu0 0
      %707 = vmatprep.subr.bf16.mxu0 0
      %708 = vmatpush1.bf16.msra.mxu0 0
      %709 = vmatprep.subr.bf16.mxu0 0
      %710 = vmatpush1.bf16.msra.mxu0 0
      %711 = vmatprep.subr.bf16.mxu0 0
      %712 = vmatpush1.bf16.msra.mxu0 0
      %713 = vmatprep.subr.bf16.mxu0 0
      %714 = vmatpush1.bf16.msra.mxu0 0
      %715 = vmatprep.subr.bf16.mxu0 0
      %716 = vmatpush1.bf16.msra.mxu0 0
      %717 = vmatprep.subr.bf16.mxu0 0
      %718 = vmatpush1.bf16.msra.mxu0 0
      %719 = vmatprep.subr.bf16.mxu0 0
      %720 = vmatpush1.bf16.msra.mxu0 0
      %721 = vmatprep.subr.bf16.mxu0 0
      %722 = vmatpush1.bf16.msra.mxu0 0
      %723 = vmatprep.subr.bf16.mxu0 0
      %724 = vmatpush1.bf16.msra.mxu0 0
      %725 = vmatprep.subr.bf16.mxu0 0
      %726 = vmatpush1.bf16.msra.mxu0 0
      %727 = vmatprep.mubr.bf16.mxu0 0
      %728 = vmatmul.mubr.bf16.gmra.mrb[0].mxu0 %v686
      %v729 = vpop.f32.mrb[0].mxu0
      %v730 = vadd.f32 0.0, %v729
      %v731 = vpop.f32.mrb[0].mxu0
      %v732 = vpop.f32.mrb[0].mxu0
      %v733 = vpop.f32.mrb[0].mxu0
      %734 = vdwg.mxu0
      %736 = vrot.lane.b32.xlu0 %v621, 64
      %v737 = vpop.permute.xlu0 %736
      %739 = vrot.lane.b32.xlu0 %v622, 64
      %v740 = vpop.permute.xlu0 %739
      %v742 = vsel %vm624, %v737, 0
      %v745 = vsel %vm624, %v740, 0
      %747 = vmatprep.subr.bf16.mxu0 0
      %748 = vmatpush1.bf16.xpose.msra.mxu0 %v745
      %749 = vmatprep.subr.bf16.mxu0 0
      %750 = vmatpush1.bf16.xpose.msra.mxu0 0
      %751 = vmatprep.subr.bf16.mxu0 0
      %752 = vmatpush1.bf16.xpose.msra.mxu0 0
      %753 = vmatprep.subr.bf16.mxu0 0
      %754 = vmatpush1.bf16.xpose.msra.mxu0 0
      %755 = vmatprep.subr.bf16.mxu0 0
      %756 = vmatpush1.bf16.xpose.msra.mxu0 0
      %757 = vmatprep.subr.bf16.mxu0 0
      %758 = vmatpush1.bf16.xpose.msra.mxu0 0
      %759 = vmatprep.subr.bf16.mxu0 0
      %760 = vmatpush1.bf16.xpose.msra.mxu0 0
      %761 = vmatprep.subr.bf16.mxu0 0
      %762 = vmatpush1.bf16.xpose.msra.mxu0 0
      %763 = vmatprep.subr.bf16.mxu0 0
      %764 = vmatpush1.bf16.xpose.msra.mxu0 0
      %765 = vmatprep.subr.bf16.mxu0 0
      %766 = vmatpush1.bf16.xpose.msra.mxu0 0
      %767 = vmatprep.subr.bf16.mxu0 0
      %768 = vmatpush1.bf16.xpose.msra.mxu0 0
      %769 = vmatprep.subr.bf16.mxu0 0
      %770 = vmatpush1.bf16.xpose.msra.mxu0 0
      %771 = vmatprep.subr.bf16.mxu0 0
      %772 = vmatpush1.bf16.xpose.msra.mxu0 0
      %773 = vmatprep.subr.bf16.mxu0 0
      %774 = vmatpush1.bf16.xpose.msra.mxu0 0
      %775 = vmatprep.subr.bf16.mxu0 0
      %776 = vmatpush1.bf16.xpose.msra.mxu0 0
      %777 = vmatprep.subr.bf16.mxu0 0
      %778 = vmatpush1.bf16.xpose.msra.mxu0 0
      %779 = vmatprep.mubr.bf16.mxu0 0
      %780 = vmatmul.mubr.bf16.gmra.mrb[0].mxu0 %v742
      %v781 = vpop.f32.mrb[0].mxu0
      %v782 = vadd.f32 %v620, %v781
      %v783 = vpop.f32.mrb[0].mxu0
      %v784 = vpop.f32.mrb[0].mxu0
      %v785 = vpop.f32.mrb[0].mxu0
      %786 = vdwg.mxu0
      %v787 = vsel %vm671, %v782, -inf
      %788 = vmax.xlane.f32.xlu0 %v787
      %v789 = vpop.xlane.xlu0 %788
      %v790 = vsub.f32 %v782, %v789
      %v791 = vmul.f32 %v790, 1.442695
      %v792 = vpow.pop %v791
      %v793 = vsel %vm671, %v792, 0.0
      %794 = vadd.xlane.f32.xlu0 %v793
      %v795 = vpop.xlane.xlu0 %794
      %v796 = vrcp.pop %v795
      %v797 = vmul.f32 %v792, %v796
      %v798 = vpack.c.bf16 %v797, %v797
      %800 = vrot.lane.b32.xlu0 %v623, 64
      %v801 = vpop.permute.xlu0 %800
      %v803 = vsel %vm684, %v798, 0
      %v806 = vand.u32 %v801, %v691
      %808 = vmatprep.subr.bf16.mxu0 0
      %809 = vmatpush1.bf16.msra.mxu0 %v806
      %810 = vmatprep.subr.bf16.mxu0 0
      %811 = vmatpush1.bf16.msra.mxu0 0
      %812 = vmatprep.subr.bf16.mxu0 0
      %813 = vmatpush1.bf16.msra.mxu0 0
      %814 = vmatprep.subr.bf16.mxu0 0
      %815 = vmatpush1.bf16.msra.mxu0 0
      %816 = vmatprep.subr.bf16.mxu0 0
      %817 = vmatpush1.bf16.msra.mxu0 0
      %818 = vmatprep.subr.bf16.mxu0 0
      %819 = vmatpush1.bf16.msra.mxu0 0
      %820 = vmatprep.subr.bf16.mxu0 0
      %821 = vmatpush1.bf16.msra.mxu0 0
      %822 = vmatprep.subr.bf16.mxu0 0
      %823 = vmatpush1.bf16.msra.mxu0 0
      %824 = vmatprep.subr.bf16.mxu0 0
      %825 = vmatpush1.bf16.msra.mxu0 0
      %826 = vmatprep.subr.bf16.mxu0 0
      %827 = vmatpush1.bf16.msra.mxu0 0
      %828 = vmatprep.subr.bf16.mxu0 0
      %829 = vmatpush1.bf16.msra.mxu0 0
      %830 = vmatprep.subr.bf16.mxu0 0
      %831 = vmatpush1.bf16.msra.mxu0 0
      %832 = vmatprep.subr.bf16.mxu0 0
      %833 = vmatpush1.bf16.msra.mxu0 0
      %834 = vmatprep.subr.bf16.mxu0 0
      %835 = vmatpush1.bf16.msra.mxu0 0
      %836 = vmatprep.subr.bf16.mxu0 0
      %837 = vmatpush1.bf16.msra.mxu0 0
      %838 = vmatprep.subr.bf16.mxu0 0
      %839 = vmatpush1.bf16.msra.mxu0 0
      %840 = vmatprep.mubr.bf16.mxu0 0
      %841 = vmatmul.mubr.bf16.gmra.mrb[0].mxu0 %v803
      %v842 = vpop.f32.mrb[0].mxu0
      %v843 = vadd.f32 0.0, %v842
      %v844 = vpop.f32.mrb[0].mxu0
      %v845 = vpop.f32.mrb[0].mxu0
      %v846 = vpop.f32.mrb[0].mxu0
      %847 = vdwg.mxu0
      %849 = vrot.lane.b32.xlu0 %v843, 64
      %v850 = vpop.permute.xlu0 %849
      %v852 = vsel %vm624, %v730, %v850
      %v853 = vpack.c.bf16 %v852, %v852
      %v854 = vld [vmem:[%s3] sm:$0xf]
      %v855 = vld [vmem:[%s3 + $0x4] sm:$0xf]
      %v856 = vld [vmem:[%s3 + $0x8] sm:$0xf]
      %v857 = vld [vmem:[%s3 + $0xc] sm:$0xf]
      %v858 = vld [vmem:[%s3 + $0x10] sm:$0xf]
      %v859 = vld [vmem:[%s3 + $0x14] sm:$0xf]
      %v860 = vld [vmem:[%s3 + $0x18] sm:$0xf]
      %v861 = vld [vmem:[%s3 + $0x1c] sm:$0xf]
      %v862 = vld [vmem:[%s3 + $0x20] sm:$0xf]
      %v863 = vld [vmem:[%s3 + $0x24] sm:$0xf]
      %v864 = vld [vmem:[%s3 + $0x28] sm:$0xf]
      %v865 = vld [vmem:[%s3 + $0x2c] sm:$0xf]
      %v866 = vld [vmem:[%s3 + $0x30] sm:$0xf]
      %v867 = vld [vmem:[%s3 + $0x34] sm:$0xf]
      %v868 = vld [vmem:[%s3 + $0x38] sm:$0xf]
      %v869 = vld [vmem:[%s3 + $0x3c] sm:$0xf]
      %v870 = vld [vmem:[%s4] sm:$0x1]
      %v872 = vlaneseq
      %v873 = vshrl.u32 %v872, 7
      %v874 = vsub.s32 0, %v873
      %v875 = vrot.slane %v870, %v874
      %v893 = vunpack.c.l.b16 %v854
      %v894 = vunpack.c.l.b16 %v855
      %v895 = vunpack.c.l.b16 %v856
      %v896 = vunpack.c.l.b16 %v857
      %v897 = vunpack.c.l.b16 %v858
      %v898 = vunpack.c.l.b16 %v859
      %v899 = vunpack.c.l.b16 %v860
      %v900 = vunpack.c.l.b16 %v861
      %v901 = vunpack.c.l.b16 %v862
      %v902 = vunpack.c.l.b16 %v863
      %v903 = vunpack.c.l.b16 %v864
      %v904 = vunpack.c.l.b16 %v865
      %v905 = vunpack.c.l.b16 %v866
      %v906 = vunpack.c.l.b16 %v867
      %v907 = vunpack.c.l.b16 %v868
      %v908 = vunpack.c.l.b16 %v869
      %v909 = vpack.c.b16 %v894, %v893
      %v910 = vpack.c.b16 %v896, %v895
      %v911 = vpack.c.b16 %v898, %v897
      %v912 = vpack.c.b16 %v900, %v899
      %v913 = vpack.c.b16 %v902, %v901
      %v914 = vpack.c.b16 %v904, %v903
      %v915 = vpack.c.b16 %v906, %v905
      %v916 = vpack.c.b16 %v908, %v907
      %925 = vmatprep.subr.bf16.mxu0 0
      %926 = vmatpush1.bf16.msra.mxu0 %v909
      %927 = vmatprep.subr.bf16.mxu0 0
      %928 = vmatpush1.bf16.msra.mxu0 %v910
      %929 = vmatprep.subr.bf16.mxu0 0
      %930 = vmatpush1.bf16.msra.mxu0 %v911
      %931 = vmatprep.subr.bf16.mxu0 0
      %932 = vmatpush1.bf16.msra.mxu0 %v912
      %933 = vmatprep.subr.bf16.mxu0 0
      %934 = vmatpush1.bf16.msra.mxu0 %v913
      %935 = vmatprep.subr.bf16.mxu0 0
      %936 = vmatpush1.bf16.msra.mxu0 %v914
      %937 = vmatprep.subr.bf16.mxu0 0
      %938 = vmatpush1.bf16.msra.mxu0 %v915
      %939 = vmatprep.subr.bf16.mxu0 0
      %940 = vmatpush1.bf16.msra.mxu0 %v916
      %941 = vmatprep.subr.bf16.mxu0 0
      %942 = vmatpush1.bf16.msra.mxu0 0
      %943 = vmatprep.subr.bf16.mxu0 0
      %944 = vmatpush1.bf16.msra.mxu0 0
      %945 = vmatprep.subr.bf16.mxu0 0
      %946 = vmatpush1.bf16.msra.mxu0 0
      %947 = vmatprep.subr.bf16.mxu0 0
      %948 = vmatpush1.bf16.msra.mxu0 0
      %949 = vmatprep.subr.bf16.mxu0 0
      %950 = vmatpush1.bf16.msra.mxu0 0
      %951 = vmatprep.subr.bf16.mxu0 0
      %952 = vmatpush1.bf16.msra.mxu0 0
      %953 = vmatprep.subr.bf16.mxu0 0
      %954 = vmatpush1.bf16.msra.mxu0 0
      %955 = vmatprep.subr.bf16.mxu0 0
      %956 = vmatpush1.bf16.msra.mxu0 0
      %957 = vmatprep.mubr.bf16.mxu0 0
      %958 = vmatmul.mubr.bf16.gmra.mrb[0].mxu0 %v853
      %v959 = vpop.f32.mrb[0].mxu0
      %v960 = vadd.f32 %v875, %v959
      %v961 = vpop.f32.mrb[0].mxu0
      %v962 = vpop.f32.mrb[0].mxu0
      %v963 = vpop.f32.mrb[0].mxu0
      %964 = vdwg.mxu0
      %v965 = vadd.f32 %v960, %v317
      %v966 = vpack.c.bf16 %v965, %v965
      %vm967 = vcmask 1043456
      %vm968 = vsmask.f32 3328
      %vm969 = vmand %vm967, %vm968
      %v970 = vld [vmem:[%s314] sm:$0xf]
      %v971 = vsel %vm969, %v966, %v970
      %972 = vst [vmem:[%s314] sm:$0xf] %v971
      %p973 = scmp.lt.s32.totalorder %s19, 1
      %s974 = scalar_select %p973, %s19, 1
      %s975 = smul.addr %s974, 4
      %s976 = scalar_lea.vmem %s8, %s975
      // Predicated region
      $region53: #{model_forward.17} parent=51 // pred_check
        %p977 = pneg %p215
      $region54: #{model_forward.17} parent=51 // pred_check_branch
        %979 = sbr.rel (%p977) target = $region56
      $region55: #{model_forward.17} parent=51 // pred_region
        _
      $region56: #{model_forward.17} parent=51 // pred_fallthru
        _
    $region52: #{model_forward.17} parent=5 // pred_fallthru
      _
    %p980 = scmp.le.s32.totalorder 2, %s14
    // Predicated region
    $region57: #{model_forward.17} parent=5 // pred_check
      %p981 = pneg %p980
    $region58: #{model_forward.17} parent=5 // pred_check_branch
      %983 = sbr.rel (%p981) target = $region60
    $region59: #{model_forward.17} parent=5 // pred_region
      %s984 = ssub.s32 %s14, 2
      // Predicated region
      $region61: #{model_forward.17} parent=59 // pred_check
        %p985 = pneg %p221
      $region62: #{model_forward.17} parent=59 // pred_check_branch
        %987 = sbr.rel (%p985) target = $region64
      $region63: #{model_forward.17} parent=59 // pred_region
        %p988 = scmp.lt.s32.totalorder %s20, 1
        %s989 = scalar_select %p988, %s20, 1
        %s990 = smul.addr %s989, 4
        %s991 = scalar_lea.vmem %s8, %s990
      $region64: #{model_forward.17} parent=59 // pred_fallthru
        _
    $region60: #{model_forward.17} parent=5 // pred_fallthru
      _
  $region6: #{model_forward.17} parent=0 // loop_footer
    %s18 = sadd.s32 1, %s14
  $region7: #{model_forward.17} parent=0 // loop_footer_branch
    %13 = sbr.rel target = $region3
  $region8: #{model_forward.17} parent=0 // loop_exit
    _

// kernel: model_forward.18
$region0: #{model_forward.18}
  #allocation0 [shape = 'u32[]', space=smem, size = 0x4, offset = 0x4, fixed_abs, tag = 'smem constant byte address 0x4 - core index']
  #allocation1 [shape = 'u32[144,128]{1,0:T(1,128)}', space=vmem, size = 0x12000, scoped, tag = 'internal scratch']
  %s0 = inlined_call_operand.vmem [shape: bf16[2,7,128], index: 0, kind: input, shape index: {}]
  %s1 = inlined_call_operand.vmem [shape: bf16[2,16,128], index: 1, kind: input, shape index: {}]
  %s2 = inlined_call_operand.vmem [shape: bf16[128,128], index: 2, kind: input, shape index: {}]
  %s3 = inlined_call_operand.vmem [shape: f32[1,128], index: 3, kind: input, shape index: {}]
  %s4 = inlined_call_operand.vmem [shape: bf16[128,256], index: 4, kind: input, shape index: {}]
  %s5 = inlined_call_operand.vmem [shape: f32[1,256], index: 5, kind: input, shape index: {}]
  %s6 = inlined_call_operand.vmem [shape: bf16[128,128], index: 6, kind: input, shape index: {}]
  %s7 = inlined_call_operand.vmem [shape: f32[1,128], index: 7, kind: input, shape index: {}]
  %s8 = inlined_call_operand.vmem [shape: f32[1,128], index: 8, kind: input, shape index: {}]
  %s9 = inlined_call_operand.vmem [shape: f32[1,128], index: 9, kind: input, shape index: {}]
  %s10 = inlined_call_operand.vmem [shape: f32[2,1,16], index: 10, kind: input, shape index: {}]
  %s11 = inlined_call_operand.vmem [shape: bf16[2,7,128], index: 11, kind: output, shape index: {}]
  %s12 = sld [smem:[#allocation0]]
  $region77: #{model_forward.18} parent=0
    _
  %s14 = ssub.s32 1, %s12
  %s15 = scalar_select 0, %s14, %s12
  loop: start=0, step=1, limit=4
  $region2: #{model_forward.18} parent=0 // loop_pre_header
    _
  $region3: #{model_forward.18} parent=0 // loop_header
    %s17 = sphi 0, %s21
    %p18 = scmp.ge.s32.totalorder %s17, 4
    %s27 = sphi 0, %s29
    %s30 = sphi 0, %s27
    %s31 = sphi 0, %s30
    %s47 = sphi 0, %s31
    %s53 = sphi 0, %s55
    %s56 = sphi 0, %s53
    %s57 = sphi 0, %s56
    %s73 = sphi 0, %s57
    %s77 = sphi 0, %s77
    %s79 = sphi 0, %s77
    %s80 = sphi 0, %s79
    %s94 = sphi 0, %s80
    %s98 = sphi 0, %s98
    %s100 = sphi 0, %s98
    %s101 = sphi 0, %s100
    %s115 = sphi 0, %s101
    %s119 = sphi 0, %s119
    %s121 = sphi 0, %s119
    %s122 = sphi 0, %s121
    %s136 = sphi 0, %s122
    %s140 = sphi 0, %s140
    %s142 = sphi 0, %s140
    %s143 = sphi 0, %s142
    %s157 = sphi 0, %s143
    %s161 = sphi 0, %s161
    %s163 = sphi 0, %s161
    %s164 = sphi 0, %s163
    %s178 = sphi 0, %s164
    %s182 = sphi 0, %s182
    %s184 = sphi 0, %s182
    %s185 = sphi 0, %s184
    %s199 = sphi 0, %s185
    %s203 = sphi 0, %s203
    %s205 = sphi 0, %s203
    %s206 = sphi 0, %s205
    %s220 = sphi 0, %s206
    %s224 = sphi 0, %s224
    %s226 = sphi 0, %s224
    %s227 = sphi 0, %s226
    %s241 = sphi 0, %s227
    %s247 = sphi 0, %s249
    %s250 = sphi 0, %s247
    %s251 = sphi 0, %s250
    %s267 = sphi 0, %s251
    %s273 = sphi 0, %s275
    %s276 = sphi 0, %s273
    %s277 = sphi 0, %s276
    %s293 = sphi 0, %s277
  $region4: #{model_forward.18} parent=0 // loop_header_branch
    %20 = sbr.rel (%p18) target = $region8
  $region5: #{model_forward.18} parent=0 // loop_body
    %s22 = ssub.s32 %s17, 1
    %s23 = ssub.s32 %s17, 2
    %s24 = sadd.s32 %s17, 1
    %s25 = ssub.s32 %s17, %s24
    %p26 = scmp.eq.s32.totalorder %s25, 0
    %s28 = sadd.s32 %s27, 1
    %s29 = scalar_select %p26, %s27, %s28
    %p32 = pneg %p26
    %p33 = scmp.eq.s32.totalorder %s17, 1
    %p34 = por %p32, %p33
    %p35 = scmp.ne.s32.totalorder %s27, %s30
    %p36 = scmp.eq.s32.totalorder %s17, 0
    %p37 = por %p35, %p36
    %p38 = scmp.ne.s32.totalorder %s27, %s30
    %p39 = scmp.eq.s32.totalorder %s22, 1
    %p40 = por %p38, %p39
    %p41 = scmp.ne.s32.totalorder %s30, %s31
    %p42 = scmp.eq.s32.totalorder %s22, 0
    %p43 = por %p41, %p42
    %p44 = scmp.ne.s32.totalorder %s30, %s31
    %p45 = scmp.eq.s32.totalorder %s23, 1
    %p46 = por %p44, %p45
    %p48 = scmp.ne.s32.totalorder %s31, %s47
    %p49 = scmp.eq.s32.totalorder %s23, 0
    %p50 = por %p48, %p49
    %s51 = ssub.s32 %s17, %s24
    %p52 = scmp.eq.s32.totalorder %s51, 0
    %s54 = sadd.s32 %s53, 1
    %s55 = scalar_select %p52, %s53, %s54
    %p58 = pneg %p52
    %p59 = scmp.eq.s32.totalorder %s17, 1
    %p60 = por %p58, %p59
    %p61 = scmp.ne.s32.totalorder %s53, %s56
    %p62 = scmp.eq.s32.totalorder %s17, 0
    %p63 = por %p61, %p62
    %p64 = scmp.ne.s32.totalorder %s53, %s56
    %p65 = scmp.eq.s32.totalorder %s22, 1
    %p66 = por %p64, %p65
    %p67 = scmp.ne.s32.totalorder %s56, %s57
    %p68 = scmp.eq.s32.totalorder %s22, 0
    %p69 = por %p67, %p68
    %p70 = scmp.ne.s32.totalorder %s56, %s57
    %p71 = scmp.eq.s32.totalorder %s23, 1
    %p72 = por %p70, %p71
    %p74 = scmp.ne.s32.totalorder %s57, %s73
    %p75 = scmp.eq.s32.totalorder %s23, 0
    %p76 = por %p74, %p75
    %s78 = sadd.s32 %s77, 1
    %p81 = scmp.eq.s32.totalorder %s17, 1
    %p82 = scmp.ne.s32.totalorder %s77, %s79
    %p83 = scmp.eq.s32.totalorder %s17, 0
    %p84 = por %p82, %p83
    %p85 = scmp.ne.s32.totalorder %s77, %s79
    %p86 = scmp.eq.s32.totalorder %s22, 1
    %p87 = por %p85, %p86
    %p88 = scmp.ne.s32.totalorder %s79, %s80
    %p89 = scmp.eq.s32.totalorder %s22, 0
    %p90 = por %p88, %p89
    %p91 = scmp.ne.s32.totalorder %s79, %s80
    %p92 = scmp.eq.s32.totalorder %s23, 1
    %p93 = por %p91, %p92
    %p95 = scmp.ne.s32.totalorder %s80, %s94
    %p96 = scmp.eq.s32.totalorder %s23, 0
    %p97 = por %p95, %p96
    %s99 = sadd.s32 %s98, 1
    %p102 = scmp.eq.s32.totalorder %s17, 1
    %p103 = scmp.ne.s32.totalorder %s98, %s100
    %p104 = scmp.eq.s32.totalorder %s17, 0
    %p105 = por %p103, %p104
    %p106 = scmp.ne.s32.totalorder %s98, %s100
    %p107 = scmp.eq.s32.totalorder %s22, 1
    %p108 = por %p106, %p107
    %p109 = scmp.ne.s32.totalorder %s100, %s101
    %p110 = scmp.eq.s32.totalorder %s22, 0
    %p111 = por %p109, %p110
    %p112 = scmp.ne.s32.totalorder %s100, %s101
    %p113 = scmp.eq.s32.totalorder %s23, 1
    %p114 = por %p112, %p113
    %p116 = scmp.ne.s32.totalorder %s101, %s115
    %p117 = scmp.eq.s32.totalorder %s23, 0
    %p118 = por %p116, %p117
    %s120 = sadd.s32 %s119, 1
    %p123 = scmp.eq.s32.totalorder %s17, 1
    %p124 = scmp.ne.s32.totalorder %s119, %s121
    %p125 = scmp.eq.s32.totalorder %s17, 0
    %p126 = por %p124, %p125
    %p127 = scmp.ne.s32.totalorder %s119, %s121
    %p128 = scmp.eq.s32.totalorder %s22, 1
    %p129 = por %p127, %p128
    %p130 = scmp.ne.s32.totalorder %s121, %s122
    %p131 = scmp.eq.s32.totalorder %s22, 0
    %p132 = por %p130, %p131
    %p133 = scmp.ne.s32.totalorder %s121, %s122
    %p134 = scmp.eq.s32.totalorder %s23, 1
    %p135 = por %p133, %p134
    %p137 = scmp.ne.s32.totalorder %s122, %s136
    %p138 = scmp.eq.s32.totalorder %s23, 0
    %p139 = por %p137, %p138
    %s141 = sadd.s32 %s140, 1
    %p144 = scmp.eq.s32.totalorder %s17, 1
    %p145 = scmp.ne.s32.totalorder %s140, %s142
    %p146 = scmp.eq.s32.totalorder %s17, 0
    %p147 = por %p145, %p146
    %p148 = scmp.ne.s32.totalorder %s140, %s142
    %p149 = scmp.eq.s32.totalorder %s22, 1
    %p150 = por %p148, %p149
    %p151 = scmp.ne.s32.totalorder %s142, %s143
    %p152 = scmp.eq.s32.totalorder %s22, 0
    %p153 = por %p151, %p152
    %p154 = scmp.ne.s32.totalorder %s142, %s143
    %p155 = scmp.eq.s32.totalorder %s23, 1
    %p156 = por %p154, %p155
    %p158 = scmp.ne.s32.totalorder %s143, %s157
    %p159 = scmp.eq.s32.totalorder %s23, 0
    %p160 = por %p158, %p159
    %s162 = sadd.s32 %s161, 1
    %p165 = scmp.eq.s32.totalorder %s17, 1
    %p166 = scmp.ne.s32.totalorder %s161, %s163
    %p167 = scmp.eq.s32.totalorder %s17, 0
    %p168 = por %p166, %p167
    %p169 = scmp.ne.s32.totalorder %s161, %s163
    %p170 = scmp.eq.s32.totalorder %s22, 1
    %p171 = por %p169, %p170
    %p172 = scmp.ne.s32.totalorder %s163, %s164
    %p173 = scmp.eq.s32.totalorder %s22, 0
    %p174 = por %p172, %p173
    %p175 = scmp.ne.s32.totalorder %s163, %s164
    %p176 = scmp.eq.s32.totalorder %s23, 1
    %p177 = por %p175, %p176
    %p179 = scmp.ne.s32.totalorder %s164, %s178
    %p180 = scmp.eq.s32.totalorder %s23, 0
    %p181 = por %p179, %p180
    %s183 = sadd.s32 %s182, 1
    %p186 = scmp.eq.s32.totalorder %s17, 1
    %p187 = scmp.ne.s32.totalorder %s182, %s184
    %p188 = scmp.eq.s32.totalorder %s17, 0
    %p189 = por %p187, %p188
    %p190 = scmp.ne.s32.totalorder %s182, %s184
    %p191 = scmp.eq.s32.totalorder %s22, 1
    %p192 = por %p190, %p191
    %p193 = scmp.ne.s32.totalorder %s184, %s185
    %p194 = scmp.eq.s32.totalorder %s22, 0
    %p195 = por %p193, %p194
    %p196 = scmp.ne.s32.totalorder %s184, %s185
    %p197 = scmp.eq.s32.totalorder %s23, 1
    %p198 = por %p196, %p197
    %p200 = scmp.ne.s32.totalorder %s185, %s199
    %p201 = scmp.eq.s32.totalorder %s23, 0
    %p202 = por %p200, %p201
    %s204 = sadd.s32 %s203, 1
    %p207 = scmp.eq.s32.totalorder %s17, 1
    %p208 = scmp.ne.s32.totalorder %s203, %s205
    %p209 = scmp.eq.s32.totalorder %s17, 0
    %p210 = por %p208, %p209
    %p211 = scmp.ne.s32.totalorder %s203, %s205
    %p212 = scmp.eq.s32.totalorder %s22, 1
    %p213 = por %p211, %p212
    %p214 = scmp.ne.s32.totalorder %s205, %s206
    %p215 = scmp.eq.s32.totalorder %s22, 0
    %p216 = por %p214, %p215
    %p217 = scmp.ne.s32.totalorder %s205, %s206
    %p218 = scmp.eq.s32.totalorder %s23, 1
    %p219 = por %p217, %p218
    %p221 = scmp.ne.s32.totalorder %s206, %s220
    %p222 = scmp.eq.s32.totalorder %s23, 0
    %p223 = por %p221, %p222
    %s225 = sadd.s32 %s224, 1
    %p228 = scmp.eq.s32.totalorder %s17, 1
    %p229 = scmp.ne.s32.totalorder %s224, %s226
    %p230 = scmp.eq.s32.totalorder %s17, 0
    %p231 = por %p229, %p230
    %p232 = scmp.ne.s32.totalorder %s224, %s226
    %p233 = scmp.eq.s32.totalorder %s22, 1
    %p234 = por %p232, %p233
    %p235 = scmp.ne.s32.totalorder %s226, %s227
    %p236 = scmp.eq.s32.totalorder %s22, 0
    %p237 = por %p235, %p236
    %p238 = scmp.ne.s32.totalorder %s226, %s227
    %p239 = scmp.eq.s32.totalorder %s23, 1
    %p240 = por %p238, %p239
    %p242 = scmp.ne.s32.totalorder %s227, %s241
    %p243 = scmp.eq.s32.totalorder %s23, 0
    %p244 = por %p242, %p243
    %s245 = ssub.s32 %s17, %s24
    %p246 = scmp.eq.s32.totalorder %s245, 0
    %s248 = sadd.s32 %s247, 1
    %s249 = scalar_select %p246, %s247, %s248
    %p252 = pneg %p246
    %p253 = scmp.eq.s32.totalorder %s17, 1
    %p254 = por %p252, %p253
    %p255 = scmp.ne.s32.totalorder %s247, %s250
    %p256 = scmp.eq.s32.totalorder %s17, 0
    %p257 = por %p255, %p256
    %p258 = scmp.ne.s32.totalorder %s247, %s250
    %p259 = scmp.eq.s32.totalorder %s22, 1
    %p260 = por %p258, %p259
    %p261 = scmp.ne.s32.totalorder %s250, %s251
    %p262 = scmp.eq.s32.totalorder %s22, 0
    %p263 = por %p261, %p262
    %p264 = scmp.ne.s32.totalorder %s250, %s251
    %p265 = scmp.eq.s32.totalorder %s23, 1
    %p266 = por %p264, %p265
    %p268 = scmp.ne.s32.totalorder %s251, %s267
    %p269 = scmp.eq.s32.totalorder %s23, 0
    %p270 = por %p268, %p269
    %s271 = ssub.s32 %s17, %s24
    %p272 = scmp.eq.s32.totalorder %s271, 0
    %s274 = sadd.s32 %s273, 1
    %s275 = scalar_select %p272, %s273, %s274
    %p278 = pneg %p272
    %p279 = scmp.eq.s32.totalorder %s17, 1
    %p280 = por %p278, %p279
    %p281 = scmp.ne.s32.totalorder %s273, %s276
    %p282 = scmp.eq.s32.totalorder %s17, 0
    %p283 = por %p281, %p282
    %p284 = scmp.ne.s32.totalorder %s273, %s276
    %p285 = scmp.eq.s32.totalorder %s22, 1
    %p286 = por %p284, %p285
    %p287 = scmp.ne.s32.totalorder %s276, %s277
    %p288 = scmp.eq.s32.totalorder %s22, 0
    %p289 = por %p287, %p288
    %p290 = scmp.ne.s32.totalorder %s276, %s277
    %p291 = scmp.eq.s32.totalorder %s23, 1
    %p292 = por %p290, %p291
    %p294 = scmp.ne.s32.totalorder %s277, %s293
    %p295 = scmp.eq.s32.totalorder %s23, 0
    %p296 = por %p294, %p295
    %p297 = scmp.le.s32.totalorder 1, %s17
    %p298 = scmp.lt.s32.totalorder %s17, 3
    %p299 = pnand %p297, %p298
    %p300 = pneg %p299
    // Predicated region
    $region9: #{model_forward.18} parent=5 // pred_check
      _
    $region10: #{model_forward.18} parent=5 // pred_check_branch
      %302 = sbr.rel (%p299) target = $region12
    $region11: #{model_forward.18} parent=5 // pred_region
      %s303 = ssub.s32 %s17, 1
      // Predicated region
      $region13: #{model_forward.18} parent=11 // pred_check
        %p304 = pneg %p90
      $region14: #{model_forward.18} parent=11 // pred_check_branch
        %306 = sbr.rel (%p304) target = $region16
      $region15: #{model_forward.18} parent=11 // pred_region
        _
      $region16: #{model_forward.18} parent=11 // pred_fallthru
        _
      // Predicated region
      $region17: #{model_forward.18} parent=11 // pred_check
        %p307 = pneg %p111
      $region18: #{model_forward.18} parent=11 // pred_check_branch
        %309 = sbr.rel (%p307) target = $region20
      $region19: #{model_forward.18} parent=11 // pred_region
        _
      $region20: #{model_forward.18} parent=11 // pred_fallthru
        _
      // Predicated region
      $region21: #{model_forward.18} parent=11 // pred_check
        %p310 = pneg %p132
      $region22: #{model_forward.18} parent=11 // pred_check_branch
        %312 = sbr.rel (%p310) target = $region24
      $region23: #{model_forward.18} parent=11 // pred_region
        _
      $region24: #{model_forward.18} parent=11 // pred_fallthru
        _
      // Predicated region
      $region25: #{model_forward.18} parent=11 // pred_check
        %p313 = pneg %p153
      $region26: #{model_forward.18} parent=11 // pred_check_branch
        %315 = sbr.rel (%p313) target = $region28
      $region27: #{model_forward.18} parent=11 // pred_region
        _
      $region28: #{model_forward.18} parent=11 // pred_fallthru
        _
      // Predicated region
      $region29: #{model_forward.18} parent=11 // pred_check
        %p316 = pneg %p174
      $region30: #{model_forward.18} parent=11 // pred_check_branch
        %318 = sbr.rel (%p316) target = $region32
      $region31: #{model_forward.18} parent=11 // pred_region
        _
      $region32: #{model_forward.18} parent=11 // pred_fallthru
        _
      // Predicated region
      $region33: #{model_forward.18} parent=11 // pred_check
        %p319 = pneg %p195
      $region34: #{model_forward.18} parent=11 // pred_check_branch
        %321 = sbr.rel (%p319) target = $region36
      $region35: #{model_forward.18} parent=11 // pred_region
        _
      $region36: #{model_forward.18} parent=11 // pred_fallthru
        _
      // Predicated region
      $region37: #{model_forward.18} parent=11 // pred_check
        %p322 = pneg %p216
      $region38: #{model_forward.18} parent=11 // pred_check_branch
        %324 = sbr.rel (%p322) target = $region40
      $region39: #{model_forward.18} parent=11 // pred_region
        _
      $region40: #{model_forward.18} parent=11 // pred_fallthru
        _
      // Predicated region
      $region41: #{model_forward.18} parent=11 // pred_check
        %p325 = pneg %p237
      $region42: #{model_forward.18} parent=11 // pred_check_branch
        %327 = sbr.rel (%p325) target = $region44
      $region43: #{model_forward.18} parent=11 // pred_region
        _
      $region44: #{model_forward.18} parent=11 // pred_fallthru
        _
    $region12: #{model_forward.18} parent=5 // pred_fallthru
      _
    %p328 = scmp.lt.s32.totalorder %s17, 2
    // Predicated region
    $region45: #{model_forward.18} parent=5 // pred_check
      %p329 = pneg %p328
    $region46: #{model_forward.18} parent=5 // pred_check_branch
      %331 = sbr.rel (%p329) target = $region48
    $region47: #{model_forward.18} parent=5 // pred_region
      // Predicated region
      $region49: #{model_forward.18} parent=47 // pred_check
        %p332 = pneg %p37
      $region50: #{model_forward.18} parent=47 // pred_check_branch
        %334 = sbr.rel (%p332) target = $region52
      $region51: #{model_forward.18} parent=47 // pred_region
        %p335 = scmp.lt.s32.totalorder %s17, 1
        %s336 = scalar_select %p335, %s17, 1
        %s337 = smul.addr %s336, 4
        %s338 = scalar_lea.vmem %s0, %s337
      $region52: #{model_forward.18} parent=47 // pred_fallthru
        _
      // Predicated region
      $region53: #{model_forward.18} parent=47 // pred_check
        %p339 = pneg %p63
      $region54: #{model_forward.18} parent=47 // pred_check_branch
        %341 = sbr.rel (%p339) target = $region56
      $region55: #{model_forward.18} parent=47 // pred_region
        %p342 = scmp.lt.s32.totalorder %s17, 1
        %s343 = scalar_select %p342, %s17, 1
        %s344 = smul.addr %s343, 2
        %s345 = smul.addr %s344, 4
        %s346 = scalar_lea.vmem %s1, %s345
      $region56: #{model_forward.18} parent=47 // pred_fallthru
        _
      // Predicated region
      $region57: #{model_forward.18} parent=47 // pred_check
        %p347 = pneg %p257
      $region58: #{model_forward.18} parent=47 // pred_check_branch
        %349 = sbr.rel (%p347) target = $region60
      $region59: #{model_forward.18} parent=47 // pred_region
        %p350 = scmp.lt.s32.totalorder %s17, 1
        %s351 = scalar_select %p350, %s17, 1
        %s352 = scalar_lea.vmem %s10, %s351
      $region60: #{model_forward.18} parent=47 // pred_fallthru
        _
    $region48: #{model_forward.18} parent=5 // pred_fallthru
      _
    %p353 = scmp.le.s32.totalorder 1, %s17
    %p354 = scmp.lt.s32.totalorder %s17, 3
    %p355 = pnand %p353, %p354
    %p356 = pneg %p355
    // Predicated region
    $region61: #{model_forward.18} parent=5 // pred_check
      _
    $region62: #{model_forward.18} parent=5 // pred_check_branch
      %358 = sbr.rel (%p355) target = $region64
    $region63: #{model_forward.18} parent=5 // pred_region
      %s359 = ssub.s32 %s17, 1
      %p360 = scmp.lt.s32.totalorder %s22, 1
      %s361 = scalar_select %p360, %s22, 1
      %s362 = smul.addr %s361, 4
      %s363 = scalar_lea.vmem %s0, %s362
      %p364 = pneg %p43
      %p365 = pneg %p40
      %p366 = scmp.lt.s32.totalorder %s22, 1
      %s367 = scalar_select %p366, %s22, 1
      %s368 = smul.addr %s367, 2
      %s369 = smul.addr %s368, 4
      %s370 = scalar_lea.vmem %s1, %s369
      %p371 = pneg %p69
      %p372 = pneg %p66
      %p373 = pneg %p90
      %p374 = pneg %p87
      %p375 = pneg %p111
      %p376 = pneg %p108
      %p377 = pneg %p132
      %p378 = pneg %p129
      %p379 = pneg %p153
      %p380 = pneg %p150
      %p381 = pneg %p174
      %p382 = pneg %p171
      %p383 = pneg %p195
      %p384 = pneg %p192
      %p385 = pneg %p216
      %p386 = pneg %p213
      %p387 = pneg %p237
      %p388 = pneg %p234
      %p389 = scmp.lt.s32.totalorder %s22, 1
      %s390 = scalar_select %p389, %s22, 1
      %s391 = scalar_lea.vmem %s10, %s390
      %p392 = pneg %p263
      %p393 = pneg %p260
      %p394 = pneg %p289
      %p395 = pneg %p286
      %p396 = scmp.lt.s32.totalorder %s22, 1
      %s397 = scalar_select %p396, %s22, 1
      %s398 = smul.addr %s397, 4
      %s399 = scalar_lea.vmem %s11, %s398
      %p400 = scmp.lt.s32.totalorder %s22, 1
      %s401 = scalar_select %p400, %s22, 1
      %s402 = smul.addr %s401, 4
      %s403 = scalar_lea.vmem %s0, %s402
      %p404 = scmp.lt.s32.totalorder %s22, 1
      %s405 = scalar_select %p404, %s22, 1
      %s406 = smul.addr %s405, 2
      %s407 = smul.addr %s406, 4
      %s408 = scalar_lea.vmem %s1, %s407
      %p409 = scmp.lt.s32.totalorder %s22, 1
      %s410 = scalar_select %p409, %s22, 1
      %s411 = scalar_lea.vmem %s10, %s410
      %p412 = scmp.lt.s32.totalorder %s22, 1
      %s413 = scalar_select %p412, %s22, 1
      %s414 = smul.addr %s413, 4
      %s415 = scalar_lea.vmem %s11, %s414
      %v417 = vld [vmem:[%s403] sm:$0xf]
      %v418 = vunpack.c.l.bf16 %v417
      %v419 = vld [vmem:[%s408] sm:$0xf]
      %v420 = vld [vmem:[%s408 + $0x4] sm:$0xf]
      %v421 = vld [vmem:[%s8] sm:$0x1]
      %v422 = vld [vmem:[%s9] sm:$0x1]
      %vm423 = vcmask 1046528
      %v424 = vsel %vm423, %v418, 0.0
      %425 = vadd.xlane.f32.xlu0 %v424
      %v426 = vpop.xlane.xlu0 %425
      %v427 = vrcp.pop 128.0
      %v428 = vmul.f32 %v426, %v427
      %v429 = vsub.f32 %v418, %v428
      %v430 = vmul.f32 %v429, %v429
      %v431 = vsel %vm423, %v430, 0.0
      %432 = vadd.xlane.f32.xlu0 %v431
      %v433 = vpop.xlane.xlu0 %432
      %v434 = vmul.f32 %v433, %v427
      %v435 = vadd.f32 %v434, 1e-06
      %v436 = vrsqrt.pop %v435
      %v437 = vmul.f32 %v429, %v436
      %v439 = vlaneseq
      %v440 = vshrl.u32 %v439, 7
      %v441 = vsub.s32 0, %v440
      %v442 = vrot.slane %v421, %v441
      %v444 = vmul.f32 %v437, %v442
      %v446 = vlaneseq
      %v447 = vshrl.u32 %v446, 7
      %v448 = vsub.s32 0, %v447
      %v449 = vrot.slane %v422, %v448
      %v451 = vadd.f32 %v444, %v449
      %v452 = vpack.c.bf16 %v451, %v451
      %v453 = vld [vmem:[%s2] sm:$0xf]
      %v454 = vld [vmem:[%s2 + $0x4] sm:$0xf]
      %v455 = vld [vmem:[%s2 + $0x8] sm:$0xf]
      %v456 = vld [vmem:[%s2 + $0xc] sm:$0xf]
      %v457 = vld [vmem:[%s2 + $0x10] sm:$0xf]
      %v458 = vld [vmem:[%s2 + $0x14] sm:$0xf]
      %v459 = vld [vmem:[%s2 + $0x18] sm:$0xf]
      %v460 = vld [vmem:[%s2 + $0x1c] sm:$0xf]
      %v461 = vld [vmem:[%s2 + $0x20] sm:$0xf]
      %v462 = vld [vmem:[%s2 + $0x24] sm:$0xf]
      %v463 = vld [vmem:[%s2 + $0x28] sm:$0xf]
      %v464 = vld [vmem:[%s2 + $0x2c] sm:$0xf]
      %v465 = vld [vmem:[%s2 + $0x30] sm:$0xf]
      %v466 = vld [vmem:[%s2 + $0x34] sm:$0xf]
      %v467 = vld [vmem:[%s2 + $0x38] sm:$0xf]
      %v468 = vld [vmem:[%s2 + $0x3c] sm:$0xf]
      %v469 = vld [vmem:[%s3] sm:$0x1]
      %v471 = vlaneseq
      %v472 = vshrl.u32 %v471, 7
      %v473 = vsub.s32 0, %v472
      %v474 = vrot.slane %v469, %v473
      %v492 = vunpack.c.l.b16 %v453
      %v493 = vunpack.c.l.b16 %v454
      %v494 = vunpack.c.l.b16 %v455
      %v495 = vunpack.c.l.b16 %v456
      %v496 = vunpack.c.l.b16 %v457
      %v497 = vunpack.c.l.b16 %v458
      %v498 = vunpack.c.l.b16 %v459
      %v499 = vunpack.c.l.b16 %v460
      %v500 = vunpack.c.l.b16 %v461
      %v501 = vunpack.c.l.b16 %v462
      %v502 = vunpack.c.l.b16 %v463
      %v503 = vunpack.c.l.b16 %v464
      %v504 = vunpack.c.l.b16 %v465
      %v505 = vunpack.c.l.b16 %v466
      %v506 = vunpack.c.l.b16 %v467
      %v507 = vunpack.c.l.b16 %v468
      %v508 = vpack.c.b16 %v493, %v492
      %v509 = vpack.c.b16 %v495, %v494
      %v510 = vpack.c.b16 %v497, %v496
      %v511 = vpack.c.b16 %v499, %v498
      %v512 = vpack.c.b16 %v501, %v500
      %v513 = vpack.c.b16 %v503, %v502
      %v514 = vpack.c.b16 %v505, %v504
      %v515 = vpack.c.b16 %v507, %v506
      %524 = vmatprep.subr.bf16.mxu0 0
      %525 = vmatpush1.bf16.msra.mxu0 %v508
      %526 = vmatprep.subr.bf16.mxu0 0
      %527 = vmatpush1.bf16.msra.mxu0 %v509
      %528 = vmatprep.subr.bf16.mxu0 0
      %529 = vmatpush1.bf16.msra.mxu0 %v510
      %530 = vmatprep.subr.bf16.mxu0 0
      %531 = vmatpush1.bf16.msra.mxu0 %v511
      %532 = vmatprep.subr.bf16.mxu0 0
      %533 = vmatpush1.bf16.msra.mxu0 %v512
      %534 = vmatprep.subr.bf16.mxu0 0
      %535 = vmatpush1.bf16.msra.mxu0 %v513
      %536 = vmatprep.subr.bf16.mxu0 0
      %537 = vmatpush1.bf16.msra.mxu0 %v514
      %538 = vmatprep.subr.bf16.mxu0 0
      %539 = vmatpush1.bf16.msra.mxu0 %v515
      %540 = vmatprep.subr.bf16.mxu0 0
      %541 = vmatpush1.bf16.msra.mxu0 0
      %542 = vmatprep.subr.bf16.mxu0 0
      %543 = vmatpush1.bf16.msra.mxu0 0
      %544 = vmatprep.subr.bf16.mxu0 0
      %545 = vmatpush1.bf16.msra.mxu0 0
      %546 = vmatprep.subr.bf16.mxu0 0
      %547 = vmatpush1.bf16.msra.mxu0 0
      %548 = vmatprep.subr.bf16.mxu0 0
      %549 = vmatpush1.bf16.msra.mxu0 0
      %550 = vmatprep.subr.bf16.mxu0 0
      %551 = vmatpush1.bf16.msra.mxu0 0
      %552 = vmatprep.subr.bf16.mxu0 0
      %553 = vmatpush1.bf16.msra.mxu0 0
      %554 = vmatprep.subr.bf16.mxu0 0
      %555 = vmatpush1.bf16.msra.mxu0 0
      %556 = vmatprep.mubr.bf16.mxu0 0
      %557 = vmatmul.mubr.bf16.gmra.mrb[0].mxu0 %v452
      %v558 = vpop.f32.mrb[0].mxu0
      %v559 = vadd.f32 %v474, %v558
      %v560 = vpop.f32.mrb[0].mxu0
      %v561 = vpop.f32.mrb[0].mxu0
      %v562 = vpop.f32.mrb[0].mxu0
      %563 = vdwg.mxu0
      %v564 = vld [vmem:[%s4] sm:$0xff]
      %v565 = vld [vmem:[%s4 + $0x8] sm:$0xff]
      %v566 = vld [vmem:[%s4 + $0x10] sm:$0xff]
      %v567 = vld [vmem:[%s4 + $0x18] sm:$0xff]
      %v568 = vld [vmem:[%s4 + $0x20] sm:$0xff]
      %v569 = vld [vmem:[%s4 + $0x28] sm:$0xff]
      %v570 = vld [vmem:[%s4 + $0x30] sm:$0xff]
      %v571 = vld [vmem:[%s4 + $0x38] sm:$0xff]
      %v572 = vld [vmem:[%s4 + $0x40] sm:$0xff]
      %v573 = vld [vmem:[%s4 + $0x48] sm:$0xff]
      %v574 = vld [vmem:[%s4 + $0x50] sm:$0xff]
      %v575 = vld [vmem:[%s4 + $0x58] sm:$0xff]
      %v576 = vld [vmem:[%s4 + $0x60] sm:$0xff]
      %v577 = vld [vmem:[%s4 + $0x68] sm:$0xff]
      %v578 = vld [vmem:[%s4 + $0x70] sm:$0xff]
      %v579 = vld [vmem:[%s4 + $0x78] sm:$0xff]
      %v580 = vld [vmem:[%s5] sm:$0x3]
      %v582 = vlaneseq
      %v583 = vshrl.u32 %v582, 7
      %v584 = vsub.s32 0, %v583
      %v585 = vrot.slane %v580, %v584
      %v586 = vlaneseq
      %v587 = vshrl.u32 %v586, 7
      %v588 = vsub.s32 1, %v587
      %v589 = vrot.slane %v580, %v588
      %v594 = vunpack.c.l.b16 %v419
      %v595 = vunpack.c.l.b16 %v420
      %v596 = vpack.c.b16 %v595, %v594
      %v614 = vunpack.c.l.b16 %v564
      %v615 = vunpack.c.h.b16 %v564
      %v616 = vunpack.c.l.b16 %v565
      %v617 = vunpack.c.h.b16 %v565
      %v618 = vunpack.c.l.b16 %v566
      %v619 = vunpack.c.h.b16 %v566
      %v620 = vunpack.c.l.b16 %v567
      %v621 = vunpack.c.h.b16 %v567
      %v622 = vunpack.c.l.b16 %v568
      %v623 = vunpack.c.h.b16 %v568
      %v624 = vunpack.c.l.b16 %v569
      %v625 = vunpack.c.h.b16 %v569
      %v626 = vunpack.c.l.b16 %v570
      %v627 = vunpack.c.h.b16 %v570
      %v628 = vunpack.c.l.b16 %v571
      %v629 = vunpack.c.h.b16 %v571
      %v630 = vunpack.c.l.b16 %v572
      %v631 = vunpack.c.h.b16 %v572
      %v632 = vunpack.c.l.b16 %v573
      %v633 = vunpack.c.h.b16 %v573
      %v634 = vunpack.c.l.b16 %v574
      %v635 = vunpack.c.h.b16 %v574
      %v636 = vunpack.c.l.b16 %v575
      %v637 = vunpack.c.h.b16 %v575
      %v638 = vunpack.c.l.b16 %v576
      %v639 = vunpack.c.h.b16 %v576
      %v640 = vunpack.c.l.b16 %v577
      %v641 = vunpack.c.h.b16 %v577
      %v642 = vunpack.c.l.b16 %v578
      %v643 = vunpack.c.h.b16 %v578
      %v644 = vunpack.c.l.b16 %v579
      %v645 = vunpack.c.h.b16 %v579
      %v646 = vpack.c.b16 %v616, %v614
      %v647 = vpack.c.b16 %v617, %v615
      %v648 = vpack.c.b16 %v620, %v618
      %v649 = vpack.c.b16 %v621, %v619
      %v650 = vpack.c.b16 %v624, %v622
      %v651 = vpack.c.b16 %v625, %v623
      %v652 = vpack.c.b16 %v628, %v626
      %v653 = vpack.c.b16 %v629, %v627
      %v654 = vpack.c.b16 %v632, %v630
      %v655 = vpack.c.b16 %v633, %v631
      %v656 = vpack.c.b16 %v636, %v634
      %v657 = vpack.c.b16 %v637, %v635
      %v658 = vpack.c.b16 %v640, %v638
      %v659 = vpack.c.b16 %v641, %v639
      %v660 = vpack.c.b16 %v644, %v642
      %v661 = vpack.c.b16 %v645, %v643
      %678 = vmatprep.subr.bf16.mxu0 %v647
      %679 = vmatpush1.bf16.msra.mxu0 %v646
      %680 = vmatprep.subr.bf16.mxu0 %v649
      %681 = vmatpush1.bf16.msra.mxu0 %v648
      %682 = vmatprep.subr.bf16.mxu0 %v651
      %683 = vmatpush1.bf16.msra.mxu0 %v650
      %684 = vmatprep.subr.bf16.mxu0 %v653
      %685 = vmatpush1.bf16.msra.mxu0 %v652
      %686 = vmatprep.subr.bf16.mxu0 %v655
      %687 = vmatpush1.bf16.msra.mxu0 %v654
      %688 = vmatprep.subr.bf16.mxu0 %v657
      %689 = vmatpush1.bf16.msra.mxu0 %v656
      %690 = vmatprep.subr.bf16.mxu0 %v659
      %691 = vmatpush1.bf16.msra.mxu0 %v658
      %692 = vmatprep.subr.bf16.mxu0 %v661
      %693 = vmatpush1.bf16.msra.mxu0 %v660
      %694 = vmatprep.subr.bf16.mxu0 0
      %695 = vmatpush1.bf16.msra.mxu0 0
      %696 = vmatprep.subr.bf16.mxu0 0
      %697 = vmatpush1.bf16.msra.mxu0 0
      %698 = vmatprep.subr.bf16.mxu0 0
      %699 = vmatpush1.bf16.msra.mxu0 0
      %700 = vmatprep.subr.bf16.mxu0 0
      %701 = vmatpush1.bf16.msra.mxu0 0
      %702 = vmatprep.subr.bf16.mxu0 0
      %703 = vmatpush1.bf16.msra.mxu0 0
      %704 = vmatprep.subr.bf16.mxu0 0
      %705 = vmatpush1.bf16.msra.mxu0 0
      %706 = vmatprep.subr.bf16.mxu0 0
      %707 = vmatpush1.bf16.msra.mxu0 0
      %708 = vmatprep.subr.bf16.mxu0 0
      %709 = vmatpush1.bf16.msra.mxu0 0
      %710 = vmatprep.mubr.bf16.mxu0 0
      %711 = vmatmul.mubr.bf16.gmra.mrb[0].mxu0 %v596
      %v712 = vpop.f32.mrb[0].mxu0
      %v713 = vadd.f32 %v585, %v712
      %v714 = vpop.f32.mrb[0].mxu0
      %v715 = vadd.f32 %v589, %v714
      %v716 = vpop.f32.mrb[0].mxu0
      %v717 = vadd.f32 %v585, %v716
      %v718 = vpop.f32.mrb[0].mxu0
      %v719 = vadd.f32 %v589, %v718
      %720 = vdwg.mxu0
      %v721 = vld [vmem:[%s411] sm:$0x1]
      %v722 = vpack.c.bf16 %v559, %v559
      %v723 = vpack.c.bf16 %v717, %v713
      %v724 = vpack.c.bf16 %v719, %v715
      %v726 = vlaneseq
      %v727 = vshrl.u32 %v726, 7
      %v728 = vsub.s32 0, %v727
      %v729 = vrot.slane %v721, %v728
      %vm731 = vcmask 523264
      %v733 = vsel %vm731, %v722, 0
      %v736 = vsel %vm731, %v723, 0
      %738 = vmatprep.subr.bf16.mxu0 0
      %739 = vmatpush1.bf16.xpose.msra.mxu0 %v736
      %740 = vmatprep.subr.bf16.mxu0 0
      %741 = vmatpush1.bf16.xpose.msra.mxu0 0
      %742 = vmatprep.subr.bf16.mxu0 0
      %743 = vmatpush1.bf16.xpose.msra.mxu0 0
      %744 = vmatprep.subr.bf16.mxu0 0
      %745 = vmatpush1.bf16.xpose.msra.mxu0 0
      %746 = vmatprep.subr.bf16.mxu0 0
      %747 = vmatpush1.bf16.xpose.msra.mxu0 0
      %748 = vmatprep.subr.bf16.mxu0 0
      %749 = vmatpush1.bf16.xpose.msra.mxu0 0
      %750 = vmatprep.subr.bf16.mxu0 0
      %751 = vmatpush1.bf16.xpose.msra.mxu0 0
      %752 = vmatprep.subr.bf16.mxu0 0
      %753 = vmatpush1.bf16.xpose.msra.mxu0 0
      %754 = vmatprep.subr.bf16.mxu0 0
      %755 = vmatpush1.bf16.xpose.msra.mxu0 0
      %756 = vmatprep.subr.bf16.mxu0 0
      %757 = vmatpush1.bf16.xpose.msra.mxu0 0
      %758 = vmatprep.subr.bf16.mxu0 0
      %759 = vmatpush1.bf16.xpose.msra.mxu0 0
      %760 = vmatprep.subr.bf16.mxu0 0
      %761 = vmatpush1.bf16.xpose.msra.mxu0 0
      %762 = vmatprep.subr.bf16.mxu0 0
      %763 = vmatpush1.bf16.xpose.msra.mxu0 0
      %764 = vmatprep.subr.bf16.mxu0 0
      %765 = vmatpush1.bf16.xpose.msra.mxu0 0
      %766 = vmatprep.subr.bf16.mxu0 0
      %767 = vmatpush1.bf16.xpose.msra.mxu0 0
      %768 = vmatprep.subr.bf16.mxu0 0
      %769 = vmatpush1.bf16.xpose.msra.mxu0 0
      %770 = vmatprep.mubr.bf16.mxu0 0
      %771 = vmatmul.mubr.bf16.gmra.mrb[0].mxu0 %v733
      %v772 = vpop.f32.mrb[0].mxu0
      %v773 = vadd.f32 %v729, %v772
      %v774 = vpop.f32.mrb[0].mxu0
      %v775 = vpop.f32.mrb[0].mxu0
      %v776 = vpop.f32.mrb[0].mxu0
      %777 = vdwg.mxu0
      %vm778 = vcmask 129024
      %v779 = vsel %vm778, %v773, -inf
      %780 = vmax.xlane.f32.xlu0 %v779
      %v781 = vpop.xlane.xlu0 %780
      %v782 = vsub.f32 %v773, %v781
      %v783 = vmul.f32 %v782, 1.442695
      %v784 = vpow.pop %v783
      %v785 = vsel %vm778, %v784, 0.0
      %786 = vadd.xlane.f32.xlu0 %v785
      %v787 = vpop.xlane.xlu0 %786
      %v788 = vrcp.pop %v787
      %v789 = vmul.f32 %v784, %v788
      %v790 = vpack.c.bf16 %v789, %v789
      %vm791 = vcmask 130048
      %v793 = vsel %vm791, %v790, 0
      %795 = vmatprep.subr.bf16.mxu0 0
      %796 = vmatpush1.bf16.msra.mxu0 %v724
      %797 = vmatprep.subr.bf16.mxu0 0
      %798 = vmatpush1.bf16.msra.mxu0 0
      %799 = vmatprep.subr.bf16.mxu0 0
      %800 = vmatpush1.bf16.msra.mxu0 0
      %801 = vmatprep.subr.bf16.mxu0 0
      %802 = vmatpush1.bf16.msra.mxu0 0
      %803 = vmatprep.subr.bf16.mxu0 0
      %804 = vmatpush1.bf16.msra.mxu0 0
      %805 = vmatprep.subr.bf16.mxu0 0
      %806 = vmatpush1.bf16.msra.mxu0 0
      %807 = vmatprep.subr.bf16.mxu0 0
      %808 = vmatpush1.bf16.msra.mxu0 0
      %809 = vmatprep.subr.bf16.mxu0 0
      %810 = vmatpush1.bf16.msra.mxu0 0
      %811 = vmatprep.subr.bf16.mxu0 0
      %812 = vmatpush1.bf16.msra.mxu0 0
      %813 = vmatprep.subr.bf16.mxu0 0
      %814 = vmatpush1.bf16.msra.mxu0 0
      %815 = vmatprep.subr.bf16.mxu0 0
      %816 = vmatpush1.bf16.msra.mxu0 0
      %817 = vmatprep.subr.bf16.mxu0 0
      %818 = vmatpush1.bf16.msra.mxu0 0
      %819 = vmatprep.subr.bf16.mxu0 0
      %820 = vmatpush1.bf16.msra.mxu0 0
      %821 = vmatprep.subr.bf16.mxu0 0
      %822 = vmatpush1.bf16.msra.mxu0 0
      %823 = vmatprep.subr.bf16.mxu0 0
      %824 = vmatpush1.bf16.msra.mxu0 0
      %825 = vmatprep.subr.bf16.mxu0 0
      %826 = vmatpush1.bf16.msra.mxu0 0
      %827 = vmatprep.mubr.bf16.mxu0 0
      %828 = vmatmul.mubr.bf16.gmra.mrb[0].mxu0 %v793
      %v829 = vpop.f32.mrb[0].mxu0
      %v830 = vadd.f32 0.0, %v829
      %v831 = vpop.f32.mrb[0].mxu0
      %v832 = vpop.f32.mrb[0].mxu0
      %v833 = vpop.f32.mrb[0].mxu0
      %834 = vdwg.mxu0
      %836 = vrot.lane.b32.xlu0 %v722, 64
      %v837 = vpop.permute.xlu0 %836
      %839 = vrot.lane.b32.xlu0 %v723, 64
      %v840 = vpop.permute.xlu0 %839
      %v842 = vsel %vm731, %v837, 0
      %v845 = vsel %vm731, %v840, 0
      %847 = vmatprep.subr.bf16.mxu0 0
      %848 = vmatpush1.bf16.xpose.msra.mxu0 %v845
      %849 = vmatprep.subr.bf16.mxu0 0
      %850 = vmatpush1.bf16.xpose.msra.mxu0 0
      %851 = vmatprep.subr.bf16.mxu0 0
      %852 = vmatpush1.bf16.xpose.msra.mxu0 0
      %853 = vmatprep.subr.bf16.mxu0 0
      %854 = vmatpush1.bf16.xpose.msra.mxu0 0
      %855 = vmatprep.subr.bf16.mxu0 0
      %856 = vmatpush1.bf16.xpose.msra.mxu0 0
      %857 = vmatprep.subr.bf16.mxu0 0
      %858 = vmatpush1.bf16.xpose.msra.mxu0 0
      %859 = vmatprep.subr.bf16.mxu0 0
      %860 = vmatpush1.bf16.xpose.msra.mxu0 0
      %861 = vmatprep.subr.bf16.mxu0 0
      %862 = vmatpush1.bf16.xpose.msra.mxu0 0
      %863 = vmatprep.subr.bf16.mxu0 0
      %864 = vmatpush1.bf16.xpose.msra.mxu0 0
      %865 = vmatprep.subr.bf16.mxu0 0
      %866 = vmatpush1.bf16.xpose.msra.mxu0 0
      %867 = vmatprep.subr.bf16.mxu0 0
      %868 = vmatpush1.bf16.xpose.msra.mxu0 0
      %869 = vmatprep.subr.bf16.mxu0 0
      %870 = vmatpush1.bf16.xpose.msra.mxu0 0
      %871 = vmatprep.subr.bf16.mxu0 0
      %872 = vmatpush1.bf16.xpose.msra.mxu0 0
      %873 = vmatprep.subr.bf16.mxu0 0
      %874 = vmatpush1.bf16.xpose.msra.mxu0 0
      %875 = vmatprep.subr.bf16.mxu0 0
      %876 = vmatpush1.bf16.xpose.msra.mxu0 0
      %877 = vmatprep.subr.bf16.mxu0 0
      %878 = vmatpush1.bf16.xpose.msra.mxu0 0
      %879 = vmatprep.mubr.bf16.mxu0 0
      %880 = vmatmul.mubr.bf16.gmra.mrb[0].mxu0 %v842
      %v881 = vpop.f32.mrb[0].mxu0
      %v882 = vadd.f32 %v729, %v881
      %v883 = vpop.f32.mrb[0].mxu0
      %v884 = vpop.f32.mrb[0].mxu0
      %v885 = vpop.f32.mrb[0].mxu0
      %886 = vdwg.mxu0
      %v887 = vsel %vm778, %v882, -inf
      %888 = vmax.xlane.f32.xlu0 %v887
      %v889 = vpop.xlane.xlu0 %888
      %v890 = vsub.f32 %v882, %v889
      %v891 = vmul.f32 %v890, 1.442695
      %v892 = vpow.pop %v891
      %v893 = vsel %vm778, %v892, 0.0
      %894 = vadd.xlane.f32.xlu0 %v893
      %v895 = vpop.xlane.xlu0 %894
      %v896 = vrcp.pop %v895
      %v897 = vmul.f32 %v892, %v896
      %v898 = vpack.c.bf16 %v897, %v897
      %900 = vrot.lane.b32.xlu0 %v724, 64
      %v901 = vpop.permute.xlu0 %900
      %v904 = vsel %vm791, %v898, 0
      %906 = vmatprep.subr.bf16.mxu0 0
      %907 = vmatpush1.bf16.msra.mxu0 %v901
      %908 = vmatprep.subr.bf16.mxu0 0
      %909 = vmatpush1.bf16.msra.mxu0 0
      %910 = vmatprep.subr.bf16.mxu0 0
      %911 = vmatpush1.bf16.msra.mxu0 0
      %912 = vmatprep.subr.bf16.mxu0 0
      %913 = vmatpush1.bf16.msra.mxu0 0
      %914 = vmatprep.subr.bf16.mxu0 0
      %915 = vmatpush1.bf16.msra.mxu0 0
      %916 = vmatprep.subr.bf16.mxu0 0
      %917 = vmatpush1.bf16.msra.mxu0 0
      %918 = vmatprep.subr.bf16.mxu0 0
      %919 = vmatpush1.bf16.msra.mxu0 0
      %920 = vmatprep.subr.bf16.mxu0 0
      %921 = vmatpush1.bf16.msra.mxu0 0
      %922 = vmatprep.subr.bf16.mxu0 0
      %923 = vmatpush1.bf16.msra.mxu0 0
      %924 = vmatprep.subr.bf16.mxu0 0
      %925 = vmatpush1.bf16.msra.mxu0 0
      %926 = vmatprep.subr.bf16.mxu0 0
      %927 = vmatpush1.bf16.msra.mxu0 0
      %928 = vmatprep.subr.bf16.mxu0 0
      %929 = vmatpush1.bf16.msra.mxu0 0
      %930 = vmatprep.subr.bf16.mxu0 0
      %931 = vmatpush1.bf16.msra.mxu0 0
      %932 = vmatprep.subr.bf16.mxu0 0
      %933 = vmatpush1.bf16.msra.mxu0 0
      %934 = vmatprep.subr.bf16.mxu0 0
      %935 = vmatpush1.bf16.msra.mxu0 0
      %936 = vmatprep.subr.bf16.mxu0 0
      %937 = vmatpush1.bf16.msra.mxu0 0
      %938 = vmatprep.mubr.bf16.mxu0 0
      %939 = vmatmul.mubr.bf16.gmra.mrb[0].mxu0 %v904
      %v940 = vpop.f32.mrb[0].mxu0
      %v941 = vadd.f32 0.0, %v940
      %v942 = vpop.f32.mrb[0].mxu0
      %v943 = vpop.f32.mrb[0].mxu0
      %v944 = vpop.f32.mrb[0].mxu0
      %945 = vdwg.mxu0
      %947 = vrot.lane.b32.xlu0 %v941, 64
      %v948 = vpop.permute.xlu0 %947
      %v950 = vsel %vm731, %v830, %v948
      %v951 = vpack.c.bf16 %v950, %v950
      %v952 = vld [vmem:[%s6] sm:$0xf]
      %v953 = vld [vmem:[%s6 + $0x4] sm:$0xf]
      %v954 = vld [vmem:[%s6 + $0x8] sm:$0xf]
      %v955 = vld [vmem:[%s6 + $0xc] sm:$0xf]
      %v956 = vld [vmem:[%s6 + $0x10] sm:$0xf]
      %v957 = vld [vmem:[%s6 + $0x14] sm:$0xf]
      %v958 = vld [vmem:[%s6 + $0x18] sm:$0xf]
      %v959 = vld [vmem:[%s6 + $0x1c] sm:$0xf]
      %v960 = vld [vmem:[%s6 + $0x20] sm:$0xf]
      %v961 = vld [vmem:[%s6 + $0x24] sm:$0xf]
      %v962 = vld [vmem:[%s6 + $0x28] sm:$0xf]
      %v963 = vld [vmem:[%s6 + $0x2c] sm:$0xf]
      %v964 = vld [vmem:[%s6 + $0x30] sm:$0xf]
      %v965 = vld [vmem:[%s6 + $0x34] sm:$0xf]
      %v966 = vld [vmem:[%s6 + $0x38] sm:$0xf]
      %v967 = vld [vmem:[%s6 + $0x3c] sm:$0xf]
      %v968 = vld [vmem:[%s7] sm:$0x1]
      %v970 = vlaneseq
      %v971 = vshrl.u32 %v970, 7
      %v972 = vsub.s32 0, %v971
      %v973 = vrot.slane %v968, %v972
      %v991 = vunpack.c.l.b16 %v952
      %v992 = vunpack.c.l.b16 %v953
      %v993 = vunpack.c.l.b16 %v954
      %v994 = vunpack.c.l.b16 %v955
      %v995 = vunpack.c.l.b16 %v956
      %v996 = vunpack.c.l.b16 %v957
      %v997 = vunpack.c.l.b16 %v958
      %v998 = vunpack.c.l.b16 %v959
      %v999 = vunpack.c.l.b16 %v960
      %v1000 = vunpack.c.l.b16 %v961
      %v1001 = vunpack.c.l.b16 %v962
      %v1002 = vunpack.c.l.b16 %v963
      %v1003 = vunpack.c.l.b16 %v964
      %v1004 = vunpack.c.l.b16 %v965
      %v1005 = vunpack.c.l.b16 %v966
      %v1006 = vunpack.c.l.b16 %v967
      %v1007 = vpack.c.b16 %v992, %v991
      %v1008 = vpack.c.b16 %v994, %v993
      %v1009 = vpack.c.b16 %v996, %v995
      %v1010 = vpack.c.b16 %v998, %v997
      %v1011 = vpack.c.b16 %v1000, %v999
      %v1012 = vpack.c.b16 %v1002, %v1001
      %v1013 = vpack.c.b16 %v1004, %v1003
      %v1014 = vpack.c.b16 %v1006, %v1005
      %1023 = vmatprep.subr.bf16.mxu0 0
      %1024 = vmatpush1.bf16.msra.mxu0 %v1007
      %1025 = vmatprep.subr.bf16.mxu0 0
      %1026 = vmatpush1.bf16.msra.mxu0 %v1008
      %1027 = vmatprep.subr.bf16.mxu0 0
      %1028 = vmatpush1.bf16.msra.mxu0 %v1009
      %1029 = vmatprep.subr.bf16.mxu0 0
      %1030 = vmatpush1.bf16.msra.mxu0 %v1010
      %1031 = vmatprep.subr.bf16.mxu0 0
      %1032 = vmatpush1.bf16.msra.mxu0 %v1011
      %1033 = vmatprep.subr.bf16.mxu0 0
      %1034 = vmatpush1.bf16.msra.mxu0 %v1012
      %1035 = vmatprep.subr.bf16.mxu0 0
      %1036 = vmatpush1.bf16.msra.mxu0 %v1013
      %1037 = vmatprep.subr.bf16.mxu0 0
      %1038 = vmatpush1.bf16.msra.mxu0 %v1014
      %1039 = vmatprep.subr.bf16.mxu0 0
      %1040 = vmatpush1.bf16.msra.mxu0 0
      %1041 = vmatprep.subr.bf16.mxu0 0
      %1042 = vmatpush1.bf16.msra.mxu0 0
      %1043 = vmatprep.subr.bf16.mxu0 0
      %1044 = vmatpush1.bf16.msra.mxu0 0
      %1045 = vmatprep.subr.bf16.mxu0 0
      %1046 = vmatpush1.bf16.msra.mxu0 0
      %1047 = vmatprep.subr.bf16.mxu0 0
      %1048 = vmatpush1.bf16.msra.mxu0 0
      %1049 = vmatprep.subr.bf16.mxu0 0
      %1050 = vmatpush1.bf16.msra.mxu0 0
      %1051 = vmatprep.subr.bf16.mxu0 0
      %1052 = vmatpush1.bf16.msra.mxu0 0
      %1053 = vmatprep.subr.bf16.mxu0 0
      %1054 = vmatpush1.bf16.msra.mxu0 0
      %1055 = vmatprep.mubr.bf16.mxu0 0
      %1056 = vmatmul.mubr.bf16.gmra.mrb[0].mxu0 %v951
      %v1057 = vpop.f32.mrb[0].mxu0
      %v1058 = vadd.f32 %v973, %v1057
      %v1059 = vpop.f32.mrb[0].mxu0
      %v1060 = vpop.f32.mrb[0].mxu0
      %v1061 = vpop.f32.mrb[0].mxu0
      %1062 = vdwg.mxu0
      %v1063 = vadd.f32 %v1058, %v418
      %v1064 = vpack.c.bf16 %v1063, %v1063
      %vm1065 = vcmask 1043456
      %vm1066 = vsmask.f32 3328
      %vm1067 = vmand %vm1065, %vm1066
      %v1068 = vld [vmem:[%s415] sm:$0xf]
      %v1069 = vsel %vm1067, %v1064, %v1068
      %1070 = vst [vmem:[%s415] sm:$0xf] %v1069
      %p1071 = scmp.lt.s32.totalorder %s22, 1
      %s1072 = scalar_select %p1071, %s22, 1
      %s1073 = smul.addr %s1072, 4
      %s1074 = scalar_lea.vmem %s11, %s1073
      // Predicated region
      $region65: #{model_forward.18} parent=63 // pred_check
        %p1075 = pneg %p286
      $region66: #{model_forward.18} parent=63 // pred_check_branch
        %1077 = sbr.rel (%p1075) target = $region68
      $region67: #{model_forward.18} parent=63 // pred_region
        _
      $region68: #{model_forward.18} parent=63 // pred_fallthru
        _
    $region64: #{model_forward.18} parent=5 // pred_fallthru
      _
    %p1078 = scmp.le.s32.totalorder 2, %s17
    // Predicated region
    $region69: #{model_forward.18} parent=5 // pred_check
      %p1079 = pneg %p1078
    $region70: #{model_forward.18} parent=5 // pred_check_branch
      %1081 = sbr.rel (%p1079) target = $region72
    $region71: #{model_forward.18} parent=5 // pred_region
      %s1082 = ssub.s32 %s17, 2
      // Predicated region
      $region73: #{model_forward.18} parent=71 // pred_check
        %p1083 = pneg %p292
      $region74: #{model_forward.18} parent=71 // pred_check_branch
        %1085 = sbr.rel (%p1083) target = $region76
      $region75: #{model_forward.18} parent=71 // pred_region
        %p1086 = scmp.lt.s32.totalorder %s23, 1
        %s1087 = scalar_select %p1086, %s23, 1
        %s1088 = smul.addr %s1087, 4
        %s1089 = scalar_lea.vmem %s11, %s1088
      $region76: #{model_forward.18} parent=71 // pred_fallthru
        _
    $region72: #{model_forward.18} parent=5 // pred_fallthru
      _
  $region6: #{model_forward.18} parent=0 // loop_footer
    %s21 = sadd.s32 1, %s17
  $region7: #{model_forward.18} parent=0 // loop_footer_branch
    %16 = sbr.rel target = $region3
  $region8: #{model_forward.18} parent=0 // loop_exit
    _

// kernel: model_forward.19
$region0: #{model_forward.19}
  #allocation0 [shape = 'u32[]', space=smem, size = 0x4, offset = 0x4, fixed_abs, tag = 'smem constant byte address 0x4 - core index']
  #allocation1 [shape = 'u32[144,128]{1,0:T(1,128)}', space=vmem, size = 0x12000, scoped, tag = 'internal scratch']
  %s0 = inlined_call_operand.vmem [shape: bf16[2,7,128], index: 0, kind: input, shape index: {}]
  %s1 = inlined_call_operand.vmem [shape: bf16[128,256], index: 1, kind: input, shape index: {}]
  %s2 = inlined_call_operand.vmem [shape: f32[1,256], index: 2, kind: input, shape index: {}]
  %s3 = inlined_call_operand.vmem [shape: bf16[256,128], index: 3, kind: input, shape index: {}]
  %s4 = inlined_call_operand.vmem [shape: f32[1,128], index: 4, kind: input, shape index: {}]
  %s5 = inlined_call_operand.vmem [shape: f32[1,128], index: 5, kind: input, shape index: {}]
  %s6 = inlined_call_operand.vmem [shape: f32[1,128], index: 6, kind: input, shape index: {}]
  %s7 = inlined_call_operand.vmem [shape: bf16[2,7,128], index: 7, kind: output, shape index: {}]
  %s8 = sld [smem:[#allocation0]]
  $region61: #{model_forward.19} parent=0
    _
  %s10 = ssub.s32 1, %s8
  %s11 = scalar_select 0, %s10, %s8
  loop: start=0, step=1, limit=4
  $region2: #{model_forward.19} parent=0 // loop_pre_header
    _
  $region3: #{model_forward.19} parent=0 // loop_header
    %s13 = sphi 0, %s17
    %p14 = scmp.ge.s32.totalorder %s13, 4
    %s23 = sphi 0, %s25
    %s26 = sphi 0, %s23
    %s27 = sphi 0, %s26
    %s43 = sphi 0, %s27
    %s47 = sphi 0, %s47
    %s49 = sphi 0, %s47
    %s50 = sphi 0, %s49
    %s64 = sphi 0, %s50
    %s68 = sphi 0, %s68
    %s70 = sphi 0, %s68
    %s71 = sphi 0, %s70
    %s85 = sphi 0, %s71
    %s89 = sphi 0, %s89
    %s91 = sphi 0, %s89
    %s92 = sphi 0, %s91
    %s106 = sphi 0, %s92
    %s110 = sphi 0, %s110
    %s112 = sphi 0, %s110
    %s113 = sphi 0, %s112
    %s127 = sphi 0, %s113
    %s131 = sphi 0, %s131
    %s133 = sphi 0, %s131
    %s134 = sphi 0, %s133
    %s148 = sphi 0, %s134
    %s152 = sphi 0, %s152
    %s154 = sphi 0, %s152
    %s155 = sphi 0, %s154
    %s169 = sphi 0, %s155
    %s175 = sphi 0, %s177
    %s178 = sphi 0, %s175
    %s179 = sphi 0, %s178
    %s195 = sphi 0, %s179
  $region4: #{model_forward.19} parent=0 // loop_header_branch
    %16 = sbr.rel (%p14) target = $region8
  $region5: #{model_forward.19} parent=0 // loop_body
    %s18 = ssub.s32 %s13, 1
    %s19 = ssub.s32 %s13, 2
    %s20 = sadd.s32 %s13, 1
    %s21 = ssub.s32 %s13, %s20
    %p22 = scmp.eq.s32.totalorder %s21, 0
    %s24 = sadd.s32 %s23, 1
    %s25 = scalar_select %p22, %s23, %s24
    %p28 = pneg %p22
    %p29 = scmp.eq.s32.totalorder %s13, 1
    %p30 = por %p28, %p29
    %p31 = scmp.ne.s32.totalorder %s23, %s26
    %p32 = scmp.eq.s32.totalorder %s13, 0
    %p33 = por %p31, %p32
    %p34 = scmp.ne.s32.totalorder %s23, %s26
    %p35 = scmp.eq.s32.totalorder %s18, 1
    %p36 = por %p34, %p35
    %p37 = scmp.ne.s32.totalorder %s26, %s27
    %p38 = scmp.eq.s32.totalorder %s18, 0
    %p39 = por %p37, %p38
    %p40 = scmp.ne.s32.totalorder %s26, %s27
    %p41 = scmp.eq.s32.totalorder %s19, 1
    %p42 = por %p40, %p41
    %p44 = scmp.ne.s32.totalorder %s27, %s43
    %p45 = scmp.eq.s32.totalorder %s19, 0
    %p46 = por %p44, %p45
    %s48 = sadd.s32 %s47, 1
    %p51 = scmp.eq.s32.totalorder %s13, 1
    %p52 = scmp.ne.s32.totalorder %s47, %s49
    %p53 = scmp.eq.s32.totalorder %s13, 0
    %p54 = por %p52, %p53
    %p55 = scmp.ne.s32.totalorder %s47, %s49
    %p56 = scmp.eq.s32.totalorder %s18, 1
    %p57 = por %p55, %p56
    %p58 = scmp.ne.s32.totalorder %s49, %s50
    %p59 = scmp.eq.s32.totalorder %s18, 0
    %p60 = por %p58, %p59
    %p61 = scmp.ne.s32.totalorder %s49, %s50
    %p62 = scmp.eq.s32.totalorder %s19, 1
    %p63 = por %p61, %p62
    %p65 = scmp.ne.s32.totalorder %s50, %s64
    %p66 = scmp.eq.s32.totalorder %s19, 0
    %p67 = por %p65, %p66
    %s69 = sadd.s32 %s68, 1
    %p72 = scmp.eq.s32.totalorder %s13, 1
    %p73 = scmp.ne.s32.totalorder %s68, %s70
    %p74 = scmp.eq.s32.totalorder %s13, 0
    %p75 = por %p73, %p74
    %p76 = scmp.ne.s32.totalorder %s68, %s70
    %p77 = scmp.eq.s32.totalorder %s18, 1
    %p78 = por %p76, %p77
    %p79 = scmp.ne.s32.totalorder %s70, %s71
    %p80 = scmp.eq.s32.totalorder %s18, 0
    %p81 = por %p79, %p80
    %p82 = scmp.ne.s32.totalorder %s70, %s71
    %p83 = scmp.eq.s32.totalorder %s19, 1
    %p84 = por %p82, %p83
    %p86 = scmp.ne.s32.totalorder %s71, %s85
    %p87 = scmp.eq.s32.totalorder %s19, 0
    %p88 = por %p86, %p87
    %s90 = sadd.s32 %s89, 1
    %p93 = scmp.eq.s32.totalorder %s13, 1
    %p94 = scmp.ne.s32.totalorder %s89, %s91
    %p95 = scmp.eq.s32.totalorder %s13, 0
    %p96 = por %p94, %p95
    %p97 = scmp.ne.s32.totalorder %s89, %s91
    %p98 = scmp.eq.s32.totalorder %s18, 1
    %p99 = por %p97, %p98
    %p100 = scmp.ne.s32.totalorder %s91, %s92
    %p101 = scmp.eq.s32.totalorder %s18, 0
    %p102 = por %p100, %p101
    %p103 = scmp.ne.s32.totalorder %s91, %s92
    %p104 = scmp.eq.s32.totalorder %s19, 1
    %p105 = por %p103, %p104
    %p107 = scmp.ne.s32.totalorder %s92, %s106
    %p108 = scmp.eq.s32.totalorder %s19, 0
    %p109 = por %p107, %p108
    %s111 = sadd.s32 %s110, 1
    %p114 = scmp.eq.s32.totalorder %s13, 1
    %p115 = scmp.ne.s32.totalorder %s110, %s112
    %p116 = scmp.eq.s32.totalorder %s13, 0
    %p117 = por %p115, %p116
    %p118 = scmp.ne.s32.totalorder %s110, %s112
    %p119 = scmp.eq.s32.totalorder %s18, 1
    %p120 = por %p118, %p119
    %p121 = scmp.ne.s32.totalorder %s112, %s113
    %p122 = scmp.eq.s32.totalorder %s18, 0
    %p123 = por %p121, %p122
    %p124 = scmp.ne.s32.totalorder %s112, %s113
    %p125 = scmp.eq.s32.totalorder %s19, 1
    %p126 = por %p124, %p125
    %p128 = scmp.ne.s32.totalorder %s113, %s127
    %p129 = scmp.eq.s32.totalorder %s19, 0
    %p130 = por %p128, %p129
    %s132 = sadd.s32 %s131, 1
    %p135 = scmp.eq.s32.totalorder %s13, 1
    %p136 = scmp.ne.s32.totalorder %s131, %s133
    %p137 = scmp.eq.s32.totalorder %s13, 0
    %p138 = por %p136, %p137
    %p139 = scmp.ne.s32.totalorder %s131, %s133
    %p140 = scmp.eq.s32.totalorder %s18, 1
    %p141 = por %p139, %p140
    %p142 = scmp.ne.s32.totalorder %s133, %s134
    %p143 = scmp.eq.s32.totalorder %s18, 0
    %p144 = por %p142, %p143
    %p145 = scmp.ne.s32.totalorder %s133, %s134
    %p146 = scmp.eq.s32.totalorder %s19, 1
    %p147 = por %p145, %p146
    %p149 = scmp.ne.s32.totalorder %s134, %s148
    %p150 = scmp.eq.s32.totalorder %s19, 0
    %p151 = por %p149, %p150
    %s153 = sadd.s32 %s152, 1
    %p156 = scmp.eq.s32.totalorder %s13, 1
    %p157 = scmp.ne.s32.totalorder %s152, %s154
    %p158 = scmp.eq.s32.totalorder %s13, 0
    %p159 = por %p157, %p158
    %p160 = scmp.ne.s32.totalorder %s152, %s154
    %p161 = scmp.eq.s32.totalorder %s18, 1
    %p162 = por %p160, %p161
    %p163 = scmp.ne.s32.totalorder %s154, %s155
    %p164 = scmp.eq.s32.totalorder %s18, 0
    %p165 = por %p163, %p164
    %p166 = scmp.ne.s32.totalorder %s154, %s155
    %p167 = scmp.eq.s32.totalorder %s19, 1
    %p168 = por %p166, %p167
    %p170 = scmp.ne.s32.totalorder %s155, %s169
    %p171 = scmp.eq.s32.totalorder %s19, 0
    %p172 = por %p170, %p171
    %s173 = ssub.s32 %s13, %s20
    %p174 = scmp.eq.s32.totalorder %s173, 0
    %s176 = sadd.s32 %s175, 1
    %s177 = scalar_select %p174, %s175, %s176
    %p180 = pneg %p174
    %p181 = scmp.eq.s32.totalorder %s13, 1
    %p182 = por %p180, %p181
    %p183 = scmp.ne.s32.totalorder %s175, %s178
    %p184 = scmp.eq.s32.totalorder %s13, 0
    %p185 = por %p183, %p184
    %p186 = scmp.ne.s32.totalorder %s175, %s178
    %p187 = scmp.eq.s32.totalorder %s18, 1
    %p188 = por %p186, %p187
    %p189 = scmp.ne.s32.totalorder %s178, %s179
    %p190 = scmp.eq.s32.totalorder %s18, 0
    %p191 = por %p189, %p190
    %p192 = scmp.ne.s32.totalorder %s178, %s179
    %p193 = scmp.eq.s32.totalorder %s19, 1
    %p194 = por %p192, %p193
    %p196 = scmp.ne.s32.totalorder %s179, %s195
    %p197 = scmp.eq.s32.totalorder %s19, 0
    %p198 = por %p196, %p197
    %p199 = scmp.le.s32.totalorder 1, %s13
    %p200 = scmp.lt.s32.totalorder %s13, 3
    %p201 = pnand %p199, %p200
    %p202 = pneg %p201
    // Predicated region
    $region9: #{model_forward.19} parent=5 // pred_check
      _
    $region10: #{model_forward.19} parent=5 // pred_check_branch
      %204 = sbr.rel (%p201) target = $region12
    $region11: #{model_forward.19} parent=5 // pred_region
      %s205 = ssub.s32 %s13, 1
      // Predicated region
      $region13: #{model_forward.19} parent=11 // pred_check
        %p206 = pneg %p60
      $region14: #{model_forward.19} parent=11 // pred_check_branch
        %208 = sbr.rel (%p206) target = $region16
      $region15: #{model_forward.19} parent=11 // pred_region
        _
      $region16: #{model_forward.19} parent=11 // pred_fallthru
        _
      // Predicated region
      $region17: #{model_forward.19} parent=11 // pred_check
        %p209 = pneg %p81
      $region18: #{model_forward.19} parent=11 // pred_check_branch
        %211 = sbr.rel (%p209) target = $region20
      $region19: #{model_forward.19} parent=11 // pred_region
        _
      $region20: #{model_forward.19} parent=11 // pred_fallthru
        _
      // Predicated region
      $region21: #{model_forward.19} parent=11 // pred_check
        %p212 = pneg %p102
      $region22: #{model_forward.19} parent=11 // pred_check_branch
        %214 = sbr.rel (%p212) target = $region24
      $region23: #{model_forward.19} parent=11 // pred_region
        _
      $region24: #{model_forward.19} parent=11 // pred_fallthru
        _
      // Predicated region
      $region25: #{model_forward.19} parent=11 // pred_check
        %p215 = pneg %p123
      $region26: #{model_forward.19} parent=11 // pred_check_branch
        %217 = sbr.rel (%p215) target = $region28
      $region27: #{model_forward.19} parent=11 // pred_region
        _
      $region28: #{model_forward.19} parent=11 // pred_fallthru
        _
      // Predicated region
      $region29: #{model_forward.19} parent=11 // pred_check
        %p218 = pneg %p144
      $region30: #{model_forward.19} parent=11 // pred_check_branch
        %220 = sbr.rel (%p218) target = $region32
      $region31: #{model_forward.19} parent=11 // pred_region
        _
      $region32: #{model_forward.19} parent=11 // pred_fallthru
        _
      // Predicated region
      $region33: #{model_forward.19} parent=11 // pred_check
        %p221 = pneg %p165
      $region34: #{model_forward.19} parent=11 // pred_check_branch
        %223 = sbr.rel (%p221) target = $region36
      $region35: #{model_forward.19} parent=11 // pred_region
        _
      $region36: #{model_forward.19} parent=11 // pred_fallthru
        _
    $region12: #{model_forward.19} parent=5 // pred_fallthru
      _
    %p224 = scmp.lt.s32.totalorder %s13, 2
    // Predicated region
    $region37: #{model_forward.19} parent=5 // pred_check
      %p225 = pneg %p224
    $region38: #{model_forward.19} parent=5 // pred_check_branch
      %227 = sbr.rel (%p225) target = $region40
    $region39: #{model_forward.19} parent=5 // pred_region
      // Predicated region
      $region41: #{model_forward.19} parent=39 // pred_check
        %p228 = pneg %p33
      $region42: #{model_forward.19} parent=39 // pred_check_branch
        %230 = sbr.rel (%p228) target = $region44
      $region43: #{model_forward.19} parent=39 // pred_region
        %p231 = scmp.lt.s32.totalorder %s13, 1
        %s232 = scalar_select %p231, %s13, 1
        %s233 = smul.addr %s232, 4
        %s234 = scalar_lea.vmem %s0, %s233
      $region44: #{model_forward.19} parent=39 // pred_fallthru
        _
    $region40: #{model_forward.19} parent=5 // pred_fallthru
      _
    %p235 = scmp.le.s32.totalorder 1, %s13
    %p236 = scmp.lt.s32.totalorder %s13, 3
    %p237 = pnand %p235, %p236
    %p238 = pneg %p237
    // Predicated region
    $region45: #{model_forward.19} parent=5 // pred_check
      _
    $region46: #{model_forward.19} parent=5 // pred_check_branch
      %240 = sbr.rel (%p237) target = $region48
    $region47: #{model_forward.19} parent=5 // pred_region
      %s241 = ssub.s32 %s13, 1
      %p242 = scmp.lt.s32.totalorder %s18, 1
      %s243 = scalar_select %p242, %s18, 1
      %s244 = smul.addr %s243, 4
      %s245 = scalar_lea.vmem %s0, %s244
      %p246 = pneg %p39
      %p247 = pneg %p36
      %p248 = pneg %p60
      %p249 = pneg %p57
      %p250 = pneg %p81
      %p251 = pneg %p78
      %p252 = pneg %p102
      %p253 = pneg %p99
      %p254 = pneg %p123
      %p255 = pneg %p120
      %p256 = pneg %p144
      %p257 = pneg %p141
      %p258 = pneg %p165
      %p259 = pneg %p162
      %p260 = pneg %p191
      %p261 = pneg %p188
      %p262 = scmp.lt.s32.totalorder %s18, 1
      %s263 = scalar_select %p262, %s18, 1
      %s264 = smul.addr %s263, 4
      %s265 = scalar_lea.vmem %s7, %s264
      %p266 = scmp.lt.s32.totalorder %s18, 1
      %s267 = scalar_select %p266, %s18, 1
      %s268 = smul.addr %s267, 4
      %s269 = scalar_lea.vmem %s0, %s268
      %p270 = scmp.lt.s32.totalorder %s18, 1
      %s271 = scalar_select %p270, %s18, 1
      %s272 = smul.addr %s271, 4
      %s273 = scalar_lea.vmem %s7, %s272
      %v275 = vld [vmem:[%s269] sm:$0xf]
      %v276 = vunpack.c.l.bf16 %v275
      %v277 = vld [vmem:[%s5] sm:$0x1]
      %v278 = vld [vmem:[%s6] sm:$0x1]
      %vm279 = vcmask 1046528
      %v280 = vsel %vm279, %v276, 0.0
      %281 = vadd.xlane.f32.xlu0 %v280
      %v282 = vpop.xlane.xlu0 %281
      %v283 = vrcp.pop 128.0
      %v284 = vmul.f32 %v282, %v283
      %v285 = vsub.f32 %v276, %v284
      %v286 = vmul.f32 %v285, %v285
      %v287 = vsel %vm279, %v286, 0.0
      %288 = vadd.xlane.f32.xlu0 %v287
      %v289 = vpop.xlane.xlu0 %288
      %v290 = vmul.f32 %v289, %v283
      %v291 = vadd.f32 %v290, 1e-06
      %v292 = vrsqrt.pop %v291
      %v293 = vmul.f32 %v285, %v292
      %v295 = vlaneseq
      %v296 = vshrl.u32 %v295, 7
      %v297 = vsub.s32 0, %v296
      %v298 = vrot.slane %v277, %v297
      %v300 = vmul.f32 %v293, %v298
      %v302 = vlaneseq
      %v303 = vshrl.u32 %v302, 7
      %v304 = vsub.s32 0, %v303
      %v305 = vrot.slane %v278, %v304
      %v307 = vadd.f32 %v300, %v305
      %v308 = vpack.c.bf16 %v307, %v307
      %v309 = vld [vmem:[%s1] sm:$0xff]
      %v310 = vld [vmem:[%s1 + $0x8] sm:$0xff]
      %v311 = vld [vmem:[%s1 + $0x10] sm:$0xff]
      %v312 = vld [vmem:[%s1 + $0x18] sm:$0xff]
      %v313 = vld [vmem:[%s1 + $0x20] sm:$0xff]
      %v314 = vld [vmem:[%s1 + $0x28] sm:$0xff]
      %v315 = vld [vmem:[%s1 + $0x30] sm:$0xff]
      %v316 = vld [vmem:[%s1 + $0x38] sm:$0xff]
      %v317 = vld [vmem:[%s1 + $0x40] sm:$0xff]
      %v318 = vld [vmem:[%s1 + $0x48] sm:$0xff]
      %v319 = vld [vmem:[%s1 + $0x50] sm:$0xff]
      %v320 = vld [vmem:[%s1 + $0x58] sm:$0xff]
      %v321 = vld [vmem:[%s1 + $0x60] sm:$0xff]
      %v322 = vld [vmem:[%s1 + $0x68] sm:$0xff]
      %v323 = vld [vmem:[%s1 + $0x70] sm:$0xff]
      %v324 = vld [vmem:[%s1 + $0x78] sm:$0xff]
      %v325 = vld [vmem:[%s2] sm:$0x3]
      %v327 = vlaneseq
      %v328 = vshrl.u32 %v327, 7
      %v329 = vsub.s32 0, %v328
      %v330 = vrot.slane %v325, %v329
      %v331 = vlaneseq
      %v332 = vshrl.u32 %v331, 7
      %v333 = vsub.s32 1, %v332
      %v334 = vrot.slane %v325, %v333
      %v353 = vunpack.c.l.b16 %v309
      %v354 = vunpack.c.h.b16 %v309
      %v355 = vunpack.c.l.b16 %v310
      %v356 = vunpack.c.h.b16 %v310
      %v357 = vunpack.c.l.b16 %v311
      %v358 = vunpack.c.h.b16 %v311
      %v359 = vunpack.c.l.b16 %v312
      %v360 = vunpack.c.h.b16 %v312
      %v361 = vunpack.c.l.b16 %v313
      %v362 = vunpack.c.h.b16 %v313
      %v363 = vunpack.c.l.b16 %v314
      %v364 = vunpack.c.h.b16 %v314
      %v365 = vunpack.c.l.b16 %v315
      %v366 = vunpack.c.h.b16 %v315
      %v367 = vunpack.c.l.b16 %v316
      %v368 = vunpack.c.h.b16 %v316
      %v369 = vunpack.c.l.b16 %v317
      %v370 = vunpack.c.h.b16 %v317
      %v371 = vunpack.c.l.b16 %v318
      %v372 = vunpack.c.h.b16 %v318
      %v373 = vunpack.c.l.b16 %v319
      %v374 = vunpack.c.h.b16 %v319
      %v375 = vunpack.c.l.b16 %v320
      %v376 = vunpack.c.h.b16 %v320
      %v377 = vunpack.c.l.b16 %v321
      %v378 = vunpack.c.h.b16 %v321
      %v379 = vunpack.c.l.b16 %v322
      %v380 = vunpack.c.h.b16 %v322
      %v381 = vunpack.c.l.b16 %v323
      %v382 = vunpack.c.h.b16 %v323
      %v383 = vunpack.c.l.b16 %v324
      %v384 = vunpack.c.h.b16 %v324
      %v385 = vpack.c.b16 %v355, %v353
      %v386 = vpack.c.b16 %v356, %v354
      %v387 = vpack.c.b16 %v359, %v357
      %v388 = vpack.c.b16 %v360, %v358
      %v389 = vpack.c.b16 %v363, %v361
      %v390 = vpack.c.b16 %v364, %v362
      %v391 = vpack.c.b16 %v367, %v365
      %v392 = vpack.c.b16 %v368, %v366
      %v393 = vpack.c.b16 %v371, %v369
      %v394 = vpack.c.b16 %v372, %v370
      %v395 = vpack.c.b16 %v375, %v373
      %v396 = vpack.c.b16 %v376, %v374
      %v397 = vpack.c.b16 %v379, %v377
      %v398 = vpack.c.b16 %v380, %v378
      %v399 = vpack.c.b16 %v383, %v381
      %v400 = vpack.c.b16 %v384, %v382
      %417 = vmatprep.subr.bf16.mxu0 %v386
      %418 = vmatpush1.bf16.msra.mxu0 %v385
      %419 = vmatprep.subr.bf16.mxu0 %v388
      %420 = vmatpush1.bf16.msra.mxu0 %v387
      %421 = vmatprep.subr.bf16.mxu0 %v390
      %422 = vmatpush1.bf16.msra.mxu0 %v389
      %423 = vmatprep.subr.bf16.mxu0 %v392
      %424 = vmatpush1.bf16.msra.mxu0 %v391
      %425 = vmatprep.subr.bf16.mxu0 %v394
      %426 = vmatpush1.bf16.msra.mxu0 %v393
      %427 = vmatprep.subr.bf16.mxu0 %v396
      %428 = vmatpush1.bf16.msra.mxu0 %v395
      %429 = vmatprep.subr.bf16.mxu0 %v398
      %430 = vmatpush1.bf16.msra.mxu0 %v397
      %431 = vmatprep.subr.bf16.mxu0 %v400
      %432 = vmatpush1.bf16.msra.mxu0 %v399
      %433 = vmatprep.subr.bf16.mxu0 0
      %434 = vmatpush1.bf16.msra.mxu0 0
      %435 = vmatprep.subr.bf16.mxu0 0
      %436 = vmatpush1.bf16.msra.mxu0 0
      %437 = vmatprep.subr.bf16.mxu0 0
      %438 = vmatpush1.bf16.msra.mxu0 0
      %439 = vmatprep.subr.bf16.mxu0 0
      %440 = vmatpush1.bf16.msra.mxu0 0
      %441 = vmatprep.subr.bf16.mxu0 0
      %442 = vmatpush1.bf16.msra.mxu0 0
      %443 = vmatprep.subr.bf16.mxu0 0
      %444 = vmatpush1.bf16.msra.mxu0 0
      %445 = vmatprep.subr.bf16.mxu0 0
      %446 = vmatpush1.bf16.msra.mxu0 0
      %447 = vmatprep.subr.bf16.mxu0 0
      %448 = vmatpush1.bf16.msra.mxu0 0
      %449 = vmatprep.mubr.bf16.mxu0 0
      %450 = vmatmul.mubr.bf16.gmra.mrb[0].mxu0 %v308
      %v451 = vpop.f32.mrb[0].mxu0
      %v452 = vadd.f32 %v330, %v451
      %v453 = vpop.f32.mrb[0].mxu0
      %v454 = vadd.f32 %v334, %v453
      %v455 = vpop.f32.mrb[0].mxu0
      %v456 = vpop.f32.mrb[0].mxu0
      %457 = vdwg.mxu0
      %v458 = vmul.f32 %v452, 0.5
      %v459 = vmul.f32 %v454, 0.5
      %v460 = vmul.f32 %v452, 0.044715
      %v461 = vmul.f32 %v454, 0.044715
      %v462 = vmul.f32 %v460, %v452
      %v463 = vmul.f32 %v461, %v454
      %v464 = vmul.f32 %v462, %v452
      %v465 = vmul.f32 %v463, %v454
      %v466 = vadd.f32 %v452, %v464
      %v467 = vadd.f32 %v454, %v465
      %v468 = vmul.f32 %v466, 0.7978846
      %v469 = vmul.f32 %v467, 0.7978846
      %v470 = vtanh.pop %v468
      %v471 = vtanh.pop %v469
      %v472 = vadd.f32 %v470, 1.0
      %v473 = vadd.f32 %v471, 1.0
      %v474 = vmul.f32 %v458, %v472
      %v475 = vmul.f32 %v459, %v473
      %v476 = vpack.c.bf16 %v474, %v474
      %v477 = vpack.c.bf16 %v475, %v475
      %v478 = vld [vmem:[%s3] sm:$0xf]
      %v479 = vld [vmem:[%s3 + $0x4] sm:$0xf]
      %v480 = vld [vmem:[%s3 + $0x8] sm:$0xf]
      %v481 = vld [vmem:[%s3 + $0xc] sm:$0xf]
      %v482 = vld [vmem:[%s3 + $0x10] sm:$0xf]
      %v483 = vld [vmem:[%s3 + $0x14] sm:$0xf]
      %v484 = vld [vmem:[%s3 + $0x18] sm:$0xf]
      %v485 = vld [vmem:[%s3 + $0x1c] sm:$0xf]
      %v486 = vld [vmem:[%s3 + $0x20] sm:$0xf]
      %v487 = vld [vmem:[%s3 + $0x24] sm:$0xf]
      %v488 = vld [vmem:[%s3 + $0x28] sm:$0xf]
      %v489 = vld [vmem:[%s3 + $0x2c] sm:$0xf]
      %v490 = vld [vmem:[%s3 + $0x30] sm:$0xf]
      %v491 = vld [vmem:[%s3 + $0x34] sm:$0xf]
      %v492 = vld [vmem:[%s3 + $0x38] sm:$0xf]
      %v493 = vld [vmem:[%s3 + $0x3c] sm:$0xf]
      %v494 = vld [vmem:[%s3 + $0x40] sm:$0xf]
      %v495 = vld [vmem:[%s3 + $0x44] sm:$0xf]
      %v496 = vld [vmem:[%s3 + $0x48] sm:$0xf]
      %v497 = vld [vmem:[%s3 + $0x4c] sm:$0xf]
      %v498 = vld [vmem:[%s3 + $0x50] sm:$0xf]
      %v499 = vld [vmem:[%s3 + $0x54] sm:$0xf]
      %v500 = vld [vmem:[%s3 + $0x58] sm:$0xf]
      %v501 = vld [vmem:[%s3 + $0x5c] sm:$0xf]
      %v502 = vld [vmem:[%s3 + $0x60] sm:$0xf]
      %v503 = vld [vmem:[%s3 + $0x64] sm:$0xf]
      %v504 = vld [vmem:[%s3 + $0x68] sm:$0xf]
      %v505 = vld [vmem:[%s3 + $0x6c] sm:$0xf]
      %v506 = vld [vmem:[%s3 + $0x70] sm:$0xf]
      %v507 = vld [vmem:[%s3 + $0x74] sm:$0xf]
      %v508 = vld [vmem:[%s3 + $0x78] sm:$0xf]
      %v509 = vld [vmem:[%s3 + $0x7c] sm:$0xf]
      %v510 = vld [vmem:[%s4] sm:$0x1]
      %v512 = vlaneseq
      %v513 = vshrl.u32 %v512, 7
      %v514 = vsub.s32 0, %v513
      %v515 = vrot.slane %v510, %v514
      %v549 = vunpack.c.l.b16 %v478
      %v550 = vunpack.c.l.b16 %v479
      %v551 = vunpack.c.l.b16 %v480
      %v552 = vunpack.c.l.b16 %v481
      %v553 = vunpack.c.l.b16 %v482
      %v554 = vunpack.c.l.b16 %v483
      %v555 = vunpack.c.l.b16 %v484
      %v556 = vunpack.c.l.b16 %v485
      %v557 = vunpack.c.l.b16 %v486
      %v558 = vunpack.c.l.b16 %v487
      %v559 = vunpack.c.l.b16 %v488
      %v560 = vunpack.c.l.b16 %v489
      %v561 = vunpack.c.l.b16 %v490
      %v562 = vunpack.c.l.b16 %v491
      %v563 = vunpack.c.l.b16 %v492
      %v564 = vunpack.c.l.b16 %v493
      %v565 = vunpack.c.l.b16 %v494
      %v566 = vunpack.c.l.b16 %v495
      %v567 = vunpack.c.l.b16 %v496
      %v568 = vunpack.c.l.b16 %v497
      %v569 = vunpack.c.l.b16 %v498
      %v570 = vunpack.c.l.b16 %v499
      %v571 = vunpack.c.l.b16 %v500
      %v572 = vunpack.c.l.b16 %v501
      %v573 = vunpack.c.l.b16 %v502
      %v574 = vunpack.c.l.b16 %v503
      %v575 = vunpack.c.l.b16 %v504
      %v576 = vunpack.c.l.b16 %v505
      %v577 = vunpack.c.l.b16 %v506
      %v578 = vunpack.c.l.b16 %v507
      %v579 = vunpack.c.l.b16 %v508
      %v580 = vunpack.c.l.b16 %v509
      %v581 = vpack.c.b16 %v550, %v549
      %v582 = vpack.c.b16 %v552, %v551
      %v583 = vpack.c.b16 %v554, %v553
      %v584 = vpack.c.b16 %v556, %v555
      %v585 = vpack.c.b16 %v558, %v557
      %v586 = vpack.c.b16 %v560, %v559
      %v587 = vpack.c.b16 %v562, %v561
      %v588 = vpack.c.b16 %v564, %v563
      %v589 = vpack.c.b16 %v566, %v565
      %v590 = vpack.c.b16 %v568, %v567
      %v591 = vpack.c.b16 %v570, %v569
      %v592 = vpack.c.b16 %v572, %v571
      %v593 = vpack.c.b16 %v574, %v573
      %v594 = vpack.c.b16 %v576, %v575
      %v595 = vpack.c.b16 %v578, %v577
      %v596 = vpack.c.b16 %v580, %v579
      %613 = vmatprep.subr.bf16.mxu0 0
      %614 = vmatpush1.bf16.msra.mxu0 %v581
      %615 = vmatprep.subr.bf16.mxu0 0
      %616 = vmatpush1.bf16.msra.mxu0 %v582
      %617 = vmatprep.subr.bf16.mxu0 0
      %618 = vmatpush1.bf16.msra.mxu0 %v583
      %619 = vmatprep.subr.bf16.mxu0 0
      %620 = vmatpush1.bf16.msra.mxu0 %v584
      %621 = vmatprep.subr.bf16.mxu0 0
      %622 = vmatpush1.bf16.msra.mxu0 %v585
      %623 = vmatprep.subr.bf16.mxu0 0
      %624 = vmatpush1.bf16.msra.mxu0 %v586
      %625 = vmatprep.subr.bf16.mxu0 0
      %626 = vmatpush1.bf16.msra.mxu0 %v587
      %627 = vmatprep.subr.bf16.mxu0 0
      %628 = vmatpush1.bf16.msra.mxu0 %v588
      %629 = vmatprep.subr.bf16.mxu0 0
      %630 = vmatpush1.bf16.msra.mxu0 %v589
      %631 = vmatprep.subr.bf16.mxu0 0
      %632 = vmatpush1.bf16.msra.mxu0 %v590
      %633 = vmatprep.subr.bf16.mxu0 0
      %634 = vmatpush1.bf16.msra.mxu0 %v591
      %635 = vmatprep.subr.bf16.mxu0 0
      %636 = vmatpush1.bf16.msra.mxu0 %v592
      %637 = vmatprep.subr.bf16.mxu0 0
      %638 = vmatpush1.bf16.msra.mxu0 %v593
      %639 = vmatprep.subr.bf16.mxu0 0
      %640 = vmatpush1.bf16.msra.mxu0 %v594
      %641 = vmatprep.subr.bf16.mxu0 0
      %642 = vmatpush1.bf16.msra.mxu0 %v595
      %643 = vmatprep.subr.bf16.mxu0 0
      %644 = vmatpush1.bf16.msra.mxu0 %v596
      %645 = vmatprep.mubr.bf16.mxu0 %v477
      %646 = vmatmul.mubr.bf16.gmra.mrb[0].mxu0 %v476
      %v647 = vpop.f32.mrb[0].mxu0
      %v648 = vadd.f32 %v515, %v647
      %v649 = vpop.f32.mrb[0].mxu0
      %v650 = vpop.f32.mrb[0].mxu0
      %v651 = vpop.f32.mrb[0].mxu0
      %652 = vdwg.mxu0
      %v653 = vadd.f32 %v648, %v276
      %v654 = vpack.c.bf16 %v653, %v653
      %vm655 = vcmask 1043456
      %vm656 = vsmask.f32 3328
      %vm657 = vmand %vm655, %vm656
      %v658 = vld [vmem:[%s273] sm:$0xf]
      %v659 = vsel %vm657, %v654, %v658
      %660 = vst [vmem:[%s273] sm:$0xf] %v659
      %p661 = scmp.lt.s32.totalorder %s18, 1
      %s662 = scalar_select %p661, %s18, 1
      %s663 = smul.addr %s662, 4
      %s664 = scalar_lea.vmem %s7, %s663
      // Predicated region
      $region49: #{model_forward.19} parent=47 // pred_check
        %p665 = pneg %p188
      $region50: #{model_forward.19} parent=47 // pred_check_branch
        %667 = sbr.rel (%p665) target = $region52
      $region51: #{model_forward.19} parent=47 // pred_region
        _
      $region52: #{model_forward.19} parent=47 // pred_fallthru
        _
    $region48: #{model_forward.19} parent=5 // pred_fallthru
      _
    %p668 = scmp.le.s32.totalorder 2, %s13
    // Predicated region
    $region53: #{model_forward.19} parent=5 // pred_check
      %p669 = pneg %p668
    $region54: #{model_forward.19} parent=5 // pred_check_branch
      %671 = sbr.rel (%p669) target = $region56
    $region55: #{model_forward.19} parent=5 // pred_region
      %s672 = ssub.s32 %s13, 2
      // Predicated region
      $region57: #{model_forward.19} parent=55 // pred_check
        %p673 = pneg %p194
      $region58: #{model_forward.19} parent=55 // pred_check_branch
        %675 = sbr.rel (%p673) target = $region60
      $region59: #{model_forward.19} parent=55 // pred_region
        %p676 = scmp.lt.s32.totalorder %s19, 1
        %s677 = scalar_select %p676, %s19, 1
        %s678 = smul.addr %s677, 4
        %s679 = scalar_lea.vmem %s7, %s678
      $region60: #{model_forward.19} parent=55 // pred_fallthru
        _
    $region56: #{model_forward.19} parent=5 // pred_fallthru
      _
  $region6: #{model_forward.19} parent=0 // loop_footer
    %s17 = sadd.s32 1, %s13
  $region7: #{model_forward.19} parent=0 // loop_footer_branch
    %12 = sbr.rel target = $region3
  $region8: #{model_forward.19} parent=0 // loop_exit
    _

// kernel: model_forward.23
$region0: #{model_forward.23}
  #allocation0 [shape = 'u32[]', space=smem, size = 0x4, offset = 0x4, fixed_abs, tag = 'smem constant byte address 0x4 - core index']
  #allocation1 [shape = 'u32[144,128]{1,0:T(1,128)}', space=vmem, size = 0x12000, scoped, tag = 'internal scratch']
  %s0 = inlined_call_operand.vmem [shape: bf16[2,7,128], index: 0, kind: input, shape index: {}]
  %s1 = inlined_call_operand.vmem [shape: f32[1,128], index: 1, kind: input, shape index: {}]
  %s2 = inlined_call_operand.vmem [shape: f32[1,128], index: 2, kind: input, shape index: {}]
  %s3 = inlined_call_operand.vmem [shape: f32[2,7,128], index: 3, kind: output, shape index: {}]
  %s4 = sld [smem:[#allocation0]]
  $region45: #{model_forward.23} parent=0
    _
  %s6 = ssub.s32 1, %s4
  %s7 = scalar_select 0, %s6, %s4
  loop: start=0, step=1, limit=4
  $region2: #{model_forward.23} parent=0 // loop_pre_header
    _
  $region3: #{model_forward.23} parent=0 // loop_header
    %s9 = sphi 0, %s13
    %p10 = scmp.ge.s32.totalorder %s9, 4
    %s19 = sphi 0, %s21
    %s22 = sphi 0, %s19
    %s23 = sphi 0, %s22
    %s39 = sphi 0, %s23
    %s43 = sphi 0, %s43
    %s45 = sphi 0, %s43
    %s46 = sphi 0, %s45
    %s60 = sphi 0, %s46
    %s64 = sphi 0, %s64
    %s66 = sphi 0, %s64
    %s67 = sphi 0, %s66
    %s81 = sphi 0, %s67
    %s87 = sphi 0, %s89
    %s90 = sphi 0, %s87
    %s91 = sphi 0, %s90
    %s107 = sphi 0, %s91
  $region4: #{model_forward.23} parent=0 // loop_header_branch
    %12 = sbr.rel (%p10) target = $region8
  $region5: #{model_forward.23} parent=0 // loop_body
    %s14 = ssub.s32 %s9, 1
    %s15 = ssub.s32 %s9, 2
    %s16 = sadd.s32 %s9, 1
    %s17 = ssub.s32 %s9, %s16
    %p18 = scmp.eq.s32.totalorder %s17, 0
    %s20 = sadd.s32 %s19, 1
    %s21 = scalar_select %p18, %s19, %s20
    %p24 = pneg %p18
    %p25 = scmp.eq.s32.totalorder %s9, 1
    %p26 = por %p24, %p25
    %p27 = scmp.ne.s32.totalorder %s19, %s22
    %p28 = scmp.eq.s32.totalorder %s9, 0
    %p29 = por %p27, %p28
    %p30 = scmp.ne.s32.totalorder %s19, %s22
    %p31 = scmp.eq.s32.totalorder %s14, 1
    %p32 = por %p30, %p31
    %p33 = scmp.ne.s32.totalorder %s22, %s23
    %p34 = scmp.eq.s32.totalorder %s14, 0
    %p35 = por %p33, %p34
    %p36 = scmp.ne.s32.totalorder %s22, %s23
    %p37 = scmp.eq.s32.totalorder %s15, 1
    %p38 = por %p36, %p37
    %p40 = scmp.ne.s32.totalorder %s23, %s39
    %p41 = scmp.eq.s32.totalorder %s15, 0
    %p42 = por %p40, %p41
    %s44 = sadd.s32 %s43, 1
    %p47 = scmp.eq.s32.totalorder %s9, 1
    %p48 = scmp.ne.s32.totalorder %s43, %s45
    %p49 = scmp.eq.s32.totalorder %s9, 0
    %p50 = por %p48, %p49
    %p51 = scmp.ne.s32.totalorder %s43, %s45
    %p52 = scmp.eq.s32.totalorder %s14, 1
    %p53 = por %p51, %p52
    %p54 = scmp.ne.s32.totalorder %s45, %s46
    %p55 = scmp.eq.s32.totalorder %s14, 0
    %p56 = por %p54, %p55
    %p57 = scmp.ne.s32.totalorder %s45, %s46
    %p58 = scmp.eq.s32.totalorder %s15, 1
    %p59 = por %p57, %p58
    %p61 = scmp.ne.s32.totalorder %s46, %s60
    %p62 = scmp.eq.s32.totalorder %s15, 0
    %p63 = por %p61, %p62
    %s65 = sadd.s32 %s64, 1
    %p68 = scmp.eq.s32.totalorder %s9, 1
    %p69 = scmp.ne.s32.totalorder %s64, %s66
    %p70 = scmp.eq.s32.totalorder %s9, 0
    %p71 = por %p69, %p70
    %p72 = scmp.ne.s32.totalorder %s64, %s66
    %p73 = scmp.eq.s32.totalorder %s14, 1
    %p74 = por %p72, %p73
    %p75 = scmp.ne.s32.totalorder %s66, %s67
    %p76 = scmp.eq.s32.totalorder %s14, 0
    %p77 = por %p75, %p76
    %p78 = scmp.ne.s32.totalorder %s66, %s67
    %p79 = scmp.eq.s32.totalorder %s15, 1
    %p80 = por %p78, %p79
    %p82 = scmp.ne.s32.totalorder %s67, %s81
    %p83 = scmp.eq.s32.totalorder %s15, 0
    %p84 = por %p82, %p83
    %s85 = ssub.s32 %s9, %s16
    %p86 = scmp.eq.s32.totalorder %s85, 0
    %s88 = sadd.s32 %s87, 1
    %s89 = scalar_select %p86, %s87, %s88
    %p92 = pneg %p86
    %p93 = scmp.eq.s32.totalorder %s9, 1
    %p94 = por %p92, %p93
    %p95 = scmp.ne.s32.totalorder %s87, %s90
    %p96 = scmp.eq.s32.totalorder %s9, 0
    %p97 = por %p95, %p96
    %p98 = scmp.ne.s32.totalorder %s87, %s90
    %p99 = scmp.eq.s32.totalorder %s14, 1
    %p100 = por %p98, %p99
    %p101 = scmp.ne.s32.totalorder %s90, %s91
    %p102 = scmp.eq.s32.totalorder %s14, 0
    %p103 = por %p101, %p102
    %p104 = scmp.ne.s32.totalorder %s90, %s91
    %p105 = scmp.eq.s32.totalorder %s15, 1
    %p106 = por %p104, %p105
    %p108 = scmp.ne.s32.totalorder %s91, %s107
    %p109 = scmp.eq.s32.totalorder %s15, 0
    %p110 = por %p108, %p109
    %p111 = scmp.le.s32.totalorder 1, %s9
    %p112 = scmp.lt.s32.totalorder %s9, 3
    %p113 = pnand %p111, %p112
    %p114 = pneg %p113
    // Predicated region
    $region9: #{model_forward.23} parent=5 // pred_check
      _
    $region10: #{model_forward.23} parent=5 // pred_check_branch
      %116 = sbr.rel (%p113) target = $region12
    $region11: #{model_forward.23} parent=5 // pred_region
      %s117 = ssub.s32 %s9, 1
      // Predicated region
      $region13: #{model_forward.23} parent=11 // pred_check
        %p118 = pneg %p56
      $region14: #{model_forward.23} parent=11 // pred_check_branch
        %120 = sbr.rel (%p118) target = $region16
      $region15: #{model_forward.23} parent=11 // pred_region
        _
      $region16: #{model_forward.23} parent=11 // pred_fallthru
        _
      // Predicated region
      $region17: #{model_forward.23} parent=11 // pred_check
        %p121 = pneg %p77
      $region18: #{model_forward.23} parent=11 // pred_check_branch
        %123 = sbr.rel (%p121) target = $region20
      $region19: #{model_forward.23} parent=11 // pred_region
        _
      $region20: #{model_forward.23} parent=11 // pred_fallthru
        _
    $region12: #{model_forward.23} parent=5 // pred_fallthru
      _
    %p124 = scmp.lt.s32.totalorder %s9, 2
    // Predicated region
    $region21: #{model_forward.23} parent=5 // pred_check
      %p125 = pneg %p124
    $region22: #{model_forward.23} parent=5 // pred_check_branch
      %127 = sbr.rel (%p125) target = $region24
    $region23: #{model_forward.23} parent=5 // pred_region
      // Predicated region
      $region25: #{model_forward.23} parent=23 // pred_check
        %p128 = pneg %p29
      $region26: #{model_forward.23} parent=23 // pred_check_branch
        %130 = sbr.rel (%p128) target = $region28
      $region27: #{model_forward.23} parent=23 // pred_region
        %p131 = scmp.lt.s32.totalorder %s9, 1
        %s132 = scalar_select %p131, %s9, 1
        %s133 = smul.addr %s132, 4
        %s134 = scalar_lea.vmem %s0, %s133
      $region28: #{model_forward.23} parent=23 // pred_fallthru
        _
    $region24: #{model_forward.23} parent=5 // pred_fallthru
      _
    %p135 = scmp.le.s32.totalorder 1, %s9
    %p136 = scmp.lt.s32.totalorder %s9, 3
    %p137 = pnand %p135, %p136
    %p138 = pneg %p137
    // Predicated region
    $region29: #{model_forward.23} parent=5 // pred_check
      _
    $region30: #{model_forward.23} parent=5 // pred_check_branch
      %140 = sbr.rel (%p137) target = $region32
    $region31: #{model_forward.23} parent=5 // pred_region
      %s141 = ssub.s32 %s9, 1
      %p142 = scmp.lt.s32.totalorder %s14, 1
      %s143 = scalar_select %p142, %s14, 1
      %s144 = smul.addr %s143, 4
      %s145 = scalar_lea.vmem %s0, %s144
      %p146 = pneg %p35
      %p147 = pneg %p32
      %p148 = pneg %p56
      %p149 = pneg %p53
      %p150 = pneg %p77
      %p151 = pneg %p74
      %p152 = pneg %p103
      %p153 = pneg %p100
      %p154 = scmp.lt.s32.totalorder %s14, 1
      %s155 = scalar_select %p154, %s14, 1
      %s156 = smul.addr %s155, 8
      %s157 = scalar_lea.vmem %s3, %s156
      %p158 = scmp.lt.s32.totalorder %s14, 1
      %s159 = scalar_select %p158, %s14, 1
      %s160 = smul.addr %s159, 4
      %s161 = scalar_lea.vmem %s0, %s160
      %p162 = scmp.lt.s32.totalorder %s14, 1
      %s163 = scalar_select %p162, %s14, 1
      %s164 = smul.addr %s163, 8
      %s165 = scalar_lea.vmem %s3, %s164
      %v166 = vld [vmem:[%s161] sm:$0xf]
      %v167 = vunpack.c.l.bf16 %v166
      %v168 = vld [vmem:[%s1] sm:$0x1]
      %v169 = vld [vmem:[%s2] sm:$0x1]
      %vm170 = vcmask 1046528
      %v171 = vsel %vm170, %v167, 0.0
      %172 = vadd.xlane.f32.xlu0 %v171
      %v173 = vpop.xlane.xlu0 %172
      %v174 = vrcp.pop 128.0
      %v175 = vmul.f32 %v173, %v174
      %v176 = vsub.f32 %v167, %v175
      %v177 = vmul.f32 %v176, %v176
      %v178 = vsel %vm170, %v177, 0.0
      %179 = vadd.xlane.f32.xlu0 %v178
      %v180 = vpop.xlane.xlu0 %179
      %v181 = vmul.f32 %v180, %v174
      %v182 = vadd.f32 %v181, 1e-06
      %v183 = vrsqrt.pop %v182
      %v184 = vmul.f32 %v176, %v183
      %v186 = vlaneseq
      %v187 = vshrl.u32 %v186, 7
      %v188 = vsub.s32 0, %v187
      %v189 = vrot.slane %v168, %v188
      %v191 = vmul.f32 %v184, %v189
      %v193 = vlaneseq
      %v194 = vshrl.u32 %v193, 7
      %v195 = vsub.s32 0, %v194
      %v196 = vrot.slane %v169, %v195
      %v198 = vadd.f32 %v191, %v196
      %199 = vst [vmem:[%s165] sm:$0x7f] %v198
      %p200 = scmp.lt.s32.totalorder %s14, 1
      %s201 = scalar_select %p200, %s14, 1
      %s202 = smul.addr %s201, 8
      %s203 = scalar_lea.vmem %s3, %s202
      // Predicated region
      $region33: #{model_forward.23} parent=31 // pred_check
        %p204 = pneg %p100
      $region34: #{model_forward.23} parent=31 // pred_check_branch
        %206 = sbr.rel (%p204) target = $region36
      $region35: #{model_forward.23} parent=31 // pred_region
        _
      $region36: #{model_forward.23} parent=31 // pred_fallthru
        _
    $region32: #{model_forward.23} parent=5 // pred_fallthru
      _
    %p207 = scmp.le.s32.totalorder 2, %s9
    // Predicated region
    $region37: #{model_forward.23} parent=5 // pred_check
      %p208 = pneg %p207
    $region38: #{model_forward.23} parent=5 // pred_check_branch
      %210 = sbr.rel (%p208) target = $region40
    $region39: #{model_forward.23} parent=5 // pred_region
      %s211 = ssub.s32 %s9, 2
      // Predicated region
      $region41: #{model_forward.23} parent=39 // pred_check
        %p212 = pneg %p106
      $region42: #{model_forward.23} parent=39 // pred_check_branch
        %214 = sbr.rel (%p212) target = $region44
      $region43: #{model_forward.23} parent=39 // pred_region
        %p215 = scmp.lt.s32.totalorder %s15, 1
        %s216 = scalar_select %p215, %s15, 1
        %s217 = smul.addr %s216, 8
        %s218 = scalar_lea.vmem %s3, %s217
      $region44: #{model_forward.23} parent=39 // pred_fallthru
        _
    $region40: #{model_forward.23} parent=5 // pred_fallthru
      _
  $region6: #{model_forward.23} parent=0 // loop_footer
    %s13 = sadd.s32 1, %s9
  $region7: #{model_forward.23} parent=0 // loop_footer_branch
    %8 = sbr.rel target = $region3
  $region8: #{model_forward.23} parent=0 // loop_exit
    _

</llo_original>
